<compile_context>
chip_gen: v6e
topology: v6e:2x2x1
jax: 0.10.0
libtpu: 0.0.40
codegen_flags: <defaults>
</compile_context>

<pallas_src>
import numpy as np
import jax
import jax.numpy as jnp
from jax.experimental import pallas as pl
from jax.experimental.pallas import tpu as pltpu


# ----------------------------- Pallas kernel ---------------------------------
def bond_reactivity_kernel(xsrc_ref, xdst_ref, ea_ref, dual_ref, lg_ref,
                           we1_ref, be1_ref, g1_ref, bt1_ref,
                           we2_ref, be2_ref, g2_ref, bt2_ref,
                           we3_ref, be3_ref, g3_ref, bt3_ref,
                           wd1_ref, bd1_ref, wd2_ref, bd2_ref, wd3_ref,
                           wsrc_ref, wdst_ref, wea_ref, wdp_ref, was_ref, wad_ref, bf1_ref,
                           wf2_ref, bf2_ref, wbond_ref,
                           bd3_ref, bbond_ref,
                           out_ref):
    f32 = jnp.float32
    bf16 = jnp.bfloat16

    def mm(a, b_ref):
        # bf16 operands at the MXU, f32 accumulation.
        return jnp.dot(a.astype(bf16), b_ref[...], preferred_element_type=f32)

    def silu(v):
        return v * jax.nn.sigmoid(v)

    def layer_norm(v, gamma, beta):
        mu = jnp.mean(v, axis=-1, keepdims=True)
        var = jnp.mean(jnp.square(v - mu), axis=-1, keepdims=True)
        return (v - mu) * jax.lax.rsqrt(var + 1e-5) * gamma + beta

    # --- BondEmbedding: 3x (Linear -> LayerNorm -> SiLU -> Dropout[eval=identity]) ---
    e = silu(layer_norm(mm(ea_ref[...], we1_ref) + be1_ref[...], g1_ref[...], bt1_ref[...]))
    e = silu(layer_norm(mm(e, we2_ref) + be2_ref[...], g2_ref[...], bt2_ref[...]))
    e = silu(layer_norm(mm(e, we3_ref) + be3_ref[...], g3_ref[...], bt3_ref[...]))

    # --- atom reactivity probabilities (pre-gathered logits -> sigmoid, f32 VPU/EUP) ---
    lg = lg_ref[...]                                   # (TE, 2) f32: [logit_src, logit_dst]
    a_src = jax.nn.sigmoid(lg[:, 0:1])                 # (TE, 1)
    a_dst = jax.nn.sigmoid(lg[:, 1:2])                 # (TE, 1)

    # --- DualGraphBondReactivityPredictor (SiLU MLP -> 1) ---
    d = silu(mm(dual_ref[...], wd1_ref) + bd1_ref[...])
    d = silu(mm(d, wd2_ref) + bd2_ref[...])
    # N=1 GEMV as VPU multiply + lane reduce (avoids a 1-column MXU pass)
    dual_prob = jax.nn.sigmoid(
        jnp.sum(d * wd3_ref[...], axis=-1, keepdims=True) + bd3_ref[0, 0])   # (TE, 1)

    # --- head fc1, decomposed by feature block (no in-kernel lane concat) ---
    # feats = [x_src | x_dst | e | dual_prob | a_src | a_dst]
    h = (mm(xsrc_ref[...], wsrc_ref) + mm(xdst_ref[...], wdst_ref) + mm(e, wea_ref)
         + dual_prob * wdp_ref[...] + a_src * was_ref[...] + a_dst * wad_ref[...]
         + bf1_ref[...])
    h = silu(h)
    h = silu(mm(h, wf2_ref) + bf2_ref[...])

    # --- bond head: VPU row-sum, stored lane-dense as (1, TE) ---
    o = jnp.sum(h * wbond_ref[...], axis=-1, keepdims=True) + bbond_ref[0, 0]  # (TE, 1)
    out_ref[...] = o.reshape(out_ref.shape)                                    # (1, TE)


# ------------------------------ wrapper / glue --------------------------------
def bond_reactivity_forward(node_embedding, edge_index, edge_attr, dual_node_emb,
                            atom_reactivity_logits, params, *, block_e=128):
    """node_embedding: [N, Dn] f32; edge_index: [2, E] int32; edge_attr: [E, De] f32;
    dual_node_emb: [E, Dd] f32; atom_reactivity_logits: [N] f32. Returns [E] f32."""
    assert block_e % 128 == 0, "block_e must be a multiple of 128 (lane-dense output)"
    E = edge_attr.shape[0]
    Dn = node_embedding.shape[1]
    De = edge_attr.shape[1]
    Dd = dual_node_emb.shape[1]
    src, dst = edge_index[0], edge_index[1]

    # O(E*Dn) index gathers (replaces the old O(E*N) one-hot matmuls).
    # NOTE: out-of-range indices are clamped by the XLA gather (one-hot mapped them to 0).
    x_src = jnp.take(node_embedding, src, axis=0).astype(jnp.bfloat16)   # [E, Dn]
    x_dst = jnp.take(node_embedding, dst, axis=0).astype(jnp.bfloat16)   # [E, Dn]
    lg = jnp.stack([jnp.take(atom_reactivity_logits, src),
                    jnp.take(atom_reactivity_logits, dst)], axis=-1).astype(jnp.float32)

    ea = edge_attr.astype(jnp.bfloat16)
    dual = dual_node_emb.astype(jnp.bfloat16)

    TE = block_e
    E_pad = ((E + TE - 1) // TE) * TE

    def pad_rows(a):
        if a.shape[0] == E_pad:
            return a
        return jnp.pad(a, ((0, E_pad - a.shape[0]), (0, 0)))

    x_src, x_dst, ea, dual, lg = map(pad_rows, (x_src, x_dst, ea, dual, lg))

    p = params
    weight_args = (p["We1"], p["be1"], p["g1"], p["bt1"],
                   p["We2"], p["be2"], p["g2"], p["bt2"],
                   p["We3"], p["be3"], p["g3"], p["bt3"],
                   p["Wd1"], p["bd1"], p["Wd2"], p["bd2"], p["wd3"],
                   p["Wf1_src"], p["Wf1_dst"], p["Wf1_e"],
                   p["wf1_dual"], p["wf1_asrc"], p["wf1_adst"], p["bf1"],
                   p["Wf2"], p["bf2"], p["wbond"])
    smem_args = (p["bd3"], p["bbond"])
    edge_args = (x_src, x_dst, ea, dual, lg)
    args = edge_args + weight_args + smem_args

    def row_spec(d):                         # per-edge inputs: pipelined over E blocks
        return pl.BlockSpec((TE, d), lambda i: (i, 0))

    def const_spec(shape):                   # weights: resident (constant block index)
        return pl.BlockSpec(shape, lambda i: (0,) * len(shape))

    in_specs = ([row_spec(Dn), row_spec(Dn), row_spec(De), row_spec(Dd), row_spec(2)]
                + [const_spec(w.shape) for w in weight_args]
                + [pl.BlockSpec(memory_space=pltpu.MemorySpace.SMEM)] * len(smem_args))

    # VMEM budget: resident weights + double-buffered streamed blocks + f32 intermediates.
    weight_bytes = sum(int(w.size) * w.dtype.itemsize for w in weight_args)
    edge_block_bytes = sum(TE * int(a.shape[1]) * a.dtype.itemsize for a in edge_args)
    hidden = int(p["Wf2"].shape[0])
    inter_bytes = 8 * TE * max(hidden, int(p["We2"].shape[0]), Dn, Dd) * 4
    budget = weight_bytes + 2 * edge_block_bytes + 2 * TE * 4 + inter_bytes
    vmem_limit = int(min(48 * 1024 * 1024, max(16 * 1024 * 1024, 2 * budget)))

    out = pl.pallas_call(
        bond_reactivity_kernel,
        out_shape=jax.ShapeDtypeStruct((1, E_pad), jnp.float32),
        grid=(E_pad // TE,),
        in_specs=in_specs,
        out_specs=pl.BlockSpec((1, TE), lambda i: (0, i)),
        compiler_params=pltpu.CompilerParams(
            dimension_semantics=("parallel",),
            vmem_limit_bytes=vmem_limit),
    )(*args)
    return out[0, :E]


def init_params(key, node_emb_dim, edge_attr_dim, edge_hidden_dim, hidden_dim, dual_input_dim):
    ks = iter(jax.random.split(key, 40))
    s = 0.1
    bf16 = jnp.bfloat16

    def nrm(shape, dtype=jnp.float32):
        return (jax.random.normal(next(ks), shape, jnp.float32) * s).astype(dtype)

    p = {}
    # BondEmbedding: Linear + LayerNorm params, x3 (matmul weights stored bf16)
    p["We1"] = nrm((edge_attr_dim, edge_hidden_dim), bf16); p["be1"] = nrm((1, edge_hidden_dim))
    p["g1"] = 1.0 + nrm((1, edge_hidden_dim));              p["bt1"] = nrm((1, edge_hidden_dim))
    p["We2"] = nrm((edge_hidden_dim, edge_hidden_dim), bf16); p["be2"] = nrm((1, edge_hidden_dim))
    p["g2"] = 1.0 + nrm((1, edge_hidden_dim));                p["bt2"] = nrm((1, edge_hidden_dim))
    p["We3"] = nrm((edge_hidden_dim, edge_hidden_dim), bf16); p["be3"] = nrm((1, edge_hidden_dim))
    p["g3"] = 1.0 + nrm((1, edge_hidden_dim));                p["bt3"] = nrm((1, edge_hidden_dim))
    # DualGraphBondReactivityPredictor
    p["Wd1"] = nrm((dual_input_dim, hidden_dim), bf16); p["bd1"] = nrm((1, hidden_dim))
    p["Wd2"] = nrm((hidden_dim, hidden_dim), bf16);     p["bd2"] = nrm((1, hidden_dim))
    p["wd3"] = nrm((1, hidden_dim));                    p["bd3"] = nrm((1, 1))   # row + scalar (VPU path)
    # Head fc1 split by bond_feature block: [x_src | x_dst | e | dual_prob | a_src | a_dst]
    p["Wf1_src"] = nrm((node_emb_dim, hidden_dim), bf16)
    p["Wf1_dst"] = nrm((node_emb_dim, hidden_dim), bf16)
    p["Wf1_e"]   = nrm((edge_hidden_dim, hidden_dim), bf16)
    p["wf1_dual"] = nrm((1, hidden_dim))
    p["wf1_asrc"] = nrm((1, hidden_dim))
    p["wf1_adst"] = nrm((1, hidden_dim))
    p["bf1"] = nrm((1, hidden_dim))
    p["Wf2"] = nrm((hidden_dim, hidden_dim), bf16); p["bf2"] = nrm((1, hidden_dim))
    p["wbond"] = nrm((1, hidden_dim));              p["bbond"] = nrm((1, 1))     # row + scalar (VPU path)
    return p


# ------------------------------ reference (jnp, f32) ---------------------------
def bond_reactivity_reference(node_embedding, edge_index, edge_attr, dual_node_emb,
                              atom_reactivity_logits, params):
    p = {k: v.astype(jnp.float32) for k, v in params.items()}
    src, dst = edge_index[0], edge_index[1]

    def silu(v):
        return v * jax.nn.sigmoid(v)

    def ln(v, g, b):
        mu = v.mean(-1, keepdims=True)
        var = ((v - mu) ** 2).mean(-1, keepdims=True)
        return (v - mu) / jnp.sqrt(var + 1e-5) * g + b

    e = silu(ln(edge_attr @ p["We1"] + p["be1"], p["g1"], p["bt1"]))
    e = silu(ln(e @ p["We2"] + p["be2"], p["g2"], p["bt2"]))
    e = silu(ln(e @ p["We3"] + p["be3"], p["g3"], p["bt3"]))

    probs = jax.nn.sigmoid(atom_reactivity_logits)
    a_src = probs[src][:, None]
    a_dst = probs[dst][:, None]

    d = silu(dual_node_emb @ p["Wd1"] + p["bd1"])
    d = silu(d @ p["Wd2"] + p["bd2"])
    dual_prob = jax.nn.sigmoid(d @ p["wd3"].T + p["bd3"][0, 0])

    feats = jnp.concatenate([node_embedding[src], node_embedding[dst], e,
                             dual_prob, a_src, a_dst], axis=-1)
    Wf1 = jnp.concatenate([p["Wf1_src"], p["Wf1_dst"], p["Wf1_e"],
                           p["wf1_dual"], p["wf1_asrc"], p["wf1_adst"]], axis=0)
    h = silu(feats @ Wf1 + p["bf1"])
    h = silu(h @ p["Wf2"] + p["bf2"])
    return (h @ p["wbond"].T + p["bbond"][0, 0])[:, 0]


# ----------------------------------- main --------------------------------------
if __name__ == "__main__":
    N_NODES, N_EDGES = 64, 500                       # E not a multiple of 128: exercises padding + 4-step grid
    NODE_EMB_DIM, EDGE_ATTR_DIM = 32, 8
    EDGE_HIDDEN_DIM, HIDDEN_DIM, DUAL_INPUT_DIM = 32, 64, 48

    key = jax.random.PRNGKey(0)
    k_node, k_src, k_dst, k_ea, k_dual, k_logit, k_p = jax.random.split(key, 7)

    node_embedding = jax.random.normal(k_node, (N_NODES, NODE_EMB_DIM), jnp.float32)
    src = jax.random.randint(k_src, (N_EDGES,), 0, N_NODES, jnp.int32)
    dst = jax.random.randint(k_dst, (N_EDGES,), 0, N_NODES, jnp.int32)
    edge_index = jnp.stack([src, dst], axis=0)
    edge_attr = jax.random.normal(k_ea, (N_EDGES, EDGE_ATTR_DIM), jnp.float32)
    dual_node_emb = jax.random.normal(k_dual, (N_EDGES, DUAL_INPUT_DIM), jnp.float32)
    atom_reactivity_logits = jax.random.normal(k_logit, (N_NODES,), jnp.float32)

    params = init_params(k_p, NODE_EMB_DIM, EDGE_ATTR_DIM, EDGE_HIDDEN_DIM,
                         HIDDEN_DIM, DUAL_INPUT_DIM)

    out = bond_reactivity_forward(node_embedding, edge_index, edge_attr, dual_node_emb,
                                  atom_reactivity_logits, params)
    out = jax.block_until_ready(out)

    ref = bond_reactivity_reference(node_embedding, edge_index, edge_attr, dual_node_emb,
                                    atom_reactivity_logits, params)
    assert out.shape == (N_EDGES,), out.shape
    # bf16 MXU operands -> ~1e-2 relative vs. the pure-f32 reference
    np.testing.assert_allclose(np.asarray(out), np.asarray(ref), rtol=2e-2, atol=2e-2)

    print("KERNEL_OK")
</pallas_src>

<mosaic_0001>
module attributes {stable_mosaic.version = 11 : i64} {
  func.func @bond_reactivity_kernel(%arg0: i32, %arg1: memref<128x32xbf16, #tpu.memory_space<vmem>>, %arg2: memref<128x32xbf16, #tpu.memory_space<vmem>>, %arg3: memref<128x8xbf16, #tpu.memory_space<vmem>>, %arg4: memref<128x48xbf16, #tpu.memory_space<vmem>>, %arg5: memref<128x2xf32, #tpu.memory_space<vmem>>, %arg6: memref<8x32xbf16, #tpu.memory_space<vmem>>, %arg7: memref<1x32xf32, #tpu.memory_space<vmem>>, %arg8: memref<1x32xf32, #tpu.memory_space<vmem>>, %arg9: memref<1x32xf32, #tpu.memory_space<vmem>>, %arg10: memref<32x32xbf16, #tpu.memory_space<vmem>>, %arg11: memref<1x32xf32, #tpu.memory_space<vmem>>, %arg12: memref<1x32xf32, #tpu.memory_space<vmem>>, %arg13: memref<1x32xf32, #tpu.memory_space<vmem>>, %arg14: memref<32x32xbf16, #tpu.memory_space<vmem>>, %arg15: memref<1x32xf32, #tpu.memory_space<vmem>>, %arg16: memref<1x32xf32, #tpu.memory_space<vmem>>, %arg17: memref<1x32xf32, #tpu.memory_space<vmem>>, %arg18: memref<48x64xbf16, #tpu.memory_space<vmem>>, %arg19: memref<1x64xf32, #tpu.memory_space<vmem>>, %arg20: memref<64x64xbf16, #tpu.memory_space<vmem>>, %arg21: memref<1x64xf32, #tpu.memory_space<vmem>>, %arg22: memref<1x64xf32, #tpu.memory_space<vmem>>, %arg23: memref<32x64xbf16, #tpu.memory_space<vmem>>, %arg24: memref<32x64xbf16, #tpu.memory_space<vmem>>, %arg25: memref<32x64xbf16, #tpu.memory_space<vmem>>, %arg26: memref<1x64xf32, #tpu.memory_space<vmem>>, %arg27: memref<1x64xf32, #tpu.memory_space<vmem>>, %arg28: memref<1x64xf32, #tpu.memory_space<vmem>>, %arg29: memref<1x64xf32, #tpu.memory_space<vmem>>, %arg30: memref<64x64xbf16, #tpu.memory_space<vmem>>, %arg31: memref<1x64xf32, #tpu.memory_space<vmem>>, %arg32: memref<1x64xf32, #tpu.memory_space<vmem>>, %arg33: memref<1x1xf32, #tpu.memory_space<smem>>, %arg34: memref<1x1xf32, #tpu.memory_space<smem>>, %arg35: memref<1x128xf32, #tpu.memory_space<vmem>>) attributes {dimension_semantics = [#tpu.dimension_semantics<parallel>], iteration_bounds = array<i64: 4>, scalar_prefetch = 0 : i64, scratch_operands = 0 : i64, tpu.core_type = #tpu.core_type<tc>, window_params = [{transform_indices = @transform_0, window_bounds = array<i64: 128, 32>}, {transform_indices = @transform_1, window_bounds = array<i64: 128, 32>}, {transform_indices = @transform_2, window_bounds = array<i64: 128, 8>}, {transform_indices = @transform_3, window_bounds = array<i64: 128, 48>}, {transform_indices = @transform_4, window_bounds = array<i64: 128, 2>}, {pipeline_mode = #tpu.pipeline_mode<synchronous>, transform_indices = @transform_5, window_bounds = array<i64: 8, 32>}, {pipeline_mode = #tpu.pipeline_mode<synchronous>, transform_indices = @transform_6, window_bounds = array<i64: 1, 32>}, {pipeline_mode = #tpu.pipeline_mode<synchronous>, transform_indices = @transform_7, window_bounds = array<i64: 1, 32>}, {pipeline_mode = #tpu.pipeline_mode<synchronous>, transform_indices = @transform_8, window_bounds = array<i64: 1, 32>}, {pipeline_mode = #tpu.pipeline_mode<synchronous>, transform_indices = @transform_9, window_bounds = array<i64: 32, 32>}, {pipeline_mode = #tpu.pipeline_mode<synchronous>, transform_indices = @transform_10, window_bounds = array<i64: 1, 32>}, {pipeline_mode = #tpu.pipeline_mode<synchronous>, transform_indices = @transform_11, window_bounds = array<i64: 1, 32>}, {pipeline_mode = #tpu.pipeline_mode<synchronous>, transform_indices = @transform_12, window_bounds = array<i64: 1, 32>}, {pipeline_mode = #tpu.pipeline_mode<synchronous>, transform_indices = @transform_13, window_bounds = array<i64: 32, 32>}, {pipeline_mode = #tpu.pipeline_mode<synchronous>, transform_indices = @transform_14, window_bounds = array<i64: 1, 32>}, {pipeline_mode = #tpu.pipeline_mode<synchronous>, transform_indices = @transform_15, window_bounds = array<i64: 1, 32>}, {pipeline_mode = #tpu.pipeline_mode<synchronous>, transform_indices = @transform_16, window_bounds = array<i64: 1, 32>}, {pipeline_mode = #tpu.pipeline_mode<synchronous>, transform_indices = @transform_17, window_bounds = array<i64: 48, 64>}, {pipeline_mode = #tpu.pipeline_mode<synchronous>, transform_indices = @transform_18, window_bounds = array<i64: 1, 64>}, {pipeline_mode = #tpu.pipeline_mode<synchronous>, transform_indices = @transform_19, window_bounds = array<i64: 64, 64>}, {pipeline_mode = #tpu.pipeline_mode<synchronous>, transform_indices = @transform_20, window_bounds = array<i64: 1, 64>}, {pipeline_mode = #tpu.pipeline_mode<synchronous>, transform_indices = @transform_21, window_bounds = array<i64: 1, 64>}, {pipeline_mode = #tpu.pipeline_mode<synchronous>, transform_indices = @transform_22, window_bounds = array<i64: 32, 64>}, {pipeline_mode = #tpu.pipeline_mode<synchronous>, transform_indices = @transform_23, window_bounds = array<i64: 32, 64>}, {pipeline_mode = #tpu.pipeline_mode<synchronous>, transform_indices = @transform_24, window_bounds = array<i64: 32, 64>}, {pipeline_mode = #tpu.pipeline_mode<synchronous>, transform_indices = @transform_25, window_bounds = array<i64: 1, 64>}, {pipeline_mode = #tpu.pipeline_mode<synchronous>, transform_indices = @transform_26, window_bounds = array<i64: 1, 64>}, {pipeline_mode = #tpu.pipeline_mode<synchronous>, transform_indices = @transform_27, window_bounds = array<i64: 1, 64>}, {pipeline_mode = #tpu.pipeline_mode<synchronous>, transform_indices = @transform_28, window_bounds = array<i64: 1, 64>}, {pipeline_mode = #tpu.pipeline_mode<synchronous>, transform_indices = @transform_29, window_bounds = array<i64: 64, 64>}, {pipeline_mode = #tpu.pipeline_mode<synchronous>, transform_indices = @transform_30, window_bounds = array<i64: 1, 64>}, {pipeline_mode = #tpu.pipeline_mode<synchronous>, transform_indices = @transform_31, window_bounds = array<i64: 1, 64>}, {transform_indices = @transform_32, window_bounds = array<i64: 1, 1>}, {transform_indices = @transform_33, window_bounds = array<i64: 1, 1>}, {transform_indices = @transform_34, window_bounds = array<i64: 1, 128>}]} {
    %c0 = arith.constant 0 : index
    %c0_0 = arith.constant 0 : index
    %0 = vector.load %arg3[%c0, %c0_0] : memref<128x8xbf16, #tpu.memory_space<vmem>>, vector<128x8xbf16>
    %c0_1 = arith.constant 0 : index
    %c0_2 = arith.constant 0 : index
    %1 = vector.load %arg6[%c0_1, %c0_2] : memref<8x32xbf16, #tpu.memory_space<vmem>>, vector<8x32xbf16>
    %cst = arith.constant dense<0.000000e+00> : vector<128x32xf32>
    %2 = tpu.matmul %0, %1, %cst {dimension_numbers = #tpu.dot_dimension_numbers<[1], [0], [0], [1], [0, 0, 1, 1], [], []>} : vector<128x8xbf16>, vector<8x32xbf16>, vector<128x32xf32> -> vector<128x32xf32>
    %c0_3 = arith.constant 0 : index
    %c0_4 = arith.constant 0 : index
    %3 = vector.load %arg7[%c0_3, %c0_4] : memref<1x32xf32, #tpu.memory_space<vmem>>, vector<1x32xf32>
    %4 = vector.broadcast %3 : vector<1x32xf32> to vector<128x32xf32>
    %5 = arith.addf %2, %4 : vector<128x32xf32>
    %c0_5 = arith.constant 0 : index
    %c0_6 = arith.constant 0 : index
    %6 = vector.load %arg8[%c0_5, %c0_6] : memref<1x32xf32, #tpu.memory_space<vmem>>, vector<1x32xf32>
    %c0_7 = arith.constant 0 : index
    %c0_8 = arith.constant 0 : index
    %7 = vector.load %arg9[%c0_7, %c0_8] : memref<1x32xf32, #tpu.memory_space<vmem>>, vector<1x32xf32>
    %cst_9 = arith.constant dense<0.000000e+00> : vector<128xf32>
    %8 = vector.multi_reduction <add>, %5, %cst_9 [1] : vector<128x32xf32> to vector<128xf32>
    %9 = vector.shape_cast %8 : vector<128xf32> to vector<128x1xf32>
    %cst_10 = arith.constant 3.200000e+01 : f32
    %10 = vector.broadcast %cst_10 : f32 to vector<128x1xf32>
    %11 = arith.divf %9, %10 : vector<128x1xf32>
    %12 = vector.broadcast %11 : vector<128x1xf32> to vector<128x32xf32>
    %13 = arith.subf %5, %12 : vector<128x32xf32>
    %14 = arith.mulf %13, %13 : vector<128x32xf32>
    %cst_11 = arith.constant dense<0.000000e+00> : vector<128xf32>
    %15 = vector.multi_reduction <add>, %14, %cst_11 [1] : vector<128x32xf32> to vector<128xf32>
    %16 = vector.shape_cast %15 : vector<128xf32> to vector<128x1xf32>
    %cst_12 = arith.constant 3.200000e+01 : f32
    %17 = vector.broadcast %cst_12 : f32 to vector<128x1xf32>
    %18 = arith.divf %16, %17 : vector<128x1xf32>
    %19 = vector.broadcast %11 : vector<128x1xf32> to vector<128x32xf32>
    %20 = arith.subf %5, %19 : vector<128x32xf32>
    %cst_13 = arith.constant 9.99999974E-6 : f32
    %21 = vector.broadcast %cst_13 : f32 to vector<128x1xf32>
    %22 = arith.addf %18, %21 : vector<128x1xf32>
    %23 = math.rsqrt %22 : vector<128x1xf32>
    %24 = vector.broadcast %23 : vector<128x1xf32> to vector<128x32xf32>
    %25 = arith.mulf %20, %24 : vector<128x32xf32>
    %26 = vector.broadcast %6 : vector<1x32xf32> to vector<128x32xf32>
    %27 = arith.mulf %25, %26 : vector<128x32xf32>
    %28 = vector.broadcast %7 : vector<1x32xf32> to vector<128x32xf32>
    %29 = arith.addf %27, %28 : vector<128x32xf32>
    %30 = arith.negf %29 : vector<128x32xf32>
    %31 = math.exp %30 : vector<128x32xf32>
    %cst_14 = arith.constant 1.000000e+00 : f32
    %32 = vector.broadcast %cst_14 : f32 to vector<128x32xf32>
    %33 = arith.addf %32, %31 : vector<128x32xf32>
    %34 = arith.divf %32, %33 : vector<128x32xf32>
    %35 = arith.mulf %29, %34 : vector<128x32xf32>
    %36 = arith.truncf %35 : vector<128x32xf32> to vector<128x32xbf16>
    %c0_15 = arith.constant 0 : index
    %c0_16 = arith.constant 0 : index
    %37 = vector.load %arg10[%c0_15, %c0_16] : memref<32x32xbf16, #tpu.memory_space<vmem>>, vector<32x32xbf16>
    %cst_17 = arith.constant dense<0.000000e+00> : vector<128x32xf32>
    %38 = tpu.matmul %36, %37, %cst_17 {dimension_numbers = #tpu.dot_dimension_numbers<[1], [0], [0], [1], [0, 0, 1, 1], [], []>} : vector<128x32xbf16>, vector<32x32xbf16>, vector<128x32xf32> -> vector<128x32xf32>
    %c0_18 = arith.constant 0 : index
    %c0_19 = arith.constant 0 : index
    %39 = vector.load %arg11[%c0_18, %c0_19] : memref<1x32xf32, #tpu.memory_space<vmem>>, vector<1x32xf32>
    %40 = vector.broadcast %39 : vector<1x32xf32> to vector<128x32xf32>
    %41 = arith.addf %38, %40 : vector<128x32xf32>
    %c0_20 = arith.constant 0 : index
    %c0_21 = arith.constant 0 : index
    %42 = vector.load %arg12[%c0_20, %c0_21] : memref<1x32xf32, #tpu.memory_space<vmem>>, vector<1x32xf32>
    %c0_22 = arith.constant 0 : index
    %c0_23 = arith.constant 0 : index
    %43 = vector.load %arg13[%c0_22, %c0_23] : memref<1x32xf32, #tpu.memory_space<vmem>>, vector<1x32xf32>
    %cst_24 = arith.constant dense<0.000000e+00> : vector<128xf32>
    %44 = vector.multi_reduction <add>, %41, %cst_24 [1] : vector<128x32xf32> to vector<128xf32>
    %45 = vector.shape_cast %44 : vector<128xf32> to vector<128x1xf32>
    %cst_25 = arith.constant 3.200000e+01 : f32
    %46 = vector.broadcast %cst_25 : f32 to vector<128x1xf32>
    %47 = arith.divf %45, %46 : vector<128x1xf32>
    %48 = vector.broadcast %47 : vector<128x1xf32> to vector<128x32xf32>
    %49 = arith.subf %41, %48 : vector<128x32xf32>
    %50 = arith.mulf %49, %49 : vector<128x32xf32>
    %cst_26 = arith.constant dense<0.000000e+00> : vector<128xf32>
    %51 = vector.multi_reduction <add>, %50, %cst_26 [1] : vector<128x32xf32> to vector<128xf32>
    %52 = vector.shape_cast %51 : vector<128xf32> to vector<128x1xf32>
    %cst_27 = arith.constant 3.200000e+01 : f32
    %53 = vector.broadcast %cst_27 : f32 to vector<128x1xf32>
    %54 = arith.divf %52, %53 : vector<128x1xf32>
    %55 = vector.broadcast %47 : vector<128x1xf32> to vector<128x32xf32>
    %56 = arith.subf %41, %55 : vector<128x32xf32>
    %cst_28 = arith.constant 9.99999974E-6 : f32
    %57 = vector.broadcast %cst_28 : f32 to vector<128x1xf32>
    %58 = arith.addf %54, %57 : vector<128x1xf32>
    %59 = math.rsqrt %58 : vector<128x1xf32>
    %60 = vector.broadcast %59 : vector<128x1xf32> to vector<128x32xf32>
    %61 = arith.mulf %56, %60 : vector<128x32xf32>
    %62 = vector.broadcast %42 : vector<1x32xf32> to vector<128x32xf32>
    %63 = arith.mulf %61, %62 : vector<128x32xf32>
    %64 = vector.broadcast %43 : vector<1x32xf32> to vector<128x32xf32>
    %65 = arith.addf %63, %64 : vector<128x32xf32>
    %66 = arith.negf %65 : vector<128x32xf32>
    %67 = math.exp %66 : vector<128x32xf32>
    %cst_29 = arith.constant 1.000000e+00 : f32
    %68 = vector.broadcast %cst_29 : f32 to vector<128x32xf32>
    %69 = arith.addf %68, %67 : vector<128x32xf32>
    %70 = arith.divf %68, %69 : vector<128x32xf32>
    %71 = arith.mulf %65, %70 : vector<128x32xf32>
    %72 = arith.truncf %71 : vector<128x32xf32> to vector<128x32xbf16>
    %c0_30 = arith.constant 0 : index
    %c0_31 = arith.constant 0 : index
    %73 = vector.load %arg14[%c0_30, %c0_31] : memref<32x32xbf16, #tpu.memory_space<vmem>>, vector<32x32xbf16>
    %cst_32 = arith.constant dense<0.000000e+00> : vector<128x32xf32>
    %74 = tpu.matmul %72, %73, %cst_32 {dimension_numbers = #tpu.dot_dimension_numbers<[1], [0], [0], [1], [0, 0, 1, 1], [], []>} : vector<128x32xbf16>, vector<32x32xbf16>, vector<128x32xf32> -> vector<128x32xf32>
    %c0_33 = arith.constant 0 : index
    %c0_34 = arith.constant 0 : index
    %75 = vector.load %arg15[%c0_33, %c0_34] : memref<1x32xf32, #tpu.memory_space<vmem>>, vector<1x32xf32>
    %76 = vector.broadcast %75 : vector<1x32xf32> to vector<128x32xf32>
    %77 = arith.addf %74, %76 : vector<128x32xf32>
    %c0_35 = arith.constant 0 : index
    %c0_36 = arith.constant 0 : index
    %78 = vector.load %arg16[%c0_35, %c0_36] : memref<1x32xf32, #tpu.memory_space<vmem>>, vector<1x32xf32>
    %c0_37 = arith.constant 0 : index
    %c0_38 = arith.constant 0 : index
    %79 = vector.load %arg17[%c0_37, %c0_38] : memref<1x32xf32, #tpu.memory_space<vmem>>, vector<1x32xf32>
    %cst_39 = arith.constant dense<0.000000e+00> : vector<128xf32>
    %80 = vector.multi_reduction <add>, %77, %cst_39 [1] : vector<128x32xf32> to vector<128xf32>
    %81 = vector.shape_cast %80 : vector<128xf32> to vector<128x1xf32>
    %cst_40 = arith.constant 3.200000e+01 : f32
    %82 = vector.broadcast %cst_40 : f32 to vector<128x1xf32>
    %83 = arith.divf %81, %82 : vector<128x1xf32>
    %84 = vector.broadcast %83 : vector<128x1xf32> to vector<128x32xf32>
    %85 = arith.subf %77, %84 : vector<128x32xf32>
    %86 = arith.mulf %85, %85 : vector<128x32xf32>
    %cst_41 = arith.constant dense<0.000000e+00> : vector<128xf32>
    %87 = vector.multi_reduction <add>, %86, %cst_41 [1] : vector<128x32xf32> to vector<128xf32>
    %88 = vector.shape_cast %87 : vector<128xf32> to vector<128x1xf32>
    %cst_42 = arith.constant 3.200000e+01 : f32
    %89 = vector.broadcast %cst_42 : f32 to vector<128x1xf32>
    %90 = arith.divf %88, %89 : vector<128x1xf32>
    %91 = vector.broadcast %83 : vector<128x1xf32> to vector<128x32xf32>
    %92 = arith.subf %77, %91 : vector<128x32xf32>
    %cst_43 = arith.constant 9.99999974E-6 : f32
    %93 = vector.broadcast %cst_43 : f32 to vector<128x1xf32>
    %94 = arith.addf %90, %93 : vector<128x1xf32>
    %95 = math.rsqrt %94 : vector<128x1xf32>
    %96 = vector.broadcast %95 : vector<128x1xf32> to vector<128x32xf32>
    %97 = arith.mulf %92, %96 : vector<128x32xf32>
    %98 = vector.broadcast %78 : vector<1x32xf32> to vector<128x32xf32>
    %99 = arith.mulf %97, %98 : vector<128x32xf32>
    %100 = vector.broadcast %79 : vector<1x32xf32> to vector<128x32xf32>
    %101 = arith.addf %99, %100 : vector<128x32xf32>
    %102 = arith.negf %101 : vector<128x32xf32>
    %103 = math.exp %102 : vector<128x32xf32>
    %cst_44 = arith.constant 1.000000e+00 : f32
    %104 = vector.broadcast %cst_44 : f32 to vector<128x32xf32>
    %105 = arith.addf %104, %103 : vector<128x32xf32>
    %106 = arith.divf %104, %105 : vector<128x32xf32>
    %107 = arith.mulf %101, %106 : vector<128x32xf32>
    %c0_45 = arith.constant 0 : index
    %c0_46 = arith.constant 0 : index
    %108 = vector.load %arg5[%c0_45, %c0_46] : memref<128x2xf32, #tpu.memory_space<vmem>>, vector<128x2xf32>
    %109 = vector.extract_strided_slice %108 {offsets = [0, 0], sizes = [128, 1], strides = [1, 1]} : vector<128x2xf32> to vector<128x1xf32>
    %110 = arith.negf %109 : vector<128x1xf32>
    %111 = math.exp %110 : vector<128x1xf32>
    %cst_47 = arith.constant 1.000000e+00 : f32
    %112 = vector.broadcast %cst_47 : f32 to vector<128x1xf32>
    %113 = arith.addf %112, %111 : vector<128x1xf32>
    %114 = arith.divf %112, %113 : vector<128x1xf32>
    %115 = vector.extract_strided_slice %108 {offsets = [0, 1], sizes = [128, 1], strides = [1, 1]} : vector<128x2xf32> to vector<128x1xf32>
    %116 = arith.negf %115 : vector<128x1xf32>
    %117 = math.exp %116 : vector<128x1xf32>
    %cst_48 = arith.constant 1.000000e+00 : f32
    %118 = vector.broadcast %cst_48 : f32 to vector<128x1xf32>
    %119 = arith.addf %118, %117 : vector<128x1xf32>
    %120 = arith.divf %118, %119 : vector<128x1xf32>
    %c0_49 = arith.constant 0 : index
    %c0_50 = arith.constant 0 : index
    %121 = vector.load %arg4[%c0_49, %c0_50] : memref<128x48xbf16, #tpu.memory_space<vmem>>, vector<128x48xbf16>
    %c0_51 = arith.constant 0 : index
    %c0_52 = arith.constant 0 : index
    %122 = vector.load %arg18[%c0_51, %c0_52] : memref<48x64xbf16, #tpu.memory_space<vmem>>, vector<48x64xbf16>
    %cst_53 = arith.constant dense<0.000000e+00> : vector<128x64xf32>
    %123 = tpu.matmul %121, %122, %cst_53 {dimension_numbers = #tpu.dot_dimension_numbers<[1], [0], [0], [1], [0, 0, 1, 1], [], []>} : vector<128x48xbf16>, vector<48x64xbf16>, vector<128x64xf32> -> vector<128x64xf32>
    %c0_54 = arith.constant 0 : index
    %c0_55 = arith.constant 0 : index
    %124 = vector.load %arg19[%c0_54, %c0_55] : memref<1x64xf32, #tpu.memory_space<vmem>>, vector<1x64xf32>
    %125 = vector.broadcast %124 : vector<1x64xf32> to vector<128x64xf32>
    %126 = arith.addf %123, %125 : vector<128x64xf32>
    %127 = arith.negf %126 : vector<128x64xf32>
    %128 = math.exp %127 : vector<128x64xf32>
    %cst_56 = arith.constant 1.000000e+00 : f32
    %129 = vector.broadcast %cst_56 : f32 to vector<128x64xf32>
    %130 = arith.addf %129, %128 : vector<128x64xf32>
    %131 = arith.divf %129, %130 : vector<128x64xf32>
    %132 = arith.mulf %126, %131 : vector<128x64xf32>
    %133 = arith.truncf %132 : vector<128x64xf32> to vector<128x64xbf16>
    %c0_57 = arith.constant 0 : index
    %c0_58 = arith.constant 0 : index
    %134 = vector.load %arg20[%c0_57, %c0_58] : memref<64x64xbf16, #tpu.memory_space<vmem>>, vector<64x64xbf16>
    %cst_59 = arith.constant dense<0.000000e+00> : vector<128x64xf32>
    %135 = tpu.matmul %133, %134, %cst_59 {dimension_numbers = #tpu.dot_dimension_numbers<[1], [0], [0], [1], [0, 0, 1, 1], [], []>} : vector<128x64xbf16>, vector<64x64xbf16>, vector<128x64xf32> -> vector<128x64xf32>
    %c0_60 = arith.constant 0 : index
    %c0_61 = arith.constant 0 : index
    %136 = vector.load %arg21[%c0_60, %c0_61] : memref<1x64xf32, #tpu.memory_space<vmem>>, vector<1x64xf32>
    %137 = vector.broadcast %136 : vector<1x64xf32> to vector<128x64xf32>
    %138 = arith.addf %135, %137 : vector<128x64xf32>
    %139 = arith.negf %138 : vector<128x64xf32>
    %140 = math.exp %139 : vector<128x64xf32>
    %cst_62 = arith.constant 1.000000e+00 : f32
    %141 = vector.broadcast %cst_62 : f32 to vector<128x64xf32>
    %142 = arith.addf %141, %140 : vector<128x64xf32>
    %143 = arith.divf %141, %142 : vector<128x64xf32>
    %144 = arith.mulf %138, %143 : vector<128x64xf32>
    %c0_63 = arith.constant 0 : index
    %c0_64 = arith.constant 0 : index
    %145 = vector.load %arg22[%c0_63, %c0_64] : memref<1x64xf32, #tpu.memory_space<vmem>>, vector<1x64xf32>
    %146 = vector.broadcast %145 : vector<1x64xf32> to vector<128x64xf32>
    %147 = arith.mulf %144, %146 : vector<128x64xf32>
    %cst_65 = arith.constant dense<0.000000e+00> : vector<128xf32>
    %148 = vector.multi_reduction <add>, %147, %cst_65 [1] : vector<128x64xf32> to vector<128xf32>
    %149 = vector.shape_cast %148 : vector<128xf32> to vector<128x1xf32>
    %c0_66 = arith.constant 0 : index
    %c0_67 = arith.constant 0 : index
    %150 = memref.load %arg33[%c0_66, %c0_67] : memref<1x1xf32, #tpu.memory_space<smem>>
    %151 = vector.broadcast %150 : f32 to vector<128x1xf32>
    %152 = arith.addf %149, %151 : vector<128x1xf32>
    %153 = arith.negf %152 : vector<128x1xf32>
    %154 = math.exp %153 : vector<128x1xf32>
    %cst_68 = arith.constant 1.000000e+00 : f32
    %155 = vector.broadcast %cst_68 : f32 to vector<128x1xf32>
    %156 = arith.addf %155, %154 : vector<128x1xf32>
    %157 = arith.divf %155, %156 : vector<128x1xf32>
    %c0_69 = arith.constant 0 : index
    %c0_70 = arith.constant 0 : index
    %158 = vector.load %arg1[%c0_69, %c0_70] : memref<128x32xbf16, #tpu.memory_space<vmem>>, vector<128x32xbf16>
    %c0_71 = arith.constant 0 : index
    %c0_72 = arith.constant 0 : index
    %159 = vector.load %arg23[%c0_71, %c0_72] : memref<32x64xbf16, #tpu.memory_space<vmem>>, vector<32x64xbf16>
    %cst_73 = arith.constant dense<0.000000e+00> : vector<128x64xf32>
    %160 = tpu.matmul %158, %159, %cst_73 {dimension_numbers = #tpu.dot_dimension_numbers<[1], [0], [0], [1], [0, 0, 1, 1], [], []>} : vector<128x32xbf16>, vector<32x64xbf16>, vector<128x64xf32> -> vector<128x64xf32>
    %c0_74 = arith.constant 0 : index
    %c0_75 = arith.constant 0 : index
    %161 = vector.load %arg2[%c0_74, %c0_75] : memref<128x32xbf16, #tpu.memory_space<vmem>>, vector<128x32xbf16>
    %c0_76 = arith.constant 0 : index
    %c0_77 = arith.constant 0 : index
    %162 = vector.load %arg24[%c0_76, %c0_77] : memref<32x64xbf16, #tpu.memory_space<vmem>>, vector<32x64xbf16>
    %cst_78 = arith.constant dense<0.000000e+00> : vector<128x64xf32>
    %163 = tpu.matmul %161, %162, %cst_78 {dimension_numbers = #tpu.dot_dimension_numbers<[1], [0], [0], [1], [0, 0, 1, 1], [], []>} : vector<128x32xbf16>, vector<32x64xbf16>, vector<128x64xf32> -> vector<128x64xf32>
    %164 = arith.addf %160, %163 : vector<128x64xf32>
    %165 = arith.truncf %107 : vector<128x32xf32> to vector<128x32xbf16>
    %c0_79 = arith.constant 0 : index
    %c0_80 = arith.constant 0 : index
    %166 = vector.load %arg25[%c0_79, %c0_80] : memref<32x64xbf16, #tpu.memory_space<vmem>>, vector<32x64xbf16>
    %cst_81 = arith.constant dense<0.000000e+00> : vector<128x64xf32>
    %167 = tpu.matmul %165, %166, %cst_81 {dimension_numbers = #tpu.dot_dimension_numbers<[1], [0], [0], [1], [0, 0, 1, 1], [], []>} : vector<128x32xbf16>, vector<32x64xbf16>, vector<128x64xf32> -> vector<128x64xf32>
    %168 = arith.addf %164, %167 : vector<128x64xf32>
    %c0_82 = arith.constant 0 : index
    %c0_83 = arith.constant 0 : index
    %169 = vector.load %arg26[%c0_82, %c0_83] : memref<1x64xf32, #tpu.memory_space<vmem>>, vector<1x64xf32>
    %170 = vector.broadcast %157 : vector<128x1xf32> to vector<128x64xf32>
    %171 = vector.broadcast %169 : vector<1x64xf32> to vector<128x64xf32>
    %172 = arith.mulf %170, %171 : vector<128x64xf32>
    %173 = arith.addf %168, %172 : vector<128x64xf32>
    %c0_84 = arith.constant 0 : index
    %c0_85 = arith.constant 0 : index
    %174 = vector.load %arg27[%c0_84, %c0_85] : memref<1x64xf32, #tpu.memory_space<vmem>>, vector<1x64xf32>
    %175 = vector.broadcast %114 : vector<128x1xf32> to vector<128x64xf32>
    %176 = vector.broadcast %174 : vector<1x64xf32> to vector<128x64xf32>
    %177 = arith.mulf %175, %176 : vector<128x64xf32>
    %178 = arith.addf %173, %177 : vector<128x64xf32>
    %c0_86 = arith.constant 0 : index
    %c0_87 = arith.constant 0 : index
    %179 = vector.load %arg28[%c0_86, %c0_87] : memref<1x64xf32, #tpu.memory_space<vmem>>, vector<1x64xf32>
    %180 = vector.broadcast %120 : vector<128x1xf32> to vector<128x64xf32>
    %181 = vector.broadcast %179 : vector<1x64xf32> to vector<128x64xf32>
    %182 = arith.mulf %180, %181 : vector<128x64xf32>
    %183 = arith.addf %178, %182 : vector<128x64xf32>
    %c0_88 = arith.constant 0 : index
    %c0_89 = arith.constant 0 : index
    %184 = vector.load %arg29[%c0_88, %c0_89] : memref<1x64xf32, #tpu.memory_space<vmem>>, vector<1x64xf32>
    %185 = vector.broadcast %184 : vector<1x64xf32> to vector<128x64xf32>
    %186 = arith.addf %183, %185 : vector<128x64xf32>
    %187 = arith.negf %186 : vector<128x64xf32>
    %188 = math.exp %187 : vector<128x64xf32>
    %cst_90 = arith.constant 1.000000e+00 : f32
    %189 = vector.broadcast %cst_90 : f32 to vector<128x64xf32>
    %190 = arith.addf %189, %188 : vector<128x64xf32>
    %191 = arith.divf %189, %190 : vector<128x64xf32>
    %192 = arith.mulf %186, %191 : vector<128x64xf32>
    %193 = arith.truncf %192 : vector<128x64xf32> to vector<128x64xbf16>
    %c0_91 = arith.constant 0 : index
    %c0_92 = arith.constant 0 : index
    %194 = vector.load %arg30[%c0_91, %c0_92] : memref<64x64xbf16, #tpu.memory_space<vmem>>, vector<64x64xbf16>
    %cst_93 = arith.constant dense<0.000000e+00> : vector<128x64xf32>
    %195 = tpu.matmul %193, %194, %cst_93 {dimension_numbers = #tpu.dot_dimension_numbers<[1], [0], [0], [1], [0, 0, 1, 1], [], []>} : vector<128x64xbf16>, vector<64x64xbf16>, vector<128x64xf32> -> vector<128x64xf32>
    %c0_94 = arith.constant 0 : index
    %c0_95 = arith.constant 0 : index
    %196 = vector.load %arg31[%c0_94, %c0_95] : memref<1x64xf32, #tpu.memory_space<vmem>>, vector<1x64xf32>
    %197 = vector.broadcast %196 : vector<1x64xf32> to vector<128x64xf32>
    %198 = arith.addf %195, %197 : vector<128x64xf32>
    %199 = arith.negf %198 : vector<128x64xf32>
    %200 = math.exp %199 : vector<128x64xf32>
    %cst_96 = arith.constant 1.000000e+00 : f32
    %201 = vector.broadcast %cst_96 : f32 to vector<128x64xf32>
    %202 = arith.addf %201, %200 : vector<128x64xf32>
    %203 = arith.divf %201, %202 : vector<128x64xf32>
    %204 = arith.mulf %198, %203 : vector<128x64xf32>
    %c0_97 = arith.constant 0 : index
    %c0_98 = arith.constant 0 : index
    %205 = vector.load %arg32[%c0_97, %c0_98] : memref<1x64xf32, #tpu.memory_space<vmem>>, vector<1x64xf32>
    %206 = vector.broadcast %205 : vector<1x64xf32> to vector<128x64xf32>
    %207 = arith.mulf %204, %206 : vector<128x64xf32>
    %cst_99 = arith.constant dense<0.000000e+00> : vector<128xf32>
    %208 = vector.multi_reduction <add>, %207, %cst_99 [1] : vector<128x64xf32> to vector<128xf32>
    %209 = vector.shape_cast %208 : vector<128xf32> to vector<128x1xf32>
    %c0_100 = arith.constant 0 : index
    %c0_101 = arith.constant 0 : index
    %210 = memref.load %arg34[%c0_100, %c0_101] : memref<1x1xf32, #tpu.memory_space<smem>>
    %211 = vector.broadcast %210 : f32 to vector<128x1xf32>
    %212 = arith.addf %209, %211 : vector<128x1xf32>
    %213 = vector.shape_cast %212 : vector<128x1xf32> to vector<1x128xf32>
    %c0_102 = arith.constant 0 : index
    %c0_103 = arith.constant 0 : index
    %214 = vector.load %arg35[%c0_102, %c0_103] : memref<1x128xf32, #tpu.memory_space<vmem>>, vector<1x128xf32>
    tpu.vector_store %arg35[%c0_102, %c0_103], %213 {strides = array<i32>} : memref<1x128xf32, #tpu.memory_space<vmem>>, vector<1x128xf32>,
    return
  }
  func.func @transform_0(%arg0: i32) -> (i32, i32) {
    %c0_i32 = arith.constant 0 : i32
    %c0_i32_0 = arith.constant 0 : i32
    return %arg0, %c0_i32 : i32, i32
  }
  func.func @transform_1(%arg0: i32) -> (i32, i32) {
    %c0_i32 = arith.constant 0 : i32
    %c0_i32_0 = arith.constant 0 : i32
    return %arg0, %c0_i32 : i32, i32
  }
  func.func @transform_2(%arg0: i32) -> (i32, i32) {
    %c0_i32 = arith.constant 0 : i32
    %c0_i32_0 = arith.constant 0 : i32
    return %arg0, %c0_i32 : i32, i32
  }
  func.func @transform_3(%arg0: i32) -> (i32, i32) {
    %c0_i32 = arith.constant 0 : i32
    %c0_i32_0 = arith.constant 0 : i32
    return %arg0, %c0_i32 : i32, i32
  }
  func.func @transform_4(%arg0: i32) -> (i32, i32) {
    %c0_i32 = arith.constant 0 : i32
    %c0_i32_0 = arith.constant 0 : i32
    return %arg0, %c0_i32 : i32, i32
  }
  func.func @transform_5(%arg0: i32) -> (i32, i32) {
    %c0_i32 = arith.constant 0 : i32
    %c0_i32_0 = arith.constant 0 : i32
    %c0_i32_1 = arith.constant 0 : i32
    return %c0_i32, %c0_i32_0 : i32, i32
  }
  func.func @transform_6(%arg0: i32) -> (i32, i32) {
    %c0_i32 = arith.constant 0 : i32
    %c0_i32_0 = arith.constant 0 : i32
    %c0_i32_1 = arith.constant 0 : i32
    return %c0_i32, %c0_i32_0 : i32, i32
  }
  func.func @transform_7(%arg0: i32) -> (i32, i32) {
    %c0_i32 = arith.constant 0 : i32
    %c0_i32_0 = arith.constant 0 : i32
    %c0_i32_1 = arith.constant 0 : i32
    return %c0_i32, %c0_i32_0 : i32, i32
  }
  func.func @transform_8(%arg0: i32) -> (i32, i32) {
    %c0_i32 = arith.constant 0 : i32
    %c0_i32_0 = arith.constant 0 : i32
    %c0_i32_1 = arith.constant 0 : i32
    return %c0_i32, %c0_i32_0 : i32, i32
  }
  func.func @transform_9(%arg0: i32) -> (i32, i32) {
    %c0_i32 = arith.constant 0 : i32
    %c0_i32_0 = arith.constant 0 : i32
    %c0_i32_1 = arith.constant 0 : i32
    return %c0_i32, %c0_i32_0 : i32, i32
  }
  func.func @transform_10(%arg0: i32) -> (i32, i32) {
    %c0_i32 = arith.constant 0 : i32
    %c0_i32_0 = arith.constant 0 : i32
    %c0_i32_1 = arith.constant 0 : i32
    return %c0_i32, %c0_i32_0 : i32, i32
  }
  func.func @transform_11(%arg0: i32) -> (i32, i32) {
    %c0_i32 = arith.constant 0 : i32
    %c0_i32_0 = arith.constant 0 : i32
    %c0_i32_1 = arith.constant 0 : i32
    return %c0_i32, %c0_i32_0 : i32, i32
  }
  func.func @transform_12(%arg0: i32) -> (i32, i32) {
    %c0_i32 = arith.constant 0 : i32
    %c0_i32_0 = arith.constant 0 : i32
    %c0_i32_1 = arith.constant 0 : i32
    return %c0_i32, %c0_i32_0 : i32, i32
  }
  func.func @transform_13(%arg0: i32) -> (i32, i32) {
    %c0_i32 = arith.constant 0 : i32
    %c0_i32_0 = arith.constant 0 : i32
    %c0_i32_1 = arith.constant 0 : i32
    return %c0_i32, %c0_i32_0 : i32, i32
  }
  func.func @transform_14(%arg0: i32) -> (i32, i32) {
    %c0_i32 = arith.constant 0 : i32
    %c0_i32_0 = arith.constant 0 : i32
    %c0_i32_1 = arith.constant 0 : i32
    return %c0_i32, %c0_i32_0 : i32, i32
  }
  func.func @transform_15(%arg0: i32) -> (i32, i32) {
    %c0_i32 = arith.constant 0 : i32
    %c0_i32_0 = arith.constant 0 : i32
    %c0_i32_1 = arith.constant 0 : i32
    return %c0_i32, %c0_i32_0 : i32, i32
  }
  func.func @transform_16(%arg0: i32) -> (i32, i32) {
    %c0_i32 = arith.constant 0 : i32
    %c0_i32_0 = arith.constant 0 : i32
    %c0_i32_1 = arith.constant 0 : i32
    return %c0_i32, %c0_i32_0 : i32, i32
  }
  func.func @transform_17(%arg0: i32) -> (i32, i32) {
    %c0_i32 = arith.constant 0 : i32
    %c0_i32_0 = arith.constant 0 : i32
    %c0_i32_1 = arith.constant 0 : i32
    return %c0_i32, %c0_i32_0 : i32, i32
  }
  func.func @transform_18(%arg0: i32) -> (i32, i32) {
    %c0_i32 = arith.constant 0 : i32
    %c0_i32_0 = arith.constant 0 : i32
    %c0_i32_1 = arith.constant 0 : i32
    return %c0_i32, %c0_i32_0 : i32, i32
  }
  func.func @transform_19(%arg0: i32) -> (i32, i32) {
    %c0_i32 = arith.constant 0 : i32
    %c0_i32_0 = arith.constant 0 : i32
    %c0_i32_1 = arith.constant 0 : i32
    return %c0_i32, %c0_i32_0 : i32, i32
  }
  func.func @transform_20(%arg0: i32) -> (i32, i32) {
    %c0_i32 = arith.constant 0 : i32
    %c0_i32_0 = arith.constant 0 : i32
    %c0_i32_1 = arith.constant 0 : i32
    return %c0_i32, %c0_i32_0 : i32, i32
  }
  func.func @transform_21(%arg0: i32) -> (i32, i32) {
    %c0_i32 = arith.constant 0 : i32
    %c0_i32_0 = arith.constant 0 : i32
    %c0_i32_1 = arith.constant 0 : i32
    return %c0_i32, %c0_i32_0 : i32, i32
  }
  func.func @transform_22(%arg0: i32) -> (i32, i32) {
    %c0_i32 = arith.constant 0 : i32
    %c0_i32_0 = arith.constant 0 : i32
    %c0_i32_1 = arith.constant 0 : i32
    return %c0_i32, %c0_i32_0 : i32, i32
  }
  func.func @transform_23(%arg0: i32) -> (i32, i32) {
    %c0_i32 = arith.constant 0 : i32
    %c0_i32_0 = arith.constant 0 : i32
    %c0_i32_1 = arith.constant 0 : i32
    return %c0_i32, %c0_i32_0 : i32, i32
  }
  func.func @transform_24(%arg0: i32) -> (i32, i32) {
    %c0_i32 = arith.constant 0 : i32
    %c0_i32_0 = arith.constant 0 : i32
    %c0_i32_1 = arith.constant 0 : i32
    return %c0_i32, %c0_i32_0 : i32, i32
  }
  func.func @transform_25(%arg0: i32) -> (i32, i32) {
    %c0_i32 = arith.constant 0 : i32
    %c0_i32_0 = arith.constant 0 : i32
    %c0_i32_1 = arith.constant 0 : i32
    return %c0_i32, %c0_i32_0 : i32, i32
  }
  func.func @transform_26(%arg0: i32) -> (i32, i32) {
    %c0_i32 = arith.constant 0 : i32
    %c0_i32_0 = arith.constant 0 : i32
    %c0_i32_1 = arith.constant 0 : i32
    return %c0_i32, %c0_i32_0 : i32, i32
  }
  func.func @transform_27(%arg0: i32) -> (i32, i32) {
    %c0_i32 = arith.constant 0 : i32
    %c0_i32_0 = arith.constant 0 : i32
    %c0_i32_1 = arith.constant 0 : i32
    return %c0_i32, %c0_i32_0 : i32, i32
  }
  func.func @transform_28(%arg0: i32) -> (i32, i32) {
    %c0_i32 = arith.constant 0 : i32
    %c0_i32_0 = arith.constant 0 : i32
    %c0_i32_1 = arith.constant 0 : i32
    return %c0_i32, %c0_i32_0 : i32, i32
  }
  func.func @transform_29(%arg0: i32) -> (i32, i32) {
    %c0_i32 = arith.constant 0 : i32
    %c0_i32_0 = arith.constant 0 : i32
    %c0_i32_1 = arith.constant 0 : i32
    return %c0_i32, %c0_i32_0 : i32, i32
  }
  func.func @transform_30(%arg0: i32) -> (i32, i32) {
    %c0_i32 = arith.constant 0 : i32
    %c0_i32_0 = arith.constant 0 : i32
    %c0_i32_1 = arith.constant 0 : i32
    return %c0_i32, %c0_i32_0 : i32, i32
  }
  func.func @transform_31(%arg0: i32) -> (i32, i32) {
    %c0_i32 = arith.constant 0 : i32
    %c0_i32_0 = arith.constant 0 : i32
    %c0_i32_1 = arith.constant 0 : i32
    return %c0_i32, %c0_i32_0 : i32, i32
  }
  func.func @transform_32(%arg0: i32) -> (i32, i32) {
    %c0_i32 = arith.constant 0 : i32
    %c0_i32_0 = arith.constant 0 : i32
    %c0_i32_1 = arith.constant 0 : i32
    return %c0_i32, %c0_i32_0 : i32, i32
  }
  func.func @transform_33(%arg0: i32) -> (i32, i32) {
    %c0_i32 = arith.constant 0 : i32
    %c0_i32_0 = arith.constant 0 : i32
    %c0_i32_1 = arith.constant 0 : i32
    return %c0_i32, %c0_i32_0 : i32, i32
  }
  func.func @transform_34(%arg0: i32) -> (i32, i32) {
    %c0_i32 = arith.constant 0 : i32
    %c0_i32_0 = arith.constant 0 : i32
    return %c0_i32, %arg0 : i32, i32
  }
}

</mosaic_0001>

<llo_original>
// kernel: tpu_custom_call.1
$region0: #{tpu_custom_call.1}
  #allocation0 [shape = 'u32[]', space=smem, size = 0x4, offset = 0x4, fixed_abs, tag = 'smem constant byte address 0x4 - core index']
  #allocation1 [shape = 'u32[144,128]{1,0:T(1,128)}', space=vmem, size = 0x12000, scoped, tag = 'internal scratch']
  #allocation2 [shape = 'f32[1,1]{1,0:T(1,128)S(6)}', space=smem, size = 0x200, scoped, tag = 'scoped memory for tpu_custom_call.1']
  #allocation3 [shape = 'f32[1,1]{1,0:T(1,128)S(6)}', space=smem, size = 0x200, scoped, tag = 'scoped memory for tpu_custom_call.1']
  %s0 = inlined_call_operand.smem [shape: u32[35], index: -1, kind: input, shape index: {}]
  %s1 = sld [smem:[%s0]]
  %s2 = scalar_lea.smem %s0, 1
  %s3 = sld [smem:[%s2]]
  %s4 = scalar_lea.smem %s0, 2
  %s5 = sld [smem:[%s4]]
  %s6 = scalar_lea.smem %s0, 3
  %s7 = sld [smem:[%s6]]
  %s8 = scalar_lea.smem %s0, 4
  %s9 = sld [smem:[%s8]]
  %s10 = scalar_lea.smem %s0, 5
  %s11 = sld [smem:[%s10]]
  %s12 = scalar_lea.smem %s0, 6
  %s13 = sld [smem:[%s12]]
  %s14 = scalar_lea.smem %s0, 7
  %s15 = sld [smem:[%s14]]
  %s16 = scalar_lea.smem %s0, 8
  %s17 = sld [smem:[%s16]]
  %s18 = scalar_lea.smem %s0, 9
  %s19 = sld [smem:[%s18]]
  %s20 = scalar_lea.smem %s0, 10
  %s21 = sld [smem:[%s20]]
  %s22 = scalar_lea.smem %s0, 11
  %s23 = sld [smem:[%s22]]
  %s24 = scalar_lea.smem %s0, 12
  %s25 = sld [smem:[%s24]]
  %s26 = scalar_lea.smem %s0, 13
  %s27 = sld [smem:[%s26]]
  %s28 = scalar_lea.smem %s0, 14
  %s29 = sld [smem:[%s28]]
  %s30 = scalar_lea.smem %s0, 15
  %s31 = sld [smem:[%s30]]
  %s32 = scalar_lea.smem %s0, 16
  %s33 = sld [smem:[%s32]]
  %s34 = scalar_lea.smem %s0, 17
  %s35 = sld [smem:[%s34]]
  %s36 = scalar_lea.smem %s0, 18
  %s37 = sld [smem:[%s36]]
  %s38 = scalar_lea.smem %s0, 19
  %s39 = sld [smem:[%s38]]
  %s40 = scalar_lea.smem %s0, 20
  %s41 = sld [smem:[%s40]]
  %s42 = scalar_lea.smem %s0, 21
  %s43 = sld [smem:[%s42]]
  %s44 = scalar_lea.smem %s0, 22
  %s45 = sld [smem:[%s44]]
  %s46 = scalar_lea.smem %s0, 23
  %s47 = sld [smem:[%s46]]
  %s48 = scalar_lea.smem %s0, 24
  %s49 = sld [smem:[%s48]]
  %s50 = scalar_lea.smem %s0, 25
  %s51 = sld [smem:[%s50]]
  %s52 = scalar_lea.smem %s0, 26
  %s53 = sld [smem:[%s52]]
  %s54 = scalar_lea.smem %s0, 27
  %s55 = sld [smem:[%s54]]
  %s56 = scalar_lea.smem %s0, 28
  %s57 = sld [smem:[%s56]]
  %s58 = scalar_lea.smem %s0, 29
  %s59 = sld [smem:[%s58]]
  %s60 = scalar_lea.smem %s0, 30
  %s61 = sld [smem:[%s60]]
  %s62 = scalar_lea.smem %s0, 31
  %s63 = sld [smem:[%s62]]
  %s64 = scalar_lea.smem %s0, 32
  %s65 = sld [smem:[%s64]]
  %s66 = scalar_lea.smem %s0, 33
  %s67 = sld [smem:[%s66]]
  %s68 = scalar_lea.smem %s0, 34
  %s69 = sld [smem:[%s68]]
  %s70 = sld [smem:[#allocation0]]
  $region169: #{tpu_custom_call.1} parent=0
    _
  %s72 = ssub.s32 1, %s70
  %s73 = scalar_select 0, %s72, %s70
  %74 = sst [smem:[#allocation2]] %s65
  %75 = sst [smem:[#allocation3]] %s67
  $region1: #{tpu_custom_call.1} parent=0
    #allocation4 [shape = 'u8[1024]{0}', space=vmem, size = 0x400, scoped, tag = 'output window, operand 0']
    #allocation5 [shape = 's32[2]{0}', space=sflag, size = 0x8, scoped, tag = 'scoped memory for tpu_custom_call.1']
    %76 = vsyncpa [#allocation5], 0
    %s77 = scalar_lea.sflag [#allocation5], 1
    %78 = vsyncpa %s77, 0
    loop: start=0, step=1, limit=6
    $region2: #{tpu_custom_call.1} parent=1 // loop_pre_header
      _
    $region3: #{tpu_custom_call.1} parent=1 // loop_header
      %s80 = sphi 0, %s84
      %p81 = scmp.ge.s32.totalorder %s80, 6
      %s90 = sphi 0, %s92
      %s93 = sphi 0, %s90
      %s94 = sphi 0, %s93
      %s110 = sphi 0, %s94
      %s116 = sphi 0, %s118
      %s119 = sphi 0, %s116
      %s120 = sphi 0, %s119
      %s136 = sphi 0, %s120
      %s142 = sphi 0, %s144
      %s145 = sphi 0, %s142
      %s146 = sphi 0, %s145
      %s162 = sphi 0, %s146
      %s168 = sphi 0, %s170
      %s171 = sphi 0, %s168
      %s172 = sphi 0, %s171
      %s188 = sphi 0, %s172
      %s194 = sphi 0, %s196
      %s197 = sphi 0, %s194
      %s198 = sphi 0, %s197
      %s214 = sphi 0, %s198
      %s218 = sphi 0, %s218
      %s220 = sphi 0, %s218
      %s221 = sphi 0, %s220
      %s235 = sphi 0, %s221
      %s239 = sphi 0, %s239
      %s241 = sphi 0, %s239
      %s242 = sphi 0, %s241
      %s256 = sphi 0, %s242
      %s260 = sphi 0, %s260
      %s262 = sphi 0, %s260
      %s263 = sphi 0, %s262
      %s277 = sphi 0, %s263
      %s281 = sphi 0, %s281
      %s283 = sphi 0, %s281
      %s284 = sphi 0, %s283
      %s298 = sphi 0, %s284
      %s302 = sphi 0, %s302
      %s304 = sphi 0, %s302
      %s305 = sphi 0, %s304
      %s319 = sphi 0, %s305
      %s323 = sphi 0, %s323
      %s325 = sphi 0, %s323
      %s326 = sphi 0, %s325
      %s340 = sphi 0, %s326
      %s344 = sphi 0, %s344
      %s346 = sphi 0, %s344
      %s347 = sphi 0, %s346
      %s361 = sphi 0, %s347
      %s365 = sphi 0, %s365
      %s367 = sphi 0, %s365
      %s368 = sphi 0, %s367
      %s382 = sphi 0, %s368
      %s386 = sphi 0, %s386
      %s388 = sphi 0, %s386
      %s389 = sphi 0, %s388
      %s403 = sphi 0, %s389
      %s407 = sphi 0, %s407
      %s409 = sphi 0, %s407
      %s410 = sphi 0, %s409
      %s424 = sphi 0, %s410
      %s428 = sphi 0, %s428
      %s430 = sphi 0, %s428
      %s431 = sphi 0, %s430
      %s445 = sphi 0, %s431
      %s449 = sphi 0, %s449
      %s451 = sphi 0, %s449
      %s452 = sphi 0, %s451
      %s466 = sphi 0, %s452
      %s470 = sphi 0, %s470
      %s472 = sphi 0, %s470
      %s473 = sphi 0, %s472
      %s487 = sphi 0, %s473
      %s491 = sphi 0, %s491
      %s493 = sphi 0, %s491
      %s494 = sphi 0, %s493
      %s508 = sphi 0, %s494
      %s512 = sphi 0, %s512
      %s514 = sphi 0, %s512
      %s515 = sphi 0, %s514
      %s529 = sphi 0, %s515
      %s533 = sphi 0, %s533
      %s535 = sphi 0, %s533
      %s536 = sphi 0, %s535
      %s550 = sphi 0, %s536
      %s554 = sphi 0, %s554
      %s556 = sphi 0, %s554
      %s557 = sphi 0, %s556
      %s571 = sphi 0, %s557
      %s575 = sphi 0, %s575
      %s577 = sphi 0, %s575
      %s578 = sphi 0, %s577
      %s592 = sphi 0, %s578
      %s596 = sphi 0, %s596
      %s598 = sphi 0, %s596
      %s599 = sphi 0, %s598
      %s613 = sphi 0, %s599
      %s617 = sphi 0, %s617
      %s619 = sphi 0, %s617
      %s620 = sphi 0, %s619
      %s634 = sphi 0, %s620
      %s638 = sphi 0, %s638
      %s640 = sphi 0, %s638
      %s641 = sphi 0, %s640
      %s655 = sphi 0, %s641
      %s659 = sphi 0, %s659
      %s661 = sphi 0, %s659
      %s662 = sphi 0, %s661
      %s676 = sphi 0, %s662
      %s680 = sphi 0, %s680
      %s682 = sphi 0, %s680
      %s683 = sphi 0, %s682
      %s697 = sphi 0, %s683
      %s701 = sphi 0, %s701
      %s703 = sphi 0, %s701
      %s704 = sphi 0, %s703
      %s718 = sphi 0, %s704
      %s722 = sphi 0, %s722
      %s724 = sphi 0, %s722
      %s725 = sphi 0, %s724
      %s739 = sphi 0, %s725
      %s743 = sphi 0, %s743
      %s745 = sphi 0, %s743
      %s746 = sphi 0, %s745
      %s760 = sphi 0, %s746
      %s764 = sphi 0, %s764
      %s766 = sphi 0, %s764
      %s767 = sphi 0, %s766
      %s781 = sphi 0, %s767
      %s785 = sphi 0, %s785
      %s787 = sphi 0, %s785
      %s788 = sphi 0, %s787
      %s802 = sphi 0, %s788
      %s806 = sphi 0, %s806
      %s808 = sphi 0, %s806
      %s809 = sphi 0, %s808
      %s823 = sphi 0, %s809
      %s829 = sphi 0, %s831
      %s832 = sphi 0, %s829
      %s833 = sphi 0, %s832
      %s849 = sphi 0, %s833
    $region4: #{tpu_custom_call.1} parent=1 // loop_header_branch
      %83 = sbr.rel (%p81) target = $region8
    $region5: #{tpu_custom_call.1} parent=1 // loop_body
      %s85 = ssub.s32 %s80, 1
      %s86 = ssub.s32 %s80, 2
      %s87 = sadd.s32 %s80, 1
      %s88 = ssub.s32 %s80, %s87
      %p89 = scmp.eq.s32.totalorder %s88, 0
      %s91 = sadd.s32 %s90, 1
      %s92 = scalar_select %p89, %s90, %s91
      %p95 = pneg %p89
      %p96 = scmp.eq.s32.totalorder %s80, 3
      %p97 = por %p95, %p96
      %p98 = scmp.ne.s32.totalorder %s90, %s93
      %p99 = scmp.eq.s32.totalorder %s80, 0
      %p100 = por %p98, %p99
      %p101 = scmp.ne.s32.totalorder %s90, %s93
      %p102 = scmp.eq.s32.totalorder %s85, 3
      %p103 = por %p101, %p102
      %p104 = scmp.ne.s32.totalorder %s93, %s94
      %p105 = scmp.eq.s32.totalorder %s85, 0
      %p106 = por %p104, %p105
      %p107 = scmp.ne.s32.totalorder %s93, %s94
      %p108 = scmp.eq.s32.totalorder %s86, 3
      %p109 = por %p107, %p108
      %p111 = scmp.ne.s32.totalorder %s94, %s110
      %p112 = scmp.eq.s32.totalorder %s86, 0
      %p113 = por %p111, %p112
      %s114 = ssub.s32 %s80, %s87
      %p115 = scmp.eq.s32.totalorder %s114, 0
      %s117 = sadd.s32 %s116, 1
      %s118 = scalar_select %p115, %s116, %s117
      %p121 = pneg %p115
      %p122 = scmp.eq.s32.totalorder %s80, 3
      %p123 = por %p121, %p122
      %p124 = scmp.ne.s32.totalorder %s116, %s119
      %p125 = scmp.eq.s32.totalorder %s80, 0
      %p126 = por %p124, %p125
      %p127 = scmp.ne.s32.totalorder %s116, %s119
      %p128 = scmp.eq.s32.totalorder %s85, 3
      %p129 = por %p127, %p128
      %p130 = scmp.ne.s32.totalorder %s119, %s120
      %p131 = scmp.eq.s32.totalorder %s85, 0
      %p132 = por %p130, %p131
      %p133 = scmp.ne.s32.totalorder %s119, %s120
      %p134 = scmp.eq.s32.totalorder %s86, 3
      %p135 = por %p133, %p134
      %p137 = scmp.ne.s32.totalorder %s120, %s136
      %p138 = scmp.eq.s32.totalorder %s86, 0
      %p139 = por %p137, %p138
      %s140 = ssub.s32 %s80, %s87
      %p141 = scmp.eq.s32.totalorder %s140, 0
      %s143 = sadd.s32 %s142, 1
      %s144 = scalar_select %p141, %s142, %s143
      %p147 = pneg %p141
      %p148 = scmp.eq.s32.totalorder %s80, 3
      %p149 = por %p147, %p148
      %p150 = scmp.ne.s32.totalorder %s142, %s145
      %p151 = scmp.eq.s32.totalorder %s80, 0
      %p152 = por %p150, %p151
      %p153 = scmp.ne.s32.totalorder %s142, %s145
      %p154 = scmp.eq.s32.totalorder %s85, 3
      %p155 = por %p153, %p154
      %p156 = scmp.ne.s32.totalorder %s145, %s146
      %p157 = scmp.eq.s32.totalorder %s85, 0
      %p158 = por %p156, %p157
      %p159 = scmp.ne.s32.totalorder %s145, %s146
      %p160 = scmp.eq.s32.totalorder %s86, 3
      %p161 = por %p159, %p160
      %p163 = scmp.ne.s32.totalorder %s146, %s162
      %p164 = scmp.eq.s32.totalorder %s86, 0
      %p165 = por %p163, %p164
      %s166 = ssub.s32 %s80, %s87
      %p167 = scmp.eq.s32.totalorder %s166, 0
      %s169 = sadd.s32 %s168, 1
      %s170 = scalar_select %p167, %s168, %s169
      %p173 = pneg %p167
      %p174 = scmp.eq.s32.totalorder %s80, 3
      %p175 = por %p173, %p174
      %p176 = scmp.ne.s32.totalorder %s168, %s171
      %p177 = scmp.eq.s32.totalorder %s80, 0
      %p178 = por %p176, %p177
      %p179 = scmp.ne.s32.totalorder %s168, %s171
      %p180 = scmp.eq.s32.totalorder %s85, 3
      %p181 = por %p179, %p180
      %p182 = scmp.ne.s32.totalorder %s171, %s172
      %p183 = scmp.eq.s32.totalorder %s85, 0
      %p184 = por %p182, %p183
      %p185 = scmp.ne.s32.totalorder %s171, %s172
      %p186 = scmp.eq.s32.totalorder %s86, 3
      %p187 = por %p185, %p186
      %p189 = scmp.ne.s32.totalorder %s172, %s188
      %p190 = scmp.eq.s32.totalorder %s86, 0
      %p191 = por %p189, %p190
      %s192 = ssub.s32 %s80, %s87
      %p193 = scmp.eq.s32.totalorder %s192, 0
      %s195 = sadd.s32 %s194, 1
      %s196 = scalar_select %p193, %s194, %s195
      %p199 = pneg %p193
      %p200 = scmp.eq.s32.totalorder %s80, 3
      %p201 = por %p199, %p200
      %p202 = scmp.ne.s32.totalorder %s194, %s197
      %p203 = scmp.eq.s32.totalorder %s80, 0
      %p204 = por %p202, %p203
      %p205 = scmp.ne.s32.totalorder %s194, %s197
      %p206 = scmp.eq.s32.totalorder %s85, 3
      %p207 = por %p205, %p206
      %p208 = scmp.ne.s32.totalorder %s197, %s198
      %p209 = scmp.eq.s32.totalorder %s85, 0
      %p210 = por %p208, %p209
      %p211 = scmp.ne.s32.totalorder %s197, %s198
      %p212 = scmp.eq.s32.totalorder %s86, 3
      %p213 = por %p211, %p212
      %p215 = scmp.ne.s32.totalorder %s198, %s214
      %p216 = scmp.eq.s32.totalorder %s86, 0
      %p217 = por %p215, %p216
      %s219 = sadd.s32 %s218, 1
      %p222 = scmp.eq.s32.totalorder %s80, 3
      %p223 = scmp.ne.s32.totalorder %s218, %s220
      %p224 = scmp.eq.s32.totalorder %s80, 0
      %p225 = por %p223, %p224
      %p226 = scmp.ne.s32.totalorder %s218, %s220
      %p227 = scmp.eq.s32.totalorder %s85, 3
      %p228 = por %p226, %p227
      %p229 = scmp.ne.s32.totalorder %s220, %s221
      %p230 = scmp.eq.s32.totalorder %s85, 0
      %p231 = por %p229, %p230
      %p232 = scmp.ne.s32.totalorder %s220, %s221
      %p233 = scmp.eq.s32.totalorder %s86, 3
      %p234 = por %p232, %p233
      %p236 = scmp.ne.s32.totalorder %s221, %s235
      %p237 = scmp.eq.s32.totalorder %s86, 0
      %p238 = por %p236, %p237
      %s240 = sadd.s32 %s239, 1
      %p243 = scmp.eq.s32.totalorder %s80, 3
      %p244 = scmp.ne.s32.totalorder %s239, %s241
      %p245 = scmp.eq.s32.totalorder %s80, 0
      %p246 = por %p244, %p245
      %p247 = scmp.ne.s32.totalorder %s239, %s241
      %p248 = scmp.eq.s32.totalorder %s85, 3
      %p249 = por %p247, %p248
      %p250 = scmp.ne.s32.totalorder %s241, %s242
      %p251 = scmp.eq.s32.totalorder %s85, 0
      %p252 = por %p250, %p251
      %p253 = scmp.ne.s32.totalorder %s241, %s242
      %p254 = scmp.eq.s32.totalorder %s86, 3
      %p255 = por %p253, %p254
      %p257 = scmp.ne.s32.totalorder %s242, %s256
      %p258 = scmp.eq.s32.totalorder %s86, 0
      %p259 = por %p257, %p258
      %s261 = sadd.s32 %s260, 1
      %p264 = scmp.eq.s32.totalorder %s80, 3
      %p265 = scmp.ne.s32.totalorder %s260, %s262
      %p266 = scmp.eq.s32.totalorder %s80, 0
      %p267 = por %p265, %p266
      %p268 = scmp.ne.s32.totalorder %s260, %s262
      %p269 = scmp.eq.s32.totalorder %s85, 3
      %p270 = por %p268, %p269
      %p271 = scmp.ne.s32.totalorder %s262, %s263
      %p272 = scmp.eq.s32.totalorder %s85, 0
      %p273 = por %p271, %p272
      %p274 = scmp.ne.s32.totalorder %s262, %s263
      %p275 = scmp.eq.s32.totalorder %s86, 3
      %p276 = por %p274, %p275
      %p278 = scmp.ne.s32.totalorder %s263, %s277
      %p279 = scmp.eq.s32.totalorder %s86, 0
      %p280 = por %p278, %p279
      %s282 = sadd.s32 %s281, 1
      %p285 = scmp.eq.s32.totalorder %s80, 3
      %p286 = scmp.ne.s32.totalorder %s281, %s283
      %p287 = scmp.eq.s32.totalorder %s80, 0
      %p288 = por %p286, %p287
      %p289 = scmp.ne.s32.totalorder %s281, %s283
      %p290 = scmp.eq.s32.totalorder %s85, 3
      %p291 = por %p289, %p290
      %p292 = scmp.ne.s32.totalorder %s283, %s284
      %p293 = scmp.eq.s32.totalorder %s85, 0
      %p294 = por %p292, %p293
      %p295 = scmp.ne.s32.totalorder %s283, %s284
      %p296 = scmp.eq.s32.totalorder %s86, 3
      %p297 = por %p295, %p296
      %p299 = scmp.ne.s32.totalorder %s284, %s298
      %p300 = scmp.eq.s32.totalorder %s86, 0
      %p301 = por %p299, %p300
      %s303 = sadd.s32 %s302, 1
      %p306 = scmp.eq.s32.totalorder %s80, 3
      %p307 = scmp.ne.s32.totalorder %s302, %s304
      %p308 = scmp.eq.s32.totalorder %s80, 0
      %p309 = por %p307, %p308
      %p310 = scmp.ne.s32.totalorder %s302, %s304
      %p311 = scmp.eq.s32.totalorder %s85, 3
      %p312 = por %p310, %p311
      %p313 = scmp.ne.s32.totalorder %s304, %s305
      %p314 = scmp.eq.s32.totalorder %s85, 0
      %p315 = por %p313, %p314
      %p316 = scmp.ne.s32.totalorder %s304, %s305
      %p317 = scmp.eq.s32.totalorder %s86, 3
      %p318 = por %p316, %p317
      %p320 = scmp.ne.s32.totalorder %s305, %s319
      %p321 = scmp.eq.s32.totalorder %s86, 0
      %p322 = por %p320, %p321
      %s324 = sadd.s32 %s323, 1
      %p327 = scmp.eq.s32.totalorder %s80, 3
      %p328 = scmp.ne.s32.totalorder %s323, %s325
      %p329 = scmp.eq.s32.totalorder %s80, 0
      %p330 = por %p328, %p329
      %p331 = scmp.ne.s32.totalorder %s323, %s325
      %p332 = scmp.eq.s32.totalorder %s85, 3
      %p333 = por %p331, %p332
      %p334 = scmp.ne.s32.totalorder %s325, %s326
      %p335 = scmp.eq.s32.totalorder %s85, 0
      %p336 = por %p334, %p335
      %p337 = scmp.ne.s32.totalorder %s325, %s326
      %p338 = scmp.eq.s32.totalorder %s86, 3
      %p339 = por %p337, %p338
      %p341 = scmp.ne.s32.totalorder %s326, %s340
      %p342 = scmp.eq.s32.totalorder %s86, 0
      %p343 = por %p341, %p342
      %s345 = sadd.s32 %s344, 1
      %p348 = scmp.eq.s32.totalorder %s80, 3
      %p349 = scmp.ne.s32.totalorder %s344, %s346
      %p350 = scmp.eq.s32.totalorder %s80, 0
      %p351 = por %p349, %p350
      %p352 = scmp.ne.s32.totalorder %s344, %s346
      %p353 = scmp.eq.s32.totalorder %s85, 3
      %p354 = por %p352, %p353
      %p355 = scmp.ne.s32.totalorder %s346, %s347
      %p356 = scmp.eq.s32.totalorder %s85, 0
      %p357 = por %p355, %p356
      %p358 = scmp.ne.s32.totalorder %s346, %s347
      %p359 = scmp.eq.s32.totalorder %s86, 3
      %p360 = por %p358, %p359
      %p362 = scmp.ne.s32.totalorder %s347, %s361
      %p363 = scmp.eq.s32.totalorder %s86, 0
      %p364 = por %p362, %p363
      %s366 = sadd.s32 %s365, 1
      %p369 = scmp.eq.s32.totalorder %s80, 3
      %p370 = scmp.ne.s32.totalorder %s365, %s367
      %p371 = scmp.eq.s32.totalorder %s80, 0
      %p372 = por %p370, %p371
      %p373 = scmp.ne.s32.totalorder %s365, %s367
      %p374 = scmp.eq.s32.totalorder %s85, 3
      %p375 = por %p373, %p374
      %p376 = scmp.ne.s32.totalorder %s367, %s368
      %p377 = scmp.eq.s32.totalorder %s85, 0
      %p378 = por %p376, %p377
      %p379 = scmp.ne.s32.totalorder %s367, %s368
      %p380 = scmp.eq.s32.totalorder %s86, 3
      %p381 = por %p379, %p380
      %p383 = scmp.ne.s32.totalorder %s368, %s382
      %p384 = scmp.eq.s32.totalorder %s86, 0
      %p385 = por %p383, %p384
      %s387 = sadd.s32 %s386, 1
      %p390 = scmp.eq.s32.totalorder %s80, 3
      %p391 = scmp.ne.s32.totalorder %s386, %s388
      %p392 = scmp.eq.s32.totalorder %s80, 0
      %p393 = por %p391, %p392
      %p394 = scmp.ne.s32.totalorder %s386, %s388
      %p395 = scmp.eq.s32.totalorder %s85, 3
      %p396 = por %p394, %p395
      %p397 = scmp.ne.s32.totalorder %s388, %s389
      %p398 = scmp.eq.s32.totalorder %s85, 0
      %p399 = por %p397, %p398
      %p400 = scmp.ne.s32.totalorder %s388, %s389
      %p401 = scmp.eq.s32.totalorder %s86, 3
      %p402 = por %p400, %p401
      %p404 = scmp.ne.s32.totalorder %s389, %s403
      %p405 = scmp.eq.s32.totalorder %s86, 0
      %p406 = por %p404, %p405
      %s408 = sadd.s32 %s407, 1
      %p411 = scmp.eq.s32.totalorder %s80, 3
      %p412 = scmp.ne.s32.totalorder %s407, %s409
      %p413 = scmp.eq.s32.totalorder %s80, 0
      %p414 = por %p412, %p413
      %p415 = scmp.ne.s32.totalorder %s407, %s409
      %p416 = scmp.eq.s32.totalorder %s85, 3
      %p417 = por %p415, %p416
      %p418 = scmp.ne.s32.totalorder %s409, %s410
      %p419 = scmp.eq.s32.totalorder %s85, 0
      %p420 = por %p418, %p419
      %p421 = scmp.ne.s32.totalorder %s409, %s410
      %p422 = scmp.eq.s32.totalorder %s86, 3
      %p423 = por %p421, %p422
      %p425 = scmp.ne.s32.totalorder %s410, %s424
      %p426 = scmp.eq.s32.totalorder %s86, 0
      %p427 = por %p425, %p426
      %s429 = sadd.s32 %s428, 1
      %p432 = scmp.eq.s32.totalorder %s80, 3
      %p433 = scmp.ne.s32.totalorder %s428, %s430
      %p434 = scmp.eq.s32.totalorder %s80, 0
      %p435 = por %p433, %p434
      %p436 = scmp.ne.s32.totalorder %s428, %s430
      %p437 = scmp.eq.s32.totalorder %s85, 3
      %p438 = por %p436, %p437
      %p439 = scmp.ne.s32.totalorder %s430, %s431
      %p440 = scmp.eq.s32.totalorder %s85, 0
      %p441 = por %p439, %p440
      %p442 = scmp.ne.s32.totalorder %s430, %s431
      %p443 = scmp.eq.s32.totalorder %s86, 3
      %p444 = por %p442, %p443
      %p446 = scmp.ne.s32.totalorder %s431, %s445
      %p447 = scmp.eq.s32.totalorder %s86, 0
      %p448 = por %p446, %p447
      %s450 = sadd.s32 %s449, 1
      %p453 = scmp.eq.s32.totalorder %s80, 3
      %p454 = scmp.ne.s32.totalorder %s449, %s451
      %p455 = scmp.eq.s32.totalorder %s80, 0
      %p456 = por %p454, %p455
      %p457 = scmp.ne.s32.totalorder %s449, %s451
      %p458 = scmp.eq.s32.totalorder %s85, 3
      %p459 = por %p457, %p458
      %p460 = scmp.ne.s32.totalorder %s451, %s452
      %p461 = scmp.eq.s32.totalorder %s85, 0
      %p462 = por %p460, %p461
      %p463 = scmp.ne.s32.totalorder %s451, %s452
      %p464 = scmp.eq.s32.totalorder %s86, 3
      %p465 = por %p463, %p464
      %p467 = scmp.ne.s32.totalorder %s452, %s466
      %p468 = scmp.eq.s32.totalorder %s86, 0
      %p469 = por %p467, %p468
      %s471 = sadd.s32 %s470, 1
      %p474 = scmp.eq.s32.totalorder %s80, 3
      %p475 = scmp.ne.s32.totalorder %s470, %s472
      %p476 = scmp.eq.s32.totalorder %s80, 0
      %p477 = por %p475, %p476
      %p478 = scmp.ne.s32.totalorder %s470, %s472
      %p479 = scmp.eq.s32.totalorder %s85, 3
      %p480 = por %p478, %p479
      %p481 = scmp.ne.s32.totalorder %s472, %s473
      %p482 = scmp.eq.s32.totalorder %s85, 0
      %p483 = por %p481, %p482
      %p484 = scmp.ne.s32.totalorder %s472, %s473
      %p485 = scmp.eq.s32.totalorder %s86, 3
      %p486 = por %p484, %p485
      %p488 = scmp.ne.s32.totalorder %s473, %s487
      %p489 = scmp.eq.s32.totalorder %s86, 0
      %p490 = por %p488, %p489
      %s492 = sadd.s32 %s491, 1
      %p495 = scmp.eq.s32.totalorder %s80, 3
      %p496 = scmp.ne.s32.totalorder %s491, %s493
      %p497 = scmp.eq.s32.totalorder %s80, 0
      %p498 = por %p496, %p497
      %p499 = scmp.ne.s32.totalorder %s491, %s493
      %p500 = scmp.eq.s32.totalorder %s85, 3
      %p501 = por %p499, %p500
      %p502 = scmp.ne.s32.totalorder %s493, %s494
      %p503 = scmp.eq.s32.totalorder %s85, 0
      %p504 = por %p502, %p503
      %p505 = scmp.ne.s32.totalorder %s493, %s494
      %p506 = scmp.eq.s32.totalorder %s86, 3
      %p507 = por %p505, %p506
      %p509 = scmp.ne.s32.totalorder %s494, %s508
      %p510 = scmp.eq.s32.totalorder %s86, 0
      %p511 = por %p509, %p510
      %s513 = sadd.s32 %s512, 1
      %p516 = scmp.eq.s32.totalorder %s80, 3
      %p517 = scmp.ne.s32.totalorder %s512, %s514
      %p518 = scmp.eq.s32.totalorder %s80, 0
      %p519 = por %p517, %p518
      %p520 = scmp.ne.s32.totalorder %s512, %s514
      %p521 = scmp.eq.s32.totalorder %s85, 3
      %p522 = por %p520, %p521
      %p523 = scmp.ne.s32.totalorder %s514, %s515
      %p524 = scmp.eq.s32.totalorder %s85, 0
      %p525 = por %p523, %p524
      %p526 = scmp.ne.s32.totalorder %s514, %s515
      %p527 = scmp.eq.s32.totalorder %s86, 3
      %p528 = por %p526, %p527
      %p530 = scmp.ne.s32.totalorder %s515, %s529
      %p531 = scmp.eq.s32.totalorder %s86, 0
      %p532 = por %p530, %p531
      %s534 = sadd.s32 %s533, 1
      %p537 = scmp.eq.s32.totalorder %s80, 3
      %p538 = scmp.ne.s32.totalorder %s533, %s535
      %p539 = scmp.eq.s32.totalorder %s80, 0
      %p540 = por %p538, %p539
      %p541 = scmp.ne.s32.totalorder %s533, %s535
      %p542 = scmp.eq.s32.totalorder %s85, 3
      %p543 = por %p541, %p542
      %p544 = scmp.ne.s32.totalorder %s535, %s536
      %p545 = scmp.eq.s32.totalorder %s85, 0
      %p546 = por %p544, %p545
      %p547 = scmp.ne.s32.totalorder %s535, %s536
      %p548 = scmp.eq.s32.totalorder %s86, 3
      %p549 = por %p547, %p548
      %p551 = scmp.ne.s32.totalorder %s536, %s550
      %p552 = scmp.eq.s32.totalorder %s86, 0
      %p553 = por %p551, %p552
      %s555 = sadd.s32 %s554, 1
      %p558 = scmp.eq.s32.totalorder %s80, 3
      %p559 = scmp.ne.s32.totalorder %s554, %s556
      %p560 = scmp.eq.s32.totalorder %s80, 0
      %p561 = por %p559, %p560
      %p562 = scmp.ne.s32.totalorder %s554, %s556
      %p563 = scmp.eq.s32.totalorder %s85, 3
      %p564 = por %p562, %p563
      %p565 = scmp.ne.s32.totalorder %s556, %s557
      %p566 = scmp.eq.s32.totalorder %s85, 0
      %p567 = por %p565, %p566
      %p568 = scmp.ne.s32.totalorder %s556, %s557
      %p569 = scmp.eq.s32.totalorder %s86, 3
      %p570 = por %p568, %p569
      %p572 = scmp.ne.s32.totalorder %s557, %s571
      %p573 = scmp.eq.s32.totalorder %s86, 0
      %p574 = por %p572, %p573
      %s576 = sadd.s32 %s575, 1
      %p579 = scmp.eq.s32.totalorder %s80, 3
      %p580 = scmp.ne.s32.totalorder %s575, %s577
      %p581 = scmp.eq.s32.totalorder %s80, 0
      %p582 = por %p580, %p581
      %p583 = scmp.ne.s32.totalorder %s575, %s577
      %p584 = scmp.eq.s32.totalorder %s85, 3
      %p585 = por %p583, %p584
      %p586 = scmp.ne.s32.totalorder %s577, %s578
      %p587 = scmp.eq.s32.totalorder %s85, 0
      %p588 = por %p586, %p587
      %p589 = scmp.ne.s32.totalorder %s577, %s578
      %p590 = scmp.eq.s32.totalorder %s86, 3
      %p591 = por %p589, %p590
      %p593 = scmp.ne.s32.totalorder %s578, %s592
      %p594 = scmp.eq.s32.totalorder %s86, 0
      %p595 = por %p593, %p594
      %s597 = sadd.s32 %s596, 1
      %p600 = scmp.eq.s32.totalorder %s80, 3
      %p601 = scmp.ne.s32.totalorder %s596, %s598
      %p602 = scmp.eq.s32.totalorder %s80, 0
      %p603 = por %p601, %p602
      %p604 = scmp.ne.s32.totalorder %s596, %s598
      %p605 = scmp.eq.s32.totalorder %s85, 3
      %p606 = por %p604, %p605
      %p607 = scmp.ne.s32.totalorder %s598, %s599
      %p608 = scmp.eq.s32.totalorder %s85, 0
      %p609 = por %p607, %p608
      %p610 = scmp.ne.s32.totalorder %s598, %s599
      %p611 = scmp.eq.s32.totalorder %s86, 3
      %p612 = por %p610, %p611
      %p614 = scmp.ne.s32.totalorder %s599, %s613
      %p615 = scmp.eq.s32.totalorder %s86, 0
      %p616 = por %p614, %p615
      %s618 = sadd.s32 %s617, 1
      %p621 = scmp.eq.s32.totalorder %s80, 3
      %p622 = scmp.ne.s32.totalorder %s617, %s619
      %p623 = scmp.eq.s32.totalorder %s80, 0
      %p624 = por %p622, %p623
      %p625 = scmp.ne.s32.totalorder %s617, %s619
      %p626 = scmp.eq.s32.totalorder %s85, 3
      %p627 = por %p625, %p626
      %p628 = scmp.ne.s32.totalorder %s619, %s620
      %p629 = scmp.eq.s32.totalorder %s85, 0
      %p630 = por %p628, %p629
      %p631 = scmp.ne.s32.totalorder %s619, %s620
      %p632 = scmp.eq.s32.totalorder %s86, 3
      %p633 = por %p631, %p632
      %p635 = scmp.ne.s32.totalorder %s620, %s634
      %p636 = scmp.eq.s32.totalorder %s86, 0
      %p637 = por %p635, %p636
      %s639 = sadd.s32 %s638, 1
      %p642 = scmp.eq.s32.totalorder %s80, 3
      %p643 = scmp.ne.s32.totalorder %s638, %s640
      %p644 = scmp.eq.s32.totalorder %s80, 0
      %p645 = por %p643, %p644
      %p646 = scmp.ne.s32.totalorder %s638, %s640
      %p647 = scmp.eq.s32.totalorder %s85, 3
      %p648 = por %p646, %p647
      %p649 = scmp.ne.s32.totalorder %s640, %s641
      %p650 = scmp.eq.s32.totalorder %s85, 0
      %p651 = por %p649, %p650
      %p652 = scmp.ne.s32.totalorder %s640, %s641
      %p653 = scmp.eq.s32.totalorder %s86, 3
      %p654 = por %p652, %p653
      %p656 = scmp.ne.s32.totalorder %s641, %s655
      %p657 = scmp.eq.s32.totalorder %s86, 0
      %p658 = por %p656, %p657
      %s660 = sadd.s32 %s659, 1
      %p663 = scmp.eq.s32.totalorder %s80, 3
      %p664 = scmp.ne.s32.totalorder %s659, %s661
      %p665 = scmp.eq.s32.totalorder %s80, 0
      %p666 = por %p664, %p665
      %p667 = scmp.ne.s32.totalorder %s659, %s661
      %p668 = scmp.eq.s32.totalorder %s85, 3
      %p669 = por %p667, %p668
      %p670 = scmp.ne.s32.totalorder %s661, %s662
      %p671 = scmp.eq.s32.totalorder %s85, 0
      %p672 = por %p670, %p671
      %p673 = scmp.ne.s32.totalorder %s661, %s662
      %p674 = scmp.eq.s32.totalorder %s86, 3
      %p675 = por %p673, %p674
      %p677 = scmp.ne.s32.totalorder %s662, %s676
      %p678 = scmp.eq.s32.totalorder %s86, 0
      %p679 = por %p677, %p678
      %s681 = sadd.s32 %s680, 1
      %p684 = scmp.eq.s32.totalorder %s80, 3
      %p685 = scmp.ne.s32.totalorder %s680, %s682
      %p686 = scmp.eq.s32.totalorder %s80, 0
      %p687 = por %p685, %p686
      %p688 = scmp.ne.s32.totalorder %s680, %s682
      %p689 = scmp.eq.s32.totalorder %s85, 3
      %p690 = por %p688, %p689
      %p691 = scmp.ne.s32.totalorder %s682, %s683
      %p692 = scmp.eq.s32.totalorder %s85, 0
      %p693 = por %p691, %p692
      %p694 = scmp.ne.s32.totalorder %s682, %s683
      %p695 = scmp.eq.s32.totalorder %s86, 3
      %p696 = por %p694, %p695
      %p698 = scmp.ne.s32.totalorder %s683, %s697
      %p699 = scmp.eq.s32.totalorder %s86, 0
      %p700 = por %p698, %p699
      %s702 = sadd.s32 %s701, 1
      %p705 = scmp.eq.s32.totalorder %s80, 3
      %p706 = scmp.ne.s32.totalorder %s701, %s703
      %p707 = scmp.eq.s32.totalorder %s80, 0
      %p708 = por %p706, %p707
      %p709 = scmp.ne.s32.totalorder %s701, %s703
      %p710 = scmp.eq.s32.totalorder %s85, 3
      %p711 = por %p709, %p710
      %p712 = scmp.ne.s32.totalorder %s703, %s704
      %p713 = scmp.eq.s32.totalorder %s85, 0
      %p714 = por %p712, %p713
      %p715 = scmp.ne.s32.totalorder %s703, %s704
      %p716 = scmp.eq.s32.totalorder %s86, 3
      %p717 = por %p715, %p716
      %p719 = scmp.ne.s32.totalorder %s704, %s718
      %p720 = scmp.eq.s32.totalorder %s86, 0
      %p721 = por %p719, %p720
      %s723 = sadd.s32 %s722, 1
      %p726 = scmp.eq.s32.totalorder %s80, 3
      %p727 = scmp.ne.s32.totalorder %s722, %s724
      %p728 = scmp.eq.s32.totalorder %s80, 0
      %p729 = por %p727, %p728
      %p730 = scmp.ne.s32.totalorder %s722, %s724
      %p731 = scmp.eq.s32.totalorder %s85, 3
      %p732 = por %p730, %p731
      %p733 = scmp.ne.s32.totalorder %s724, %s725
      %p734 = scmp.eq.s32.totalorder %s85, 0
      %p735 = por %p733, %p734
      %p736 = scmp.ne.s32.totalorder %s724, %s725
      %p737 = scmp.eq.s32.totalorder %s86, 3
      %p738 = por %p736, %p737
      %p740 = scmp.ne.s32.totalorder %s725, %s739
      %p741 = scmp.eq.s32.totalorder %s86, 0
      %p742 = por %p740, %p741
      %s744 = sadd.s32 %s743, 1
      %p747 = scmp.eq.s32.totalorder %s80, 3
      %p748 = scmp.ne.s32.totalorder %s743, %s745
      %p749 = scmp.eq.s32.totalorder %s80, 0
      %p750 = por %p748, %p749
      %p751 = scmp.ne.s32.totalorder %s743, %s745
      %p752 = scmp.eq.s32.totalorder %s85, 3
      %p753 = por %p751, %p752
      %p754 = scmp.ne.s32.totalorder %s745, %s746
      %p755 = scmp.eq.s32.totalorder %s85, 0
      %p756 = por %p754, %p755
      %p757 = scmp.ne.s32.totalorder %s745, %s746
      %p758 = scmp.eq.s32.totalorder %s86, 3
      %p759 = por %p757, %p758
      %p761 = scmp.ne.s32.totalorder %s746, %s760
      %p762 = scmp.eq.s32.totalorder %s86, 0
      %p763 = por %p761, %p762
      %s765 = sadd.s32 %s764, 1
      %p768 = scmp.eq.s32.totalorder %s80, 3
      %p769 = scmp.ne.s32.totalorder %s764, %s766
      %p770 = scmp.eq.s32.totalorder %s80, 0
      %p771 = por %p769, %p770
      %p772 = scmp.ne.s32.totalorder %s764, %s766
      %p773 = scmp.eq.s32.totalorder %s85, 3
      %p774 = por %p772, %p773
      %p775 = scmp.ne.s32.totalorder %s766, %s767
      %p776 = scmp.eq.s32.totalorder %s85, 0
      %p777 = por %p775, %p776
      %p778 = scmp.ne.s32.totalorder %s766, %s767
      %p779 = scmp.eq.s32.totalorder %s86, 3
      %p780 = por %p778, %p779
      %p782 = scmp.ne.s32.totalorder %s767, %s781
      %p783 = scmp.eq.s32.totalorder %s86, 0
      %p784 = por %p782, %p783
      %s786 = sadd.s32 %s785, 1
      %p789 = scmp.eq.s32.totalorder %s80, 3
      %p790 = scmp.ne.s32.totalorder %s785, %s787
      %p791 = scmp.eq.s32.totalorder %s80, 0
      %p792 = por %p790, %p791
      %p793 = scmp.ne.s32.totalorder %s785, %s787
      %p794 = scmp.eq.s32.totalorder %s85, 3
      %p795 = por %p793, %p794
      %p796 = scmp.ne.s32.totalorder %s787, %s788
      %p797 = scmp.eq.s32.totalorder %s85, 0
      %p798 = por %p796, %p797
      %p799 = scmp.ne.s32.totalorder %s787, %s788
      %p800 = scmp.eq.s32.totalorder %s86, 3
      %p801 = por %p799, %p800
      %p803 = scmp.ne.s32.totalorder %s788, %s802
      %p804 = scmp.eq.s32.totalorder %s86, 0
      %p805 = por %p803, %p804
      %s807 = sadd.s32 %s806, 1
      %p810 = scmp.eq.s32.totalorder %s80, 3
      %p811 = scmp.ne.s32.totalorder %s806, %s808
      %p812 = scmp.eq.s32.totalorder %s80, 0
      %p813 = por %p811, %p812
      %p814 = scmp.ne.s32.totalorder %s806, %s808
      %p815 = scmp.eq.s32.totalorder %s85, 3
      %p816 = por %p814, %p815
      %p817 = scmp.ne.s32.totalorder %s808, %s809
      %p818 = scmp.eq.s32.totalorder %s85, 0
      %p819 = por %p817, %p818
      %p820 = scmp.ne.s32.totalorder %s808, %s809
      %p821 = scmp.eq.s32.totalorder %s86, 3
      %p822 = por %p820, %p821
      %p824 = scmp.ne.s32.totalorder %s809, %s823
      %p825 = scmp.eq.s32.totalorder %s86, 0
      %p826 = por %p824, %p825
      %s827 = ssub.s32 %s80, %s87
      %p828 = scmp.eq.s32.totalorder %s827, 0
      %s830 = sadd.s32 %s829, 1
      %s831 = scalar_select %p828, %s829, %s830
      %p834 = pneg %p828
      %p835 = scmp.eq.s32.totalorder %s80, 3
      %p836 = por %p834, %p835
      %p837 = scmp.ne.s32.totalorder %s829, %s832
      %p838 = scmp.eq.s32.totalorder %s80, 0
      %p839 = por %p837, %p838
      %p840 = scmp.ne.s32.totalorder %s829, %s832
      %p841 = scmp.eq.s32.totalorder %s85, 3
      %p842 = por %p840, %p841
      %p843 = scmp.ne.s32.totalorder %s832, %s833
      %p844 = scmp.eq.s32.totalorder %s85, 0
      %p845 = por %p843, %p844
      %p846 = scmp.ne.s32.totalorder %s832, %s833
      %p847 = scmp.eq.s32.totalorder %s86, 3
      %p848 = por %p846, %p847
      %p850 = scmp.ne.s32.totalorder %s833, %s849
      %p851 = scmp.eq.s32.totalorder %s86, 0
      %p852 = por %p850, %p851
      %p853 = scmp.le.s32.totalorder 1, %s80
      %p854 = scmp.lt.s32.totalorder %s80, 5
      %p855 = pnand %p853, %p854
      %p856 = pneg %p855
      // Predicated region
      $region9: #{tpu_custom_call.1} parent=5 // pred_check
        _
      $region10: #{tpu_custom_call.1} parent=5 // pred_check_branch
        %858 = sbr.rel (%p855) target = $region12
      $region11: #{tpu_custom_call.1} parent=5 // pred_region
        %s859 = ssub.s32 %s80, 1
        // Predicated region
        $region13: #{tpu_custom_call.1} parent=11 // pred_check
          %p860 = pneg %p231
        $region14: #{tpu_custom_call.1} parent=11 // pred_check_branch
          %862 = sbr.rel (%p860) target = $region16
        $region15: #{tpu_custom_call.1} parent=11 // pred_region
          _
        $region16: #{tpu_custom_call.1} parent=11 // pred_fallthru
          _
        // Predicated region
        $region17: #{tpu_custom_call.1} parent=11 // pred_check
          %p863 = pneg %p252
        $region18: #{tpu_custom_call.1} parent=11 // pred_check_branch
          %865 = sbr.rel (%p863) target = $region20
        $region19: #{tpu_custom_call.1} parent=11 // pred_region
          _
        $region20: #{tpu_custom_call.1} parent=11 // pred_fallthru
          _
        // Predicated region
        $region21: #{tpu_custom_call.1} parent=11 // pred_check
          %p866 = pneg %p273
        $region22: #{tpu_custom_call.1} parent=11 // pred_check_branch
          %868 = sbr.rel (%p866) target = $region24
        $region23: #{tpu_custom_call.1} parent=11 // pred_region
          _
        $region24: #{tpu_custom_call.1} parent=11 // pred_fallthru
          _
        // Predicated region
        $region25: #{tpu_custom_call.1} parent=11 // pred_check
          %p869 = pneg %p294
        $region26: #{tpu_custom_call.1} parent=11 // pred_check_branch
          %871 = sbr.rel (%p869) target = $region28
        $region27: #{tpu_custom_call.1} parent=11 // pred_region
          _
        $region28: #{tpu_custom_call.1} parent=11 // pred_fallthru
          _
        // Predicated region
        $region29: #{tpu_custom_call.1} parent=11 // pred_check
          %p872 = pneg %p315
        $region30: #{tpu_custom_call.1} parent=11 // pred_check_branch
          %874 = sbr.rel (%p872) target = $region32
        $region31: #{tpu_custom_call.1} parent=11 // pred_region
          _
        $region32: #{tpu_custom_call.1} parent=11 // pred_fallthru
          _
        // Predicated region
        $region33: #{tpu_custom_call.1} parent=11 // pred_check
          %p875 = pneg %p336
        $region34: #{tpu_custom_call.1} parent=11 // pred_check_branch
          %877 = sbr.rel (%p875) target = $region36
        $region35: #{tpu_custom_call.1} parent=11 // pred_region
          _
        $region36: #{tpu_custom_call.1} parent=11 // pred_fallthru
          _
        // Predicated region
        $region37: #{tpu_custom_call.1} parent=11 // pred_check
          %p878 = pneg %p357
        $region38: #{tpu_custom_call.1} parent=11 // pred_check_branch
          %880 = sbr.rel (%p878) target = $region40
        $region39: #{tpu_custom_call.1} parent=11 // pred_region
          _
        $region40: #{tpu_custom_call.1} parent=11 // pred_fallthru
          _
        // Predicated region
        $region41: #{tpu_custom_call.1} parent=11 // pred_check
          %p881 = pneg %p378
        $region42: #{tpu_custom_call.1} parent=11 // pred_check_branch
          %883 = sbr.rel (%p881) target = $region44
        $region43: #{tpu_custom_call.1} parent=11 // pred_region
          _
        $region44: #{tpu_custom_call.1} parent=11 // pred_fallthru
          _
        // Predicated region
        $region45: #{tpu_custom_call.1} parent=11 // pred_check
          %p884 = pneg %p399
        $region46: #{tpu_custom_call.1} parent=11 // pred_check_branch
          %886 = sbr.rel (%p884) target = $region48
        $region47: #{tpu_custom_call.1} parent=11 // pred_region
          _
        $region48: #{tpu_custom_call.1} parent=11 // pred_fallthru
          _
        // Predicated region
        $region49: #{tpu_custom_call.1} parent=11 // pred_check
          %p887 = pneg %p420
        $region50: #{tpu_custom_call.1} parent=11 // pred_check_branch
          %889 = sbr.rel (%p887) target = $region52
        $region51: #{tpu_custom_call.1} parent=11 // pred_region
          _
        $region52: #{tpu_custom_call.1} parent=11 // pred_fallthru
          _
        // Predicated region
        $region53: #{tpu_custom_call.1} parent=11 // pred_check
          %p890 = pneg %p441
        $region54: #{tpu_custom_call.1} parent=11 // pred_check_branch
          %892 = sbr.rel (%p890) target = $region56
        $region55: #{tpu_custom_call.1} parent=11 // pred_region
          _
        $region56: #{tpu_custom_call.1} parent=11 // pred_fallthru
          _
        // Predicated region
        $region57: #{tpu_custom_call.1} parent=11 // pred_check
          %p893 = pneg %p462
        $region58: #{tpu_custom_call.1} parent=11 // pred_check_branch
          %895 = sbr.rel (%p893) target = $region60
        $region59: #{tpu_custom_call.1} parent=11 // pred_region
          _
        $region60: #{tpu_custom_call.1} parent=11 // pred_fallthru
          _
        // Predicated region
        $region61: #{tpu_custom_call.1} parent=11 // pred_check
          %p896 = pneg %p483
        $region62: #{tpu_custom_call.1} parent=11 // pred_check_branch
          %898 = sbr.rel (%p896) target = $region64
        $region63: #{tpu_custom_call.1} parent=11 // pred_region
          _
        $region64: #{tpu_custom_call.1} parent=11 // pred_fallthru
          _
        // Predicated region
        $region65: #{tpu_custom_call.1} parent=11 // pred_check
          %p899 = pneg %p504
        $region66: #{tpu_custom_call.1} parent=11 // pred_check_branch
          %901 = sbr.rel (%p899) target = $region68
        $region67: #{tpu_custom_call.1} parent=11 // pred_region
          _
        $region68: #{tpu_custom_call.1} parent=11 // pred_fallthru
          _
        // Predicated region
        $region69: #{tpu_custom_call.1} parent=11 // pred_check
          %p902 = pneg %p525
        $region70: #{tpu_custom_call.1} parent=11 // pred_check_branch
          %904 = sbr.rel (%p902) target = $region72
        $region71: #{tpu_custom_call.1} parent=11 // pred_region
          _
        $region72: #{tpu_custom_call.1} parent=11 // pred_fallthru
          _
        // Predicated region
        $region73: #{tpu_custom_call.1} parent=11 // pred_check
          %p905 = pneg %p546
        $region74: #{tpu_custom_call.1} parent=11 // pred_check_branch
          %907 = sbr.rel (%p905) target = $region76
        $region75: #{tpu_custom_call.1} parent=11 // pred_region
          _
        $region76: #{tpu_custom_call.1} parent=11 // pred_fallthru
          _
        // Predicated region
        $region77: #{tpu_custom_call.1} parent=11 // pred_check
          %p908 = pneg %p567
        $region78: #{tpu_custom_call.1} parent=11 // pred_check_branch
          %910 = sbr.rel (%p908) target = $region80
        $region79: #{tpu_custom_call.1} parent=11 // pred_region
          _
        $region80: #{tpu_custom_call.1} parent=11 // pred_fallthru
          _
        // Predicated region
        $region81: #{tpu_custom_call.1} parent=11 // pred_check
          %p911 = pneg %p588
        $region82: #{tpu_custom_call.1} parent=11 // pred_check_branch
          %913 = sbr.rel (%p911) target = $region84
        $region83: #{tpu_custom_call.1} parent=11 // pred_region
          _
        $region84: #{tpu_custom_call.1} parent=11 // pred_fallthru
          _
        // Predicated region
        $region85: #{tpu_custom_call.1} parent=11 // pred_check
          %p914 = pneg %p609
        $region86: #{tpu_custom_call.1} parent=11 // pred_check_branch
          %916 = sbr.rel (%p914) target = $region88
        $region87: #{tpu_custom_call.1} parent=11 // pred_region
          _
        $region88: #{tpu_custom_call.1} parent=11 // pred_fallthru
          _
        // Predicated region
        $region89: #{tpu_custom_call.1} parent=11 // pred_check
          %p917 = pneg %p630
        $region90: #{tpu_custom_call.1} parent=11 // pred_check_branch
          %919 = sbr.rel (%p917) target = $region92
        $region91: #{tpu_custom_call.1} parent=11 // pred_region
          _
        $region92: #{tpu_custom_call.1} parent=11 // pred_fallthru
          _
        // Predicated region
        $region93: #{tpu_custom_call.1} parent=11 // pred_check
          %p920 = pneg %p651
        $region94: #{tpu_custom_call.1} parent=11 // pred_check_branch
          %922 = sbr.rel (%p920) target = $region96
        $region95: #{tpu_custom_call.1} parent=11 // pred_region
          _
        $region96: #{tpu_custom_call.1} parent=11 // pred_fallthru
          _
        // Predicated region
        $region97: #{tpu_custom_call.1} parent=11 // pred_check
          %p923 = pneg %p672
        $region98: #{tpu_custom_call.1} parent=11 // pred_check_branch
          %925 = sbr.rel (%p923) target = $region100
        $region99: #{tpu_custom_call.1} parent=11 // pred_region
          _
        $region100: #{tpu_custom_call.1} parent=11 // pred_fallthru
          _
        // Predicated region
        $region101: #{tpu_custom_call.1} parent=11 // pred_check
          %p926 = pneg %p693
        $region102: #{tpu_custom_call.1} parent=11 // pred_check_branch
          %928 = sbr.rel (%p926) target = $region104
        $region103: #{tpu_custom_call.1} parent=11 // pred_region
          _
        $region104: #{tpu_custom_call.1} parent=11 // pred_fallthru
          _
        // Predicated region
        $region105: #{tpu_custom_call.1} parent=11 // pred_check
          %p929 = pneg %p714
        $region106: #{tpu_custom_call.1} parent=11 // pred_check_branch
          %931 = sbr.rel (%p929) target = $region108
        $region107: #{tpu_custom_call.1} parent=11 // pred_region
          _
        $region108: #{tpu_custom_call.1} parent=11 // pred_fallthru
          _
        // Predicated region
        $region109: #{tpu_custom_call.1} parent=11 // pred_check
          %p932 = pneg %p735
        $region110: #{tpu_custom_call.1} parent=11 // pred_check_branch
          %934 = sbr.rel (%p932) target = $region112
        $region111: #{tpu_custom_call.1} parent=11 // pred_region
          _
        $region112: #{tpu_custom_call.1} parent=11 // pred_fallthru
          _
        // Predicated region
        $region113: #{tpu_custom_call.1} parent=11 // pred_check
          %p935 = pneg %p756
        $region114: #{tpu_custom_call.1} parent=11 // pred_check_branch
          %937 = sbr.rel (%p935) target = $region116
        $region115: #{tpu_custom_call.1} parent=11 // pred_region
          _
        $region116: #{tpu_custom_call.1} parent=11 // pred_fallthru
          _
        // Predicated region
        $region117: #{tpu_custom_call.1} parent=11 // pred_check
          %p938 = pneg %p777
        $region118: #{tpu_custom_call.1} parent=11 // pred_check_branch
          %940 = sbr.rel (%p938) target = $region120
        $region119: #{tpu_custom_call.1} parent=11 // pred_region
          _
        $region120: #{tpu_custom_call.1} parent=11 // pred_fallthru
          _
        // Predicated region
        $region121: #{tpu_custom_call.1} parent=11 // pred_check
          %p941 = pneg %p798
        $region122: #{tpu_custom_call.1} parent=11 // pred_check_branch
          %943 = sbr.rel (%p941) target = $region124
        $region123: #{tpu_custom_call.1} parent=11 // pred_region
          _
        $region124: #{tpu_custom_call.1} parent=11 // pred_fallthru
          _
        // Predicated region
        $region125: #{tpu_custom_call.1} parent=11 // pred_check
          %p944 = pneg %p819
        $region126: #{tpu_custom_call.1} parent=11 // pred_check_branch
          %946 = sbr.rel (%p944) target = $region128
        $region127: #{tpu_custom_call.1} parent=11 // pred_region
          _
        $region128: #{tpu_custom_call.1} parent=11 // pred_fallthru
          _
      $region12: #{tpu_custom_call.1} parent=5 // pred_fallthru
        _
      %p947 = scmp.lt.s32.totalorder %s80, 4
      // Predicated region
      $region129: #{tpu_custom_call.1} parent=5 // pred_check
        %p948 = pneg %p947
      $region130: #{tpu_custom_call.1} parent=5 // pred_check_branch
        %950 = sbr.rel (%p948) target = $region132
      $region131: #{tpu_custom_call.1} parent=5 // pred_region
        // Predicated region
        $region133: #{tpu_custom_call.1} parent=131 // pred_check
          %p951 = pneg %p100
        $region134: #{tpu_custom_call.1} parent=131 // pred_check_branch
          %953 = sbr.rel (%p951) target = $region136
        $region135: #{tpu_custom_call.1} parent=131 // pred_region
          %s954 = smul.u32 16, %s80
          %p955 = scmp.lt.s32.totalorder %s954, 63
          %s956 = scalar_select %p955, %s954, 63
          %s957 = smul.addr %s956, 4
          %s958 = scalar_lea.vmem %s1, %s957
          %s959 = smul.u32 16, %s80
        $region136: #{tpu_custom_call.1} parent=131 // pred_fallthru
          _
        // Predicated region
        $region137: #{tpu_custom_call.1} parent=131 // pred_check
          %p960 = pneg %p126
        $region138: #{tpu_custom_call.1} parent=131 // pred_check_branch
          %962 = sbr.rel (%p960) target = $region140
        $region139: #{tpu_custom_call.1} parent=131 // pred_region
          %s963 = smul.u32 16, %s80
          %p964 = scmp.lt.s32.totalorder %s963, 63
          %s965 = scalar_select %p964, %s963, 63
          %s966 = smul.addr %s965, 4
          %s967 = scalar_lea.vmem %s3, %s966
          %s968 = smul.u32 16, %s80
        $region140: #{tpu_custom_call.1} parent=131 // pred_fallthru
          _
        // Predicated region
        $region141: #{tpu_custom_call.1} parent=131 // pred_check
          %p969 = pneg %p152
        $region142: #{tpu_custom_call.1} parent=131 // pred_check_branch
          %971 = sbr.rel (%p969) target = $region144
        $region143: #{tpu_custom_call.1} parent=131 // pred_region
          %s972 = smul.u32 16, %s80
          %p973 = scmp.lt.s32.totalorder %s972, 63
          %s974 = scalar_select %p973, %s972, 63
          %s975 = smul.addr %s974, 4
          %s976 = scalar_lea.vmem %s5, %s975
          %s977 = smul.u32 16, %s80
        $region144: #{tpu_custom_call.1} parent=131 // pred_fallthru
          _
        // Predicated region
        $region145: #{tpu_custom_call.1} parent=131 // pred_check
          %p978 = pneg %p178
        $region146: #{tpu_custom_call.1} parent=131 // pred_check_branch
          %980 = sbr.rel (%p978) target = $region148
        $region147: #{tpu_custom_call.1} parent=131 // pred_region
          %s981 = smul.u32 16, %s80
          %p982 = scmp.lt.s32.totalorder %s981, 63
          %s983 = scalar_select %p982, %s981, 63
          %s984 = smul.addr %s983, 4
          %s985 = scalar_lea.vmem %s7, %s984
          %s986 = smul.u32 16, %s80
        $region148: #{tpu_custom_call.1} parent=131 // pred_fallthru
          _
        // Predicated region
        $region149: #{tpu_custom_call.1} parent=131 // pred_check
          %p987 = pneg %p204
        $region150: #{tpu_custom_call.1} parent=131 // pred_check_branch
          %989 = sbr.rel (%p987) target = $region152
        $region151: #{tpu_custom_call.1} parent=131 // pred_region
          %s990 = smul.u32 16, %s80
          %p991 = scmp.lt.s32.totalorder %s990, 63
          %s992 = scalar_select %p991, %s990, 63
          %s993 = smul.addr %s992, 8
          %s994 = scalar_lea.vmem %s9, %s993
          %s995 = smul.u32 16, %s80
        $region152: #{tpu_custom_call.1} parent=131 // pred_fallthru
          _
      $region132: #{tpu_custom_call.1} parent=5 // pred_fallthru
        _
      %p996 = scmp.le.s32.totalorder 1, %s80
      %p997 = scmp.lt.s32.totalorder %s80, 5
      %p998 = pnand %p996, %p997
      %p999 = pneg %p998
      // Predicated region
      $region153: #{tpu_custom_call.1} parent=5 // pred_check
        _
      $region154: #{tpu_custom_call.1} parent=5 // pred_check_branch
        %1001 = sbr.rel (%p998) target = $region156
      $region155: #{tpu_custom_call.1} parent=5 // pred_region
        %s1002 = ssub.s32 %s80, 1
        %s1003 = smul.u32 16, %s85
        %p1004 = scmp.lt.s32.totalorder %s1003, 63
        %s1005 = scalar_select %p1004, %s1003, 63
        %s1006 = smul.addr %s1005, 4
        %s1007 = scalar_lea.vmem %s1, %s1006
        %p1008 = pneg %p106
        %p1009 = pneg %p103
        %s1010 = smul.u32 16, %s85
        %p1011 = scmp.lt.s32.totalorder %s1010, 63
        %s1012 = scalar_select %p1011, %s1010, 63
        %s1013 = smul.addr %s1012, 4
        %s1014 = scalar_lea.vmem %s3, %s1013
        %p1015 = pneg %p132
        %p1016 = pneg %p129
        %s1017 = smul.u32 16, %s85
        %p1018 = scmp.lt.s32.totalorder %s1017, 63
        %s1019 = scalar_select %p1018, %s1017, 63
        %s1020 = smul.addr %s1019, 4
        %s1021 = scalar_lea.vmem %s5, %s1020
        %p1022 = pneg %p158
        %p1023 = pneg %p155
        %s1024 = smul.u32 16, %s85
        %p1025 = scmp.lt.s32.totalorder %s1024, 63
        %s1026 = scalar_select %p1025, %s1024, 63
        %s1027 = smul.addr %s1026, 4
        %s1028 = scalar_lea.vmem %s7, %s1027
        %p1029 = pneg %p184
        %p1030 = pneg %p181
        %s1031 = smul.u32 16, %s85
        %p1032 = scmp.lt.s32.totalorder %s1031, 63
        %s1033 = scalar_select %p1032, %s1031, 63
        %s1034 = smul.addr %s1033, 8
        %s1035 = scalar_lea.vmem %s9, %s1034
        %p1036 = pneg %p210
        %p1037 = pneg %p207
        %p1038 = pneg %p231
        %p1039 = pneg %p228
        %p1040 = pneg %p252
        %p1041 = pneg %p249
        %p1042 = pneg %p273
        %p1043 = pneg %p270
        %p1044 = pneg %p294
        %p1045 = pneg %p291
        %p1046 = pneg %p315
        %p1047 = pneg %p312
        %p1048 = pneg %p336
        %p1049 = pneg %p333
        %p1050 = pneg %p357
        %p1051 = pneg %p354
        %p1052 = pneg %p378
        %p1053 = pneg %p375
        %p1054 = pneg %p399
        %p1055 = pneg %p396
        %p1056 = pneg %p420
        %p1057 = pneg %p417
        %p1058 = pneg %p441
        %p1059 = pneg %p438
        %p1060 = pneg %p462
        %p1061 = pneg %p459
        %p1062 = pneg %p483
        %p1063 = pneg %p480
        %p1064 = pneg %p504
        %p1065 = pneg %p501
        %p1066 = pneg %p525
        %p1067 = pneg %p522
        %p1068 = pneg %p546
        %p1069 = pneg %p543
        %p1070 = pneg %p567
        %p1071 = pneg %p564
        %p1072 = pneg %p588
        %p1073 = pneg %p585
        %p1074 = pneg %p609
        %p1075 = pneg %p606
        %p1076 = pneg %p630
        %p1077 = pneg %p627
        %p1078 = pneg %p651
        %p1079 = pneg %p648
        %p1080 = pneg %p672
        %p1081 = pneg %p669
        %p1082 = pneg %p693
        %p1083 = pneg %p690
        %p1084 = pneg %p714
        %p1085 = pneg %p711
        %p1086 = pneg %p735
        %p1087 = pneg %p732
        %p1088 = pneg %p756
        %p1089 = pneg %p753
        %p1090 = pneg %p777
        %p1091 = pneg %p774
        %p1092 = pneg %p798
        %p1093 = pneg %p795
        %p1094 = pneg %p819
        %p1095 = pneg %p816
        %p1096 = pneg %p845
        %p1097 = pneg %p842
        %s1098 = sand.u32 %s832, 1
        %s1099 = scalar_lea.sflag [#allocation5], %s1098
        %s1100 = sand.u32 %s832, 1
        %s1101 = scalar_lea.vmem [#allocation4], %s1100
        %s1102 = smul.u32 16, %s85
        %p1103 = scmp.lt.s32.totalorder %s1102, 63
        %s1104 = scalar_select %p1103, %s1102, 63
        %s1105 = smul.addr %s1104, 4
        %s1106 = scalar_lea.vmem %s1, %s1105
        %s1107 = smul.u32 16, %s85
        %s1108 = smul.u32 16, %s85
        %p1109 = scmp.lt.s32.totalorder %s1108, 63
        %s1110 = scalar_select %p1109, %s1108, 63
        %s1111 = smul.addr %s1110, 4
        %s1112 = scalar_lea.vmem %s3, %s1111
        %s1113 = smul.u32 16, %s85
        %s1114 = smul.u32 16, %s85
        %p1115 = scmp.lt.s32.totalorder %s1114, 63
        %s1116 = scalar_select %p1115, %s1114, 63
        %s1117 = smul.addr %s1116, 4
        %s1118 = scalar_lea.vmem %s5, %s1117
        %s1119 = smul.u32 16, %s85
        %s1120 = smul.u32 16, %s85
        %p1121 = scmp.lt.s32.totalorder %s1120, 63
        %s1122 = scalar_select %p1121, %s1120, 63
        %s1123 = smul.addr %s1122, 4
        %s1124 = scalar_lea.vmem %s7, %s1123
        %s1125 = smul.u32 16, %s85
        %s1126 = smul.u32 16, %s85
        %p1127 = scmp.lt.s32.totalorder %s1126, 63
        %s1128 = scalar_select %p1127, %s1126, 63
        %s1129 = smul.addr %s1128, 8
        %s1130 = scalar_lea.vmem %s9, %s1129
        %s1131 = smul.u32 16, %s85
        %v1133 = vld [vmem:[%s1118] sm:$0xf]
        %v1134 = vld [vmem:[%s1118 + $0x4] sm:$0xf]
        %v1135 = vld [vmem:[%s1118 + $0x8] sm:$0xf]
        %v1136 = vld [vmem:[%s1118 + $0xc] sm:$0xf]
        %v1137 = vld [vmem:[%s1118 + $0x10] sm:$0xf]
        %v1138 = vld [vmem:[%s1118 + $0x14] sm:$0xf]
        %v1139 = vld [vmem:[%s1118 + $0x18] sm:$0xf]
        %v1140 = vld [vmem:[%s1118 + $0x1c] sm:$0xf]
        %v1141 = vld [vmem:[%s1118 + $0x20] sm:$0xf]
        %v1142 = vld [vmem:[%s1118 + $0x24] sm:$0xf]
        %v1143 = vld [vmem:[%s1118 + $0x28] sm:$0xf]
        %v1144 = vld [vmem:[%s1118 + $0x2c] sm:$0xf]
        %v1145 = vld [vmem:[%s1118 + $0x30] sm:$0xf]
        %v1146 = vld [vmem:[%s1118 + $0x34] sm:$0xf]
        %v1147 = vld [vmem:[%s1118 + $0x38] sm:$0xf]
        %v1148 = vld [vmem:[%s1118 + $0x3c] sm:$0xf]
        %v1149 = vld [vmem:[%s11] sm:$0xf]
        %v1150 = vld [vmem:[%s13] sm:$0x1]
        %v1152 = vlaneseq
        %v1153 = vshrl.u32 %v1152, 7
        %v1154 = vsub.s32 0, %v1153
        %v1155 = vrot.slane %v1150, %v1154
        %v1173 = vunpack.c.l.b16 %v1133
        %v1174 = vunpack.c.l.b16 %v1134
        %v1175 = vunpack.c.l.b16 %v1135
        %v1176 = vunpack.c.l.b16 %v1136
        %v1177 = vunpack.c.l.b16 %v1137
        %v1178 = vunpack.c.l.b16 %v1138
        %v1179 = vunpack.c.l.b16 %v1139
        %v1180 = vunpack.c.l.b16 %v1140
        %v1181 = vunpack.c.l.b16 %v1141
        %v1182 = vunpack.c.l.b16 %v1142
        %v1183 = vunpack.c.l.b16 %v1143
        %v1184 = vunpack.c.l.b16 %v1144
        %v1185 = vunpack.c.l.b16 %v1145
        %v1186 = vunpack.c.l.b16 %v1146
        %v1187 = vunpack.c.l.b16 %v1147
        %v1188 = vunpack.c.l.b16 %v1148
        %v1189 = vpack.c.b16 %v1174, %v1173
        %v1190 = vpack.c.b16 %v1176, %v1175
        %v1191 = vpack.c.b16 %v1178, %v1177
        %v1192 = vpack.c.b16 %v1180, %v1179
        %v1193 = vpack.c.b16 %v1182, %v1181
        %v1194 = vpack.c.b16 %v1184, %v1183
        %v1195 = vpack.c.b16 %v1186, %v1185
        %v1196 = vpack.c.b16 %v1188, %v1187
        %vm1197 = vcmask 64512
        %v1199 = vsel %vm1197, %v1189, 0
        %v1202 = vsel %vm1197, %v1190, 0
        %v1205 = vsel %vm1197, %v1191, 0
        %v1208 = vsel %vm1197, %v1192, 0
        %v1211 = vsel %vm1197, %v1193, 0
        %v1214 = vsel %vm1197, %v1194, 0
        %v1217 = vsel %vm1197, %v1195, 0
        %v1220 = vsel %vm1197, %v1196, 0
        %vm1222 = vcmask 1043456
        %v1224 = vsel %vm1222, %v1149, 0
        %1226 = vmatprep.subr.bf16.mxu0 0
        %1227 = vmatpush1.bf16.msra.mxu0 0
        %1228 = vmatprep.subr.bf16.mxu0 0
        %1229 = vmatpush1.bf16.msra.mxu0 0
        %1230 = vmatprep.subr.bf16.mxu0 0
        %1231 = vmatpush1.bf16.msra.mxu0 0
        %1232 = vmatprep.subr.bf16.mxu0 0
        %1233 = vmatpush1.bf16.msra.mxu0 0
        %1234 = vmatprep.subr.bf16.mxu0 0
        %1235 = vmatpush1.bf16.msra.mxu0 0
        %1236 = vmatprep.subr.bf16.mxu0 0
        %1237 = vmatpush1.bf16.msra.mxu0 0
        %1238 = vmatprep.subr.bf16.mxu0 0
        %1239 = vmatpush1.bf16.msra.mxu0 0
        %1240 = vmatprep.subr.bf16.mxu0 0
        %1241 = vmatpush1.bf16.msra.mxu0 %v1224
        %1242 = vmatprep.subr.bf16.mxu0 0
        %1243 = vmatpush2.bf16.msra.mxu0 0
        %1244 = vmatprep.subr.bf16.mxu0 0
        %1245 = vmatpush2.bf16.msra.mxu0 0
        %1246 = vmatprep.subr.bf16.mxu0 0
        %1247 = vmatpush2.bf16.msra.mxu0 0
        %1248 = vmatprep.subr.bf16.mxu0 0
        %1249 = vmatpush2.bf16.msra.mxu0 0
        %1250 = vmatprep.subr.bf16.mxu0 0
        %1251 = vmatpush2.bf16.msra.mxu0 0
        %1252 = vmatprep.subr.bf16.mxu0 0
        %1253 = vmatpush2.bf16.msra.mxu0 0
        %1254 = vmatprep.subr.bf16.mxu0 0
        %1255 = vmatpush2.bf16.msra.mxu0 0
        %1256 = vmatprep.subr.bf16.mxu0 0
        %1257 = vmatpush2.bf16.msra.mxu0 0
        %1258 = vmatprep.mubr.bf16.mxu0 0
        %1259 = vmatmul.mubr.bf16.gmra.mxu0 %v1199
        %v1260 = vpop.f32.mrf.mxu0
        %v1261 = vadd.f32 %v1155, %v1260
        %v1262 = vpop.f32.mrf.mxu0
        %v1263 = vpop.f32.mrf.mxu0
        %v1264 = vadd.f32 %v1155, %v1263
        %v1265 = vpop.f32.mrf.mxu0
        %1266 = vmatprep.mubr.bf16.mxu0 0
        %1267 = vmatmul.mubr.bf16.gmra.mxu0 %v1202
        %v1268 = vpop.f32.mrf.mxu0
        %v1269 = vadd.f32 %v1155, %v1268
        %v1270 = vpop.f32.mrf.mxu0
        %v1271 = vpop.f32.mrf.mxu0
        %v1272 = vadd.f32 %v1155, %v1271
        %v1273 = vpop.f32.mrf.mxu0
        %1274 = vmatprep.mubr.bf16.mxu0 0
        %1275 = vmatmul.mubr.bf16.gmra.mxu0 %v1205
        %v1276 = vpop.f32.mrf.mxu0
        %v1277 = vadd.f32 %v1155, %v1276
        %v1278 = vpop.f32.mrf.mxu0
        %v1279 = vpop.f32.mrf.mxu0
        %v1280 = vadd.f32 %v1155, %v1279
        %v1281 = vpop.f32.mrf.mxu0
        %1282 = vmatprep.mubr.bf16.mxu0 0
        %1283 = vmatmul.mubr.bf16.gmra.mxu0 %v1208
        %v1284 = vpop.f32.mrf.mxu0
        %v1285 = vadd.f32 %v1155, %v1284
        %v1286 = vpop.f32.mrf.mxu0
        %v1287 = vpop.f32.mrf.mxu0
        %v1288 = vadd.f32 %v1155, %v1287
        %v1289 = vpop.f32.mrf.mxu0
        %1290 = vmatprep.mubr.bf16.mxu0 0
        %1291 = vmatmul.mubr.bf16.gmra.mxu0 %v1211
        %v1292 = vpop.f32.mrf.mxu0
        %v1293 = vadd.f32 %v1155, %v1292
        %v1294 = vpop.f32.mrf.mxu0
        %v1295 = vpop.f32.mrf.mxu0
        %v1296 = vadd.f32 %v1155, %v1295
        %v1297 = vpop.f32.mrf.mxu0
        %1298 = vmatprep.mubr.bf16.mxu0 0
        %1299 = vmatmul.mubr.bf16.gmra.mxu0 %v1214
        %v1300 = vpop.f32.mrf.mxu0
        %v1301 = vadd.f32 %v1155, %v1300
        %v1302 = vpop.f32.mrf.mxu0
        %v1303 = vpop.f32.mrf.mxu0
        %v1304 = vadd.f32 %v1155, %v1303
        %v1305 = vpop.f32.mrf.mxu0
        %1306 = vmatprep.mubr.bf16.mxu0 0
        %1307 = vmatmul.mubr.bf16.gmra.mxu0 %v1217
        %v1308 = vpop.f32.mrf.mxu0
        %v1309 = vadd.f32 %v1155, %v1308
        %v1310 = vpop.f32.mrf.mxu0
        %v1311 = vpop.f32.mrf.mxu0
        %v1312 = vadd.f32 %v1155, %v1311
        %v1313 = vpop.f32.mrf.mxu0
        %1314 = vmatprep.mubr.bf16.mxu0 0
        %1315 = vmatmul.mubr.bf16.gmra.mxu0 %v1220
        %v1316 = vpop.f32.mrf.mxu0
        %v1317 = vadd.f32 %v1155, %v1316
        %v1318 = vpop.f32.mrf.mxu0
        %v1319 = vpop.f32.mrf.mxu0
        %v1320 = vadd.f32 %v1155, %v1319
        %v1321 = vpop.f32.mrf.mxu0
        %1322 = vdwg.mxu0
        %v1323 = vld [vmem:[%s15] sm:$0x1]
        %v1324 = vld [vmem:[%s17] sm:$0x1]
        %vm1325 = vcmask 261120
        %v1326 = vsel %vm1325, %v1261, 0.0
        %1327 = vadd.xlane.f32.xlu0 %v1326
        %v1328 = vpop.xlane.xlu0 %1327
        %v1329 = vsel %vm1325, %v1264, 0.0
        %1330 = vadd.xlane.f32.xlu0 %v1329
        %v1331 = vpop.xlane.xlu0 %1330
        %v1332 = vsel %vm1325, %v1269, 0.0
        %1333 = vadd.xlane.f32.xlu0 %v1332
        %v1334 = vpop.xlane.xlu0 %1333
        %v1335 = vsel %vm1325, %v1272, 0.0
        %1336 = vadd.xlane.f32.xlu0 %v1335
        %v1337 = vpop.xlane.xlu0 %1336
        %v1338 = vsel %vm1325, %v1277, 0.0
        %1339 = vadd.xlane.f32.xlu0 %v1338
        %v1340 = vpop.xlane.xlu0 %1339
        %v1341 = vsel %vm1325, %v1280, 0.0
        %1342 = vadd.xlane.f32.xlu0 %v1341
        %v1343 = vpop.xlane.xlu0 %1342
        %v1344 = vsel %vm1325, %v1285, 0.0
        %1345 = vadd.xlane.f32.xlu0 %v1344
        %v1346 = vpop.xlane.xlu0 %1345
        %v1347 = vsel %vm1325, %v1288, 0.0
        %1348 = vadd.xlane.f32.xlu0 %v1347
        %v1349 = vpop.xlane.xlu0 %1348
        %v1350 = vsel %vm1325, %v1293, 0.0
        %1351 = vadd.xlane.f32.xlu0 %v1350
        %v1352 = vpop.xlane.xlu0 %1351
        %v1353 = vsel %vm1325, %v1296, 0.0
        %1354 = vadd.xlane.f32.xlu0 %v1353
        %v1355 = vpop.xlane.xlu0 %1354
        %v1356 = vsel %vm1325, %v1301, 0.0
        %1357 = vadd.xlane.f32.xlu0 %v1356
        %v1358 = vpop.xlane.xlu0 %1357
        %v1359 = vsel %vm1325, %v1304, 0.0
        %1360 = vadd.xlane.f32.xlu0 %v1359
        %v1361 = vpop.xlane.xlu0 %1360
        %v1362 = vsel %vm1325, %v1309, 0.0
        %1363 = vadd.xlane.f32.xlu0 %v1362
        %v1364 = vpop.xlane.xlu0 %1363
        %v1365 = vsel %vm1325, %v1312, 0.0
        %1366 = vadd.xlane.f32.xlu0 %v1365
        %v1367 = vpop.xlane.xlu0 %1366
        %v1368 = vsel %vm1325, %v1317, 0.0
        %1369 = vadd.xlane.f32.xlu0 %v1368
        %v1370 = vpop.xlane.xlu0 %1369
        %v1371 = vsel %vm1325, %v1320, 0.0
        %1372 = vadd.xlane.f32.xlu0 %v1371
        %v1373 = vpop.xlane.xlu0 %1372
        %v1374 = vrcp.pop 32.0
        %v1375 = vmul.f32 %v1328, %v1374
        %v1376 = vmul.f32 %v1331, %v1374
        %v1377 = vmul.f32 %v1334, %v1374
        %v1378 = vmul.f32 %v1337, %v1374
        %v1379 = vmul.f32 %v1340, %v1374
        %v1380 = vmul.f32 %v1343, %v1374
        %v1381 = vmul.f32 %v1346, %v1374
        %v1382 = vmul.f32 %v1349, %v1374
        %v1383 = vmul.f32 %v1352, %v1374
        %v1384 = vmul.f32 %v1355, %v1374
        %v1385 = vmul.f32 %v1358, %v1374
        %v1386 = vmul.f32 %v1361, %v1374
        %v1387 = vmul.f32 %v1364, %v1374
        %v1388 = vmul.f32 %v1367, %v1374
        %v1389 = vmul.f32 %v1370, %v1374
        %v1390 = vmul.f32 %v1373, %v1374
        %v1391 = vsub.f32 %v1261, %v1375
        %v1392 = vsub.f32 %v1264, %v1376
        %v1393 = vsub.f32 %v1269, %v1377
        %v1394 = vsub.f32 %v1272, %v1378
        %v1395 = vsub.f32 %v1277, %v1379
        %v1396 = vsub.f32 %v1280, %v1380
        %v1397 = vsub.f32 %v1285, %v1381
        %v1398 = vsub.f32 %v1288, %v1382
        %v1399 = vsub.f32 %v1293, %v1383
        %v1400 = vsub.f32 %v1296, %v1384
        %v1401 = vsub.f32 %v1301, %v1385
        %v1402 = vsub.f32 %v1304, %v1386
        %v1403 = vsub.f32 %v1309, %v1387
        %v1404 = vsub.f32 %v1312, %v1388
        %v1405 = vsub.f32 %v1317, %v1389
        %v1406 = vsub.f32 %v1320, %v1390
        %v1407 = vmul.f32 %v1391, %v1391
        %v1408 = vmul.f32 %v1392, %v1392
        %v1409 = vmul.f32 %v1393, %v1393
        %v1410 = vmul.f32 %v1394, %v1394
        %v1411 = vmul.f32 %v1395, %v1395
        %v1412 = vmul.f32 %v1396, %v1396
        %v1413 = vmul.f32 %v1397, %v1397
        %v1414 = vmul.f32 %v1398, %v1398
        %v1415 = vmul.f32 %v1399, %v1399
        %v1416 = vmul.f32 %v1400, %v1400
        %v1417 = vmul.f32 %v1401, %v1401
        %v1418 = vmul.f32 %v1402, %v1402
        %v1419 = vmul.f32 %v1403, %v1403
        %v1420 = vmul.f32 %v1404, %v1404
        %v1421 = vmul.f32 %v1405, %v1405
        %v1422 = vmul.f32 %v1406, %v1406
        %v1423 = vsel %vm1325, %v1407, 0.0
        %1424 = vadd.xlane.f32.xlu0 %v1423
        %v1425 = vpop.xlane.xlu0 %1424
        %v1426 = vsel %vm1325, %v1408, 0.0
        %1427 = vadd.xlane.f32.xlu0 %v1426
        %v1428 = vpop.xlane.xlu0 %1427
        %v1429 = vsel %vm1325, %v1409, 0.0
        %1430 = vadd.xlane.f32.xlu0 %v1429
        %v1431 = vpop.xlane.xlu0 %1430
        %v1432 = vsel %vm1325, %v1410, 0.0
        %1433 = vadd.xlane.f32.xlu0 %v1432
        %v1434 = vpop.xlane.xlu0 %1433
        %v1435 = vsel %vm1325, %v1411, 0.0
        %1436 = vadd.xlane.f32.xlu0 %v1435
        %v1437 = vpop.xlane.xlu0 %1436
        %v1438 = vsel %vm1325, %v1412, 0.0
        %1439 = vadd.xlane.f32.xlu0 %v1438
        %v1440 = vpop.xlane.xlu0 %1439
        %v1441 = vsel %vm1325, %v1413, 0.0
        %1442 = vadd.xlane.f32.xlu0 %v1441
        %v1443 = vpop.xlane.xlu0 %1442
        %v1444 = vsel %vm1325, %v1414, 0.0
        %1445 = vadd.xlane.f32.xlu0 %v1444
        %v1446 = vpop.xlane.xlu0 %1445
        %v1447 = vsel %vm1325, %v1415, 0.0
        %1448 = vadd.xlane.f32.xlu0 %v1447
        %v1449 = vpop.xlane.xlu0 %1448
        %v1450 = vsel %vm1325, %v1416, 0.0
        %1451 = vadd.xlane.f32.xlu0 %v1450
        %v1452 = vpop.xlane.xlu0 %1451
        %v1453 = vsel %vm1325, %v1417, 0.0
        %1454 = vadd.xlane.f32.xlu0 %v1453
        %v1455 = vpop.xlane.xlu0 %1454
        %v1456 = vsel %vm1325, %v1418, 0.0
        %1457 = vadd.xlane.f32.xlu0 %v1456
        %v1458 = vpop.xlane.xlu0 %1457
        %v1459 = vsel %vm1325, %v1419, 0.0
        %1460 = vadd.xlane.f32.xlu0 %v1459
        %v1461 = vpop.xlane.xlu0 %1460
        %v1462 = vsel %vm1325, %v1420, 0.0
        %1463 = vadd.xlane.f32.xlu0 %v1462
        %v1464 = vpop.xlane.xlu0 %1463
        %v1465 = vsel %vm1325, %v1421, 0.0
        %1466 = vadd.xlane.f32.xlu0 %v1465
        %v1467 = vpop.xlane.xlu0 %1466
        %v1468 = vsel %vm1325, %v1422, 0.0
        %1469 = vadd.xlane.f32.xlu0 %v1468
        %v1470 = vpop.xlane.xlu0 %1469
        %v1471 = vmul.f32 %v1425, %v1374
        %v1472 = vmul.f32 %v1428, %v1374
        %v1473 = vmul.f32 %v1431, %v1374
        %v1474 = vmul.f32 %v1434, %v1374
        %v1475 = vmul.f32 %v1437, %v1374
        %v1476 = vmul.f32 %v1440, %v1374
        %v1477 = vmul.f32 %v1443, %v1374
        %v1478 = vmul.f32 %v1446, %v1374
        %v1479 = vmul.f32 %v1449, %v1374
        %v1480 = vmul.f32 %v1452, %v1374
        %v1481 = vmul.f32 %v1455, %v1374
        %v1482 = vmul.f32 %v1458, %v1374
        %v1483 = vmul.f32 %v1461, %v1374
        %v1484 = vmul.f32 %v1464, %v1374
        %v1485 = vmul.f32 %v1467, %v1374
        %v1486 = vmul.f32 %v1470, %v1374
        %v1487 = vadd.f32 %v1471, 1e-05
        %v1488 = vadd.f32 %v1472, 1e-05
        %v1489 = vadd.f32 %v1473, 1e-05
        %v1490 = vadd.f32 %v1474, 1e-05
        %v1491 = vadd.f32 %v1475, 1e-05
        %v1492 = vadd.f32 %v1476, 1e-05
        %v1493 = vadd.f32 %v1477, 1e-05
        %v1494 = vadd.f32 %v1478, 1e-05
        %v1495 = vadd.f32 %v1479, 1e-05
        %v1496 = vadd.f32 %v1480, 1e-05
        %v1497 = vadd.f32 %v1481, 1e-05
        %v1498 = vadd.f32 %v1482, 1e-05
        %v1499 = vadd.f32 %v1483, 1e-05
        %v1500 = vadd.f32 %v1484, 1e-05
        %v1501 = vadd.f32 %v1485, 1e-05
        %v1502 = vadd.f32 %v1486, 1e-05
        %v1503 = vrsqrt.pop %v1487
        %v1504 = vrsqrt.pop %v1488
        %v1505 = vrsqrt.pop %v1489
        %v1506 = vrsqrt.pop %v1490
        %v1507 = vrsqrt.pop %v1491
        %v1508 = vrsqrt.pop %v1492
        %v1509 = vrsqrt.pop %v1493
        %v1510 = vrsqrt.pop %v1494
        %v1511 = vrsqrt.pop %v1495
        %v1512 = vrsqrt.pop %v1496
        %v1513 = vrsqrt.pop %v1497
        %v1514 = vrsqrt.pop %v1498
        %v1515 = vrsqrt.pop %v1499
        %v1516 = vrsqrt.pop %v1500
        %v1517 = vrsqrt.pop %v1501
        %v1518 = vrsqrt.pop %v1502
        %v1519 = vmul.f32 %v1391, %v1503
        %v1520 = vmul.f32 %v1392, %v1504
        %v1521 = vmul.f32 %v1393, %v1505
        %v1522 = vmul.f32 %v1394, %v1506
        %v1523 = vmul.f32 %v1395, %v1507
        %v1524 = vmul.f32 %v1396, %v1508
        %v1525 = vmul.f32 %v1397, %v1509
        %v1526 = vmul.f32 %v1398, %v1510
        %v1527 = vmul.f32 %v1399, %v1511
        %v1528 = vmul.f32 %v1400, %v1512
        %v1529 = vmul.f32 %v1401, %v1513
        %v1530 = vmul.f32 %v1402, %v1514
        %v1531 = vmul.f32 %v1403, %v1515
        %v1532 = vmul.f32 %v1404, %v1516
        %v1533 = vmul.f32 %v1405, %v1517
        %v1534 = vmul.f32 %v1406, %v1518
        %v1536 = vlaneseq
        %v1537 = vshrl.u32 %v1536, 7
        %v1538 = vsub.s32 0, %v1537
        %v1539 = vrot.slane %v1323, %v1538
        %v1541 = vmul.f32 %v1519, %v1539
        %v1542 = vmul.f32 %v1520, %v1539
        %v1543 = vmul.f32 %v1521, %v1539
        %v1544 = vmul.f32 %v1522, %v1539
        %v1545 = vmul.f32 %v1523, %v1539
        %v1546 = vmul.f32 %v1524, %v1539
        %v1547 = vmul.f32 %v1525, %v1539
        %v1548 = vmul.f32 %v1526, %v1539
        %v1549 = vmul.f32 %v1527, %v1539
        %v1550 = vmul.f32 %v1528, %v1539
        %v1551 = vmul.f32 %v1529, %v1539
        %v1552 = vmul.f32 %v1530, %v1539
        %v1553 = vmul.f32 %v1531, %v1539
        %v1554 = vmul.f32 %v1532, %v1539
        %v1555 = vmul.f32 %v1533, %v1539
        %v1556 = vmul.f32 %v1534, %v1539
        %v1558 = vlaneseq
        %v1559 = vshrl.u32 %v1558, 7
        %v1560 = vsub.s32 0, %v1559
        %v1561 = vrot.slane %v1324, %v1560
        %v1563 = vadd.f32 %v1541, %v1561
        %v1564 = vadd.f32 %v1542, %v1561
        %v1565 = vadd.f32 %v1543, %v1561
        %v1566 = vadd.f32 %v1544, %v1561
        %v1567 = vadd.f32 %v1545, %v1561
        %v1568 = vadd.f32 %v1546, %v1561
        %v1569 = vadd.f32 %v1547, %v1561
        %v1570 = vadd.f32 %v1548, %v1561
        %v1571 = vadd.f32 %v1549, %v1561
        %v1572 = vadd.f32 %v1550, %v1561
        %v1573 = vadd.f32 %v1551, %v1561
        %v1574 = vadd.f32 %v1552, %v1561
        %v1575 = vadd.f32 %v1553, %v1561
        %v1576 = vadd.f32 %v1554, %v1561
        %v1577 = vadd.f32 %v1555, %v1561
        %v1578 = vadd.f32 %v1556, %v1561
        %v1579 = vxor.u32 %v1563, 2147483648
        %v1580 = vxor.u32 %v1564, 2147483648
        %v1581 = vxor.u32 %v1565, 2147483648
        %v1582 = vxor.u32 %v1566, 2147483648
        %v1583 = vxor.u32 %v1567, 2147483648
        %v1584 = vxor.u32 %v1568, 2147483648
        %v1585 = vxor.u32 %v1569, 2147483648
        %v1586 = vxor.u32 %v1570, 2147483648
        %v1587 = vxor.u32 %v1571, 2147483648
        %v1588 = vxor.u32 %v1572, 2147483648
        %v1589 = vxor.u32 %v1573, 2147483648
        %v1590 = vxor.u32 %v1574, 2147483648
        %v1591 = vxor.u32 %v1575, 2147483648
        %v1592 = vxor.u32 %v1576, 2147483648
        %v1593 = vxor.u32 %v1577, 2147483648
        %v1594 = vxor.u32 %v1578, 2147483648
        %v1595 = vmul.f32 %v1579, 1.442695
        %v1596 = vpow.pop %v1595
        %v1597 = vmul.f32 %v1580, 1.442695
        %v1598 = vpow.pop %v1597
        %v1599 = vmul.f32 %v1581, 1.442695
        %v1600 = vpow.pop %v1599
        %v1601 = vmul.f32 %v1582, 1.442695
        %v1602 = vpow.pop %v1601
        %v1603 = vmul.f32 %v1583, 1.442695
        %v1604 = vpow.pop %v1603
        %v1605 = vmul.f32 %v1584, 1.442695
        %v1606 = vpow.pop %v1605
        %v1607 = vmul.f32 %v1585, 1.442695
        %v1608 = vpow.pop %v1607
        %v1609 = vmul.f32 %v1586, 1.442695
        %v1610 = vpow.pop %v1609
        %v1611 = vmul.f32 %v1587, 1.442695
        %v1612 = vpow.pop %v1611
        %v1613 = vmul.f32 %v1588, 1.442695
        %v1614 = vpow.pop %v1613
        %v1615 = vmul.f32 %v1589, 1.442695
        %v1616 = vpow.pop %v1615
        %v1617 = vmul.f32 %v1590, 1.442695
        %v1618 = vpow.pop %v1617
        %v1619 = vmul.f32 %v1591, 1.442695
        %v1620 = vpow.pop %v1619
        %v1621 = vmul.f32 %v1592, 1.442695
        %v1622 = vpow.pop %v1621
        %v1623 = vmul.f32 %v1593, 1.442695
        %v1624 = vpow.pop %v1623
        %v1625 = vmul.f32 %v1594, 1.442695
        %v1626 = vpow.pop %v1625
        %v1627 = vadd.f32 %v1596, 1.0
        %v1628 = vadd.f32 %v1598, 1.0
        %v1629 = vadd.f32 %v1600, 1.0
        %v1630 = vadd.f32 %v1602, 1.0
        %v1631 = vadd.f32 %v1604, 1.0
        %v1632 = vadd.f32 %v1606, 1.0
        %v1633 = vadd.f32 %v1608, 1.0
        %v1634 = vadd.f32 %v1610, 1.0
        %v1635 = vadd.f32 %v1612, 1.0
        %v1636 = vadd.f32 %v1614, 1.0
        %v1637 = vadd.f32 %v1616, 1.0
        %v1638 = vadd.f32 %v1618, 1.0
        %v1639 = vadd.f32 %v1620, 1.0
        %v1640 = vadd.f32 %v1622, 1.0
        %v1641 = vadd.f32 %v1624, 1.0
        %v1642 = vadd.f32 %v1626, 1.0
        %v1643 = vrcp.pop %v1627
        %v1644 = vmul.f32 1.0, %v1643
        %v1645 = vrcp.pop %v1628
        %v1646 = vmul.f32 1.0, %v1645
        %v1647 = vrcp.pop %v1629
        %v1648 = vmul.f32 1.0, %v1647
        %v1649 = vrcp.pop %v1630
        %v1650 = vmul.f32 1.0, %v1649
        %v1651 = vrcp.pop %v1631
        %v1652 = vmul.f32 1.0, %v1651
        %v1653 = vrcp.pop %v1632
        %v1654 = vmul.f32 1.0, %v1653
        %v1655 = vrcp.pop %v1633
        %v1656 = vmul.f32 1.0, %v1655
        %v1657 = vrcp.pop %v1634
        %v1658 = vmul.f32 1.0, %v1657
        %v1659 = vrcp.pop %v1635
        %v1660 = vmul.f32 1.0, %v1659
        %v1661 = vrcp.pop %v1636
        %v1662 = vmul.f32 1.0, %v1661
        %v1663 = vrcp.pop %v1637
        %v1664 = vmul.f32 1.0, %v1663
        %v1665 = vrcp.pop %v1638
        %v1666 = vmul.f32 1.0, %v1665
        %v1667 = vrcp.pop %v1639
        %v1668 = vmul.f32 1.0, %v1667
        %v1669 = vrcp.pop %v1640
        %v1670 = vmul.f32 1.0, %v1669
        %v1671 = vrcp.pop %v1641
        %v1672 = vmul.f32 1.0, %v1671
        %v1673 = vrcp.pop %v1642
        %v1674 = vmul.f32 1.0, %v1673
        %v1675 = vmul.f32 %v1563, %v1644
        %v1676 = vmul.f32 %v1564, %v1646
        %v1677 = vmul.f32 %v1565, %v1648
        %v1678 = vmul.f32 %v1566, %v1650
        %v1679 = vmul.f32 %v1567, %v1652
        %v1680 = vmul.f32 %v1568, %v1654
        %v1681 = vmul.f32 %v1569, %v1656
        %v1682 = vmul.f32 %v1570, %v1658
        %v1683 = vmul.f32 %v1571, %v1660
        %v1684 = vmul.f32 %v1572, %v1662
        %v1685 = vmul.f32 %v1573, %v1664
        %v1686 = vmul.f32 %v1574, %v1666
        %v1687 = vmul.f32 %v1575, %v1668
        %v1688 = vmul.f32 %v1576, %v1670
        %v1689 = vmul.f32 %v1577, %v1672
        %v1690 = vmul.f32 %v1578, %v1674
        %v1691 = vpack.c.bf16 %v1676, %v1675
        %v1692 = vpack.c.bf16 %v1678, %v1677
        %v1693 = vpack.c.bf16 %v1680, %v1679
        %v1694 = vpack.c.bf16 %v1682, %v1681
        %v1695 = vpack.c.bf16 %v1684, %v1683
        %v1696 = vpack.c.bf16 %v1686, %v1685
        %v1697 = vpack.c.bf16 %v1688, %v1687
        %v1698 = vpack.c.bf16 %v1690, %v1689
        %v1699 = vld [vmem:[%s19] sm:$0xf]
        %v1700 = vld [vmem:[%s19 + $0x4] sm:$0xf]
        %v1701 = vld [vmem:[%s19 + $0x8] sm:$0xf]
        %v1702 = vld [vmem:[%s19 + $0xc] sm:$0xf]
        %v1703 = vld [vmem:[%s21] sm:$0x1]
        %v1705 = vlaneseq
        %v1706 = vshrl.u32 %v1705, 7
        %v1707 = vsub.s32 0, %v1706
        %v1708 = vrot.slane %v1703, %v1707
        %v1714 = vunpack.c.l.b16 %v1699
        %v1715 = vunpack.c.l.b16 %v1700
        %v1716 = vunpack.c.l.b16 %v1701
        %v1717 = vunpack.c.l.b16 %v1702
        %v1718 = vpack.c.b16 %v1715, %v1714
        %v1719 = vpack.c.b16 %v1717, %v1716
        %v1723 = vsel %vm1325, %v1691, 0
        %v1726 = vsel %vm1325, %v1692, 0
        %v1729 = vsel %vm1325, %v1693, 0
        %v1732 = vsel %vm1325, %v1694, 0
        %v1735 = vsel %vm1325, %v1695, 0
        %v1738 = vsel %vm1325, %v1696, 0
        %v1741 = vsel %vm1325, %v1697, 0
        %v1744 = vsel %vm1325, %v1698, 0
        %1746 = vmatprep.subr.bf16.mxu0 0
        %1747 = vmatpush1.bf16.msra.mxu0 0
        %1748 = vmatprep.subr.bf16.mxu0 0
        %1749 = vmatpush1.bf16.msra.mxu0 0
        %1750 = vmatprep.subr.bf16.mxu0 0
        %1751 = vmatpush1.bf16.msra.mxu0 0
        %1752 = vmatprep.subr.bf16.mxu0 0
        %1753 = vmatpush1.bf16.msra.mxu0 0
        %1754 = vmatprep.subr.bf16.mxu0 0
        %1755 = vmatpush1.bf16.msra.mxu0 0
        %1756 = vmatprep.subr.bf16.mxu0 0
        %1757 = vmatpush1.bf16.msra.mxu0 0
        %1758 = vmatprep.subr.bf16.mxu0 0
        %1759 = vmatpush1.bf16.msra.mxu0 %v1719
        %1760 = vmatprep.subr.bf16.mxu0 0
        %1761 = vmatpush1.bf16.msra.mxu0 %v1718
        %1762 = vmatprep.subr.bf16.mxu0 0
        %1763 = vmatpush2.bf16.msra.mxu0 0
        %1764 = vmatprep.subr.bf16.mxu0 0
        %1765 = vmatpush2.bf16.msra.mxu0 0
        %1766 = vmatprep.subr.bf16.mxu0 0
        %1767 = vmatpush2.bf16.msra.mxu0 0
        %1768 = vmatprep.subr.bf16.mxu0 0
        %1769 = vmatpush2.bf16.msra.mxu0 0
        %1770 = vmatprep.subr.bf16.mxu0 0
        %1771 = vmatpush2.bf16.msra.mxu0 0
        %1772 = vmatprep.subr.bf16.mxu0 0
        %1773 = vmatpush2.bf16.msra.mxu0 0
        %1774 = vmatprep.subr.bf16.mxu0 0
        %1775 = vmatpush2.bf16.msra.mxu0 0
        %1776 = vmatprep.subr.bf16.mxu0 0
        %1777 = vmatpush2.bf16.msra.mxu0 0
        %1778 = vmatprep.mubr.bf16.mxu0 0
        %1779 = vmatmul.mubr.bf16.gmra.mxu0 %v1723
        %v1780 = vpop.f32.mrf.mxu0
        %v1781 = vadd.f32 %v1708, %v1780
        %v1782 = vpop.f32.mrf.mxu0
        %v1783 = vpop.f32.mrf.mxu0
        %v1784 = vadd.f32 %v1708, %v1783
        %v1785 = vpop.f32.mrf.mxu0
        %1786 = vmatprep.mubr.bf16.mxu0 0
        %1787 = vmatmul.mubr.bf16.gmra.mxu0 %v1726
        %v1788 = vpop.f32.mrf.mxu0
        %v1789 = vadd.f32 %v1708, %v1788
        %v1790 = vpop.f32.mrf.mxu0
        %v1791 = vpop.f32.mrf.mxu0
        %v1792 = vadd.f32 %v1708, %v1791
        %v1793 = vpop.f32.mrf.mxu0
        %1794 = vmatprep.mubr.bf16.mxu0 0
        %1795 = vmatmul.mubr.bf16.gmra.mxu0 %v1729
        %v1796 = vpop.f32.mrf.mxu0
        %v1797 = vadd.f32 %v1708, %v1796
        %v1798 = vpop.f32.mrf.mxu0
        %v1799 = vpop.f32.mrf.mxu0
        %v1800 = vadd.f32 %v1708, %v1799
        %v1801 = vpop.f32.mrf.mxu0
        %1802 = vmatprep.mubr.bf16.mxu0 0
        %1803 = vmatmul.mubr.bf16.gmra.mxu0 %v1732
        %v1804 = vpop.f32.mrf.mxu0
        %v1805 = vadd.f32 %v1708, %v1804
        %v1806 = vpop.f32.mrf.mxu0
        %v1807 = vpop.f32.mrf.mxu0
        %v1808 = vadd.f32 %v1708, %v1807
        %v1809 = vpop.f32.mrf.mxu0
        %1810 = vmatprep.mubr.bf16.mxu0 0
        %1811 = vmatmul.mubr.bf16.gmra.mxu0 %v1735
        %v1812 = vpop.f32.mrf.mxu0
        %v1813 = vadd.f32 %v1708, %v1812
        %v1814 = vpop.f32.mrf.mxu0
        %v1815 = vpop.f32.mrf.mxu0
        %v1816 = vadd.f32 %v1708, %v1815
        %v1817 = vpop.f32.mrf.mxu0
        %1818 = vmatprep.mubr.bf16.mxu0 0
        %1819 = vmatmul.mubr.bf16.gmra.mxu0 %v1738
        %v1820 = vpop.f32.mrf.mxu0
        %v1821 = vadd.f32 %v1708, %v1820
        %v1822 = vpop.f32.mrf.mxu0
        %v1823 = vpop.f32.mrf.mxu0
        %v1824 = vadd.f32 %v1708, %v1823
        %v1825 = vpop.f32.mrf.mxu0
        %1826 = vmatprep.mubr.bf16.mxu0 0
        %1827 = vmatmul.mubr.bf16.gmra.mxu0 %v1741
        %v1828 = vpop.f32.mrf.mxu0
        %v1829 = vadd.f32 %v1708, %v1828
        %v1830 = vpop.f32.mrf.mxu0
        %v1831 = vpop.f32.mrf.mxu0
        %v1832 = vadd.f32 %v1708, %v1831
        %v1833 = vpop.f32.mrf.mxu0
        %1834 = vmatprep.mubr.bf16.mxu0 0
        %1835 = vmatmul.mubr.bf16.gmra.mxu0 %v1744
        %v1836 = vpop.f32.mrf.mxu0
        %v1837 = vadd.f32 %v1708, %v1836
        %v1838 = vpop.f32.mrf.mxu0
        %v1839 = vpop.f32.mrf.mxu0
        %v1840 = vadd.f32 %v1708, %v1839
        %v1841 = vpop.f32.mrf.mxu0
        %1842 = vdwg.mxu0
        %v1843 = vld [vmem:[%s23] sm:$0x1]
        %v1844 = vld [vmem:[%s25] sm:$0x1]
        %v1845 = vsel %vm1325, %v1781, 0.0
        %1846 = vadd.xlane.f32.xlu0 %v1845
        %v1847 = vpop.xlane.xlu0 %1846
        %v1848 = vsel %vm1325, %v1784, 0.0
        %1849 = vadd.xlane.f32.xlu0 %v1848
        %v1850 = vpop.xlane.xlu0 %1849
        %v1851 = vsel %vm1325, %v1789, 0.0
        %1852 = vadd.xlane.f32.xlu0 %v1851
        %v1853 = vpop.xlane.xlu0 %1852
        %v1854 = vsel %vm1325, %v1792, 0.0
        %1855 = vadd.xlane.f32.xlu0 %v1854
        %v1856 = vpop.xlane.xlu0 %1855
        %v1857 = vsel %vm1325, %v1797, 0.0
        %1858 = vadd.xlane.f32.xlu0 %v1857
        %v1859 = vpop.xlane.xlu0 %1858
        %v1860 = vsel %vm1325, %v1800, 0.0
        %1861 = vadd.xlane.f32.xlu0 %v1860
        %v1862 = vpop.xlane.xlu0 %1861
        %v1863 = vsel %vm1325, %v1805, 0.0
        %1864 = vadd.xlane.f32.xlu0 %v1863
        %v1865 = vpop.xlane.xlu0 %1864
        %v1866 = vsel %vm1325, %v1808, 0.0
        %1867 = vadd.xlane.f32.xlu0 %v1866
        %v1868 = vpop.xlane.xlu0 %1867
        %v1869 = vsel %vm1325, %v1813, 0.0
        %1870 = vadd.xlane.f32.xlu0 %v1869
        %v1871 = vpop.xlane.xlu0 %1870
        %v1872 = vsel %vm1325, %v1816, 0.0
        %1873 = vadd.xlane.f32.xlu0 %v1872
        %v1874 = vpop.xlane.xlu0 %1873
        %v1875 = vsel %vm1325, %v1821, 0.0
        %1876 = vadd.xlane.f32.xlu0 %v1875
        %v1877 = vpop.xlane.xlu0 %1876
        %v1878 = vsel %vm1325, %v1824, 0.0
        %1879 = vadd.xlane.f32.xlu0 %v1878
        %v1880 = vpop.xlane.xlu0 %1879
        %v1881 = vsel %vm1325, %v1829, 0.0
        %1882 = vadd.xlane.f32.xlu0 %v1881
        %v1883 = vpop.xlane.xlu0 %1882
        %v1884 = vsel %vm1325, %v1832, 0.0
        %1885 = vadd.xlane.f32.xlu0 %v1884
        %v1886 = vpop.xlane.xlu0 %1885
        %v1887 = vsel %vm1325, %v1837, 0.0
        %1888 = vadd.xlane.f32.xlu0 %v1887
        %v1889 = vpop.xlane.xlu0 %1888
        %v1890 = vsel %vm1325, %v1840, 0.0
        %1891 = vadd.xlane.f32.xlu0 %v1890
        %v1892 = vpop.xlane.xlu0 %1891
        %v1893 = vmul.f32 %v1847, %v1374
        %v1894 = vmul.f32 %v1850, %v1374
        %v1895 = vmul.f32 %v1853, %v1374
        %v1896 = vmul.f32 %v1856, %v1374
        %v1897 = vmul.f32 %v1859, %v1374
        %v1898 = vmul.f32 %v1862, %v1374
        %v1899 = vmul.f32 %v1865, %v1374
        %v1900 = vmul.f32 %v1868, %v1374
        %v1901 = vmul.f32 %v1871, %v1374
        %v1902 = vmul.f32 %v1874, %v1374
        %v1903 = vmul.f32 %v1877, %v1374
        %v1904 = vmul.f32 %v1880, %v1374
        %v1905 = vmul.f32 %v1883, %v1374
        %v1906 = vmul.f32 %v1886, %v1374
        %v1907 = vmul.f32 %v1889, %v1374
        %v1908 = vmul.f32 %v1892, %v1374
        %v1909 = vsub.f32 %v1781, %v1893
        %v1910 = vsub.f32 %v1784, %v1894
        %v1911 = vsub.f32 %v1789, %v1895
        %v1912 = vsub.f32 %v1792, %v1896
        %v1913 = vsub.f32 %v1797, %v1897
        %v1914 = vsub.f32 %v1800, %v1898
        %v1915 = vsub.f32 %v1805, %v1899
        %v1916 = vsub.f32 %v1808, %v1900
        %v1917 = vsub.f32 %v1813, %v1901
        %v1918 = vsub.f32 %v1816, %v1902
        %v1919 = vsub.f32 %v1821, %v1903
        %v1920 = vsub.f32 %v1824, %v1904
        %v1921 = vsub.f32 %v1829, %v1905
        %v1922 = vsub.f32 %v1832, %v1906
        %v1923 = vsub.f32 %v1837, %v1907
        %v1924 = vsub.f32 %v1840, %v1908
        %v1925 = vmul.f32 %v1909, %v1909
        %v1926 = vmul.f32 %v1910, %v1910
        %v1927 = vmul.f32 %v1911, %v1911
        %v1928 = vmul.f32 %v1912, %v1912
        %v1929 = vmul.f32 %v1913, %v1913
        %v1930 = vmul.f32 %v1914, %v1914
        %v1931 = vmul.f32 %v1915, %v1915
        %v1932 = vmul.f32 %v1916, %v1916
        %v1933 = vmul.f32 %v1917, %v1917
        %v1934 = vmul.f32 %v1918, %v1918
        %v1935 = vmul.f32 %v1919, %v1919
        %v1936 = vmul.f32 %v1920, %v1920
        %v1937 = vmul.f32 %v1921, %v1921
        %v1938 = vmul.f32 %v1922, %v1922
        %v1939 = vmul.f32 %v1923, %v1923
        %v1940 = vmul.f32 %v1924, %v1924
        %v1941 = vsel %vm1325, %v1925, 0.0
        %1942 = vadd.xlane.f32.xlu0 %v1941
        %v1943 = vpop.xlane.xlu0 %1942
        %v1944 = vsel %vm1325, %v1926, 0.0
        %1945 = vadd.xlane.f32.xlu0 %v1944
        %v1946 = vpop.xlane.xlu0 %1945
        %v1947 = vsel %vm1325, %v1927, 0.0
        %1948 = vadd.xlane.f32.xlu0 %v1947
        %v1949 = vpop.xlane.xlu0 %1948
        %v1950 = vsel %vm1325, %v1928, 0.0
        %1951 = vadd.xlane.f32.xlu0 %v1950
        %v1952 = vpop.xlane.xlu0 %1951
        %v1953 = vsel %vm1325, %v1929, 0.0
        %1954 = vadd.xlane.f32.xlu0 %v1953
        %v1955 = vpop.xlane.xlu0 %1954
        %v1956 = vsel %vm1325, %v1930, 0.0
        %1957 = vadd.xlane.f32.xlu0 %v1956
        %v1958 = vpop.xlane.xlu0 %1957
        %v1959 = vsel %vm1325, %v1931, 0.0
        %1960 = vadd.xlane.f32.xlu0 %v1959
        %v1961 = vpop.xlane.xlu0 %1960
        %v1962 = vsel %vm1325, %v1932, 0.0
        %1963 = vadd.xlane.f32.xlu0 %v1962
        %v1964 = vpop.xlane.xlu0 %1963
        %v1965 = vsel %vm1325, %v1933, 0.0
        %1966 = vadd.xlane.f32.xlu0 %v1965
        %v1967 = vpop.xlane.xlu0 %1966
        %v1968 = vsel %vm1325, %v1934, 0.0
        %1969 = vadd.xlane.f32.xlu0 %v1968
        %v1970 = vpop.xlane.xlu0 %1969
        %v1971 = vsel %vm1325, %v1935, 0.0
        %1972 = vadd.xlane.f32.xlu0 %v1971
        %v1973 = vpop.xlane.xlu0 %1972
        %v1974 = vsel %vm1325, %v1936, 0.0
        %1975 = vadd.xlane.f32.xlu0 %v1974
        %v1976 = vpop.xlane.xlu0 %1975
        %v1977 = vsel %vm1325, %v1937, 0.0
        %1978 = vadd.xlane.f32.xlu0 %v1977
        %v1979 = vpop.xlane.xlu0 %1978
        %v1980 = vsel %vm1325, %v1938, 0.0
        %1981 = vadd.xlane.f32.xlu0 %v1980
        %v1982 = vpop.xlane.xlu0 %1981
        %v1983 = vsel %vm1325, %v1939, 0.0
        %1984 = vadd.xlane.f32.xlu0 %v1983
        %v1985 = vpop.xlane.xlu0 %1984
        %v1986 = vsel %vm1325, %v1940, 0.0
        %1987 = vadd.xlane.f32.xlu0 %v1986
        %v1988 = vpop.xlane.xlu0 %1987
        %v1989 = vmul.f32 %v1943, %v1374
        %v1990 = vmul.f32 %v1946, %v1374
        %v1991 = vmul.f32 %v1949, %v1374
        %v1992 = vmul.f32 %v1952, %v1374
        %v1993 = vmul.f32 %v1955, %v1374
        %v1994 = vmul.f32 %v1958, %v1374
        %v1995 = vmul.f32 %v1961, %v1374
        %v1996 = vmul.f32 %v1964, %v1374
        %v1997 = vmul.f32 %v1967, %v1374
        %v1998 = vmul.f32 %v1970, %v1374
        %v1999 = vmul.f32 %v1973, %v1374
        %v2000 = vmul.f32 %v1976, %v1374
        %v2001 = vmul.f32 %v1979, %v1374
        %v2002 = vmul.f32 %v1982, %v1374
        %v2003 = vmul.f32 %v1985, %v1374
        %v2004 = vmul.f32 %v1988, %v1374
        %v2005 = vadd.f32 %v1989, 1e-05
        %v2006 = vadd.f32 %v1990, 1e-05
        %v2007 = vadd.f32 %v1991, 1e-05
        %v2008 = vadd.f32 %v1992, 1e-05
        %v2009 = vadd.f32 %v1993, 1e-05
        %v2010 = vadd.f32 %v1994, 1e-05
        %v2011 = vadd.f32 %v1995, 1e-05
        %v2012 = vadd.f32 %v1996, 1e-05
        %v2013 = vadd.f32 %v1997, 1e-05
        %v2014 = vadd.f32 %v1998, 1e-05
        %v2015 = vadd.f32 %v1999, 1e-05
        %v2016 = vadd.f32 %v2000, 1e-05
        %v2017 = vadd.f32 %v2001, 1e-05
        %v2018 = vadd.f32 %v2002, 1e-05
        %v2019 = vadd.f32 %v2003, 1e-05
        %v2020 = vadd.f32 %v2004, 1e-05
        %v2021 = vrsqrt.pop %v2005
        %v2022 = vrsqrt.pop %v2006
        %v2023 = vrsqrt.pop %v2007
        %v2024 = vrsqrt.pop %v2008
        %v2025 = vrsqrt.pop %v2009
        %v2026 = vrsqrt.pop %v2010
        %v2027 = vrsqrt.pop %v2011
        %v2028 = vrsqrt.pop %v2012
        %v2029 = vrsqrt.pop %v2013
        %v2030 = vrsqrt.pop %v2014
        %v2031 = vrsqrt.pop %v2015
        %v2032 = vrsqrt.pop %v2016
        %v2033 = vrsqrt.pop %v2017
        %v2034 = vrsqrt.pop %v2018
        %v2035 = vrsqrt.pop %v2019
        %v2036 = vrsqrt.pop %v2020
        %v2037 = vmul.f32 %v1909, %v2021
        %v2038 = vmul.f32 %v1910, %v2022
        %v2039 = vmul.f32 %v1911, %v2023
        %v2040 = vmul.f32 %v1912, %v2024
        %v2041 = vmul.f32 %v1913, %v2025
        %v2042 = vmul.f32 %v1914, %v2026
        %v2043 = vmul.f32 %v1915, %v2027
        %v2044 = vmul.f32 %v1916, %v2028
        %v2045 = vmul.f32 %v1917, %v2029
        %v2046 = vmul.f32 %v1918, %v2030
        %v2047 = vmul.f32 %v1919, %v2031
        %v2048 = vmul.f32 %v1920, %v2032
        %v2049 = vmul.f32 %v1921, %v2033
        %v2050 = vmul.f32 %v1922, %v2034
        %v2051 = vmul.f32 %v1923, %v2035
        %v2052 = vmul.f32 %v1924, %v2036
        %v2054 = vlaneseq
        %v2055 = vshrl.u32 %v2054, 7
        %v2056 = vsub.s32 0, %v2055
        %v2057 = vrot.slane %v1843, %v2056
        %v2059 = vmul.f32 %v2037, %v2057
        %v2060 = vmul.f32 %v2038, %v2057
        %v2061 = vmul.f32 %v2039, %v2057
        %v2062 = vmul.f32 %v2040, %v2057
        %v2063 = vmul.f32 %v2041, %v2057
        %v2064 = vmul.f32 %v2042, %v2057
        %v2065 = vmul.f32 %v2043, %v2057
        %v2066 = vmul.f32 %v2044, %v2057
        %v2067 = vmul.f32 %v2045, %v2057
        %v2068 = vmul.f32 %v2046, %v2057
        %v2069 = vmul.f32 %v2047, %v2057
        %v2070 = vmul.f32 %v2048, %v2057
        %v2071 = vmul.f32 %v2049, %v2057
        %v2072 = vmul.f32 %v2050, %v2057
        %v2073 = vmul.f32 %v2051, %v2057
        %v2074 = vmul.f32 %v2052, %v2057
        %v2076 = vlaneseq
        %v2077 = vshrl.u32 %v2076, 7
        %v2078 = vsub.s32 0, %v2077
        %v2079 = vrot.slane %v1844, %v2078
        %v2081 = vadd.f32 %v2059, %v2079
        %v2082 = vadd.f32 %v2060, %v2079
        %v2083 = vadd.f32 %v2061, %v2079
        %v2084 = vadd.f32 %v2062, %v2079
        %v2085 = vadd.f32 %v2063, %v2079
        %v2086 = vadd.f32 %v2064, %v2079
        %v2087 = vadd.f32 %v2065, %v2079
        %v2088 = vadd.f32 %v2066, %v2079
        %v2089 = vadd.f32 %v2067, %v2079
        %v2090 = vadd.f32 %v2068, %v2079
        %v2091 = vadd.f32 %v2069, %v2079
        %v2092 = vadd.f32 %v2070, %v2079
        %v2093 = vadd.f32 %v2071, %v2079
        %v2094 = vadd.f32 %v2072, %v2079
        %v2095 = vadd.f32 %v2073, %v2079
        %v2096 = vadd.f32 %v2074, %v2079
        %v2097 = vxor.u32 %v2081, 2147483648
        %v2098 = vxor.u32 %v2082, 2147483648
        %v2099 = vxor.u32 %v2083, 2147483648
        %v2100 = vxor.u32 %v2084, 2147483648
        %v2101 = vxor.u32 %v2085, 2147483648
        %v2102 = vxor.u32 %v2086, 2147483648
        %v2103 = vxor.u32 %v2087, 2147483648
        %v2104 = vxor.u32 %v2088, 2147483648
        %v2105 = vxor.u32 %v2089, 2147483648
        %v2106 = vxor.u32 %v2090, 2147483648
        %v2107 = vxor.u32 %v2091, 2147483648
        %v2108 = vxor.u32 %v2092, 2147483648
        %v2109 = vxor.u32 %v2093, 2147483648
        %v2110 = vxor.u32 %v2094, 2147483648
        %v2111 = vxor.u32 %v2095, 2147483648
        %v2112 = vxor.u32 %v2096, 2147483648
        %v2113 = vmul.f32 %v2097, 1.442695
        %v2114 = vpow.pop %v2113
        %v2115 = vmul.f32 %v2098, 1.442695
        %v2116 = vpow.pop %v2115
        %v2117 = vmul.f32 %v2099, 1.442695
        %v2118 = vpow.pop %v2117
        %v2119 = vmul.f32 %v2100, 1.442695
        %v2120 = vpow.pop %v2119
        %v2121 = vmul.f32 %v2101, 1.442695
        %v2122 = vpow.pop %v2121
        %v2123 = vmul.f32 %v2102, 1.442695
        %v2124 = vpow.pop %v2123
        %v2125 = vmul.f32 %v2103, 1.442695
        %v2126 = vpow.pop %v2125
        %v2127 = vmul.f32 %v2104, 1.442695
        %v2128 = vpow.pop %v2127
        %v2129 = vmul.f32 %v2105, 1.442695
        %v2130 = vpow.pop %v2129
        %v2131 = vmul.f32 %v2106, 1.442695
        %v2132 = vpow.pop %v2131
        %v2133 = vmul.f32 %v2107, 1.442695
        %v2134 = vpow.pop %v2133
        %v2135 = vmul.f32 %v2108, 1.442695
        %v2136 = vpow.pop %v2135
        %v2137 = vmul.f32 %v2109, 1.442695
        %v2138 = vpow.pop %v2137
        %v2139 = vmul.f32 %v2110, 1.442695
        %v2140 = vpow.pop %v2139
        %v2141 = vmul.f32 %v2111, 1.442695
        %v2142 = vpow.pop %v2141
        %v2143 = vmul.f32 %v2112, 1.442695
        %v2144 = vpow.pop %v2143
        %v2145 = vadd.f32 %v2114, 1.0
        %v2146 = vadd.f32 %v2116, 1.0
        %v2147 = vadd.f32 %v2118, 1.0
        %v2148 = vadd.f32 %v2120, 1.0
        %v2149 = vadd.f32 %v2122, 1.0
        %v2150 = vadd.f32 %v2124, 1.0
        %v2151 = vadd.f32 %v2126, 1.0
        %v2152 = vadd.f32 %v2128, 1.0
        %v2153 = vadd.f32 %v2130, 1.0
        %v2154 = vadd.f32 %v2132, 1.0
        %v2155 = vadd.f32 %v2134, 1.0
        %v2156 = vadd.f32 %v2136, 1.0
        %v2157 = vadd.f32 %v2138, 1.0
        %v2158 = vadd.f32 %v2140, 1.0
        %v2159 = vadd.f32 %v2142, 1.0
        %v2160 = vadd.f32 %v2144, 1.0
        %v2161 = vrcp.pop %v2145
        %v2162 = vmul.f32 1.0, %v2161
        %v2163 = vrcp.pop %v2146
        %v2164 = vmul.f32 1.0, %v2163
        %v2165 = vrcp.pop %v2147
        %v2166 = vmul.f32 1.0, %v2165
        %v2167 = vrcp.pop %v2148
        %v2168 = vmul.f32 1.0, %v2167
        %v2169 = vrcp.pop %v2149
        %v2170 = vmul.f32 1.0, %v2169
        %v2171 = vrcp.pop %v2150
        %v2172 = vmul.f32 1.0, %v2171
        %v2173 = vrcp.pop %v2151
        %v2174 = vmul.f32 1.0, %v2173
        %v2175 = vrcp.pop %v2152
        %v2176 = vmul.f32 1.0, %v2175
        %v2177 = vrcp.pop %v2153
        %v2178 = vmul.f32 1.0, %v2177
        %v2179 = vrcp.pop %v2154
        %v2180 = vmul.f32 1.0, %v2179
        %v2181 = vrcp.pop %v2155
        %v2182 = vmul.f32 1.0, %v2181
        %v2183 = vrcp.pop %v2156
        %v2184 = vmul.f32 1.0, %v2183
        %v2185 = vrcp.pop %v2157
        %v2186 = vmul.f32 1.0, %v2185
        %v2187 = vrcp.pop %v2158
        %v2188 = vmul.f32 1.0, %v2187
        %v2189 = vrcp.pop %v2159
        %v2190 = vmul.f32 1.0, %v2189
        %v2191 = vrcp.pop %v2160
        %v2192 = vmul.f32 1.0, %v2191
        %v2193 = vmul.f32 %v2081, %v2162
        %v2194 = vmul.f32 %v2082, %v2164
        %v2195 = vmul.f32 %v2083, %v2166
        %v2196 = vmul.f32 %v2084, %v2168
        %v2197 = vmul.f32 %v2085, %v2170
        %v2198 = vmul.f32 %v2086, %v2172
        %v2199 = vmul.f32 %v2087, %v2174
        %v2200 = vmul.f32 %v2088, %v2176
        %v2201 = vmul.f32 %v2089, %v2178
        %v2202 = vmul.f32 %v2090, %v2180
        %v2203 = vmul.f32 %v2091, %v2182
        %v2204 = vmul.f32 %v2092, %v2184
        %v2205 = vmul.f32 %v2093, %v2186
        %v2206 = vmul.f32 %v2094, %v2188
        %v2207 = vmul.f32 %v2095, %v2190
        %v2208 = vmul.f32 %v2096, %v2192
        %v2209 = vpack.c.bf16 %v2194, %v2193
        %v2210 = vpack.c.bf16 %v2196, %v2195
        %v2211 = vpack.c.bf16 %v2198, %v2197
        %v2212 = vpack.c.bf16 %v2200, %v2199
        %v2213 = vpack.c.bf16 %v2202, %v2201
        %v2214 = vpack.c.bf16 %v2204, %v2203
        %v2215 = vpack.c.bf16 %v2206, %v2205
        %v2216 = vpack.c.bf16 %v2208, %v2207
        %v2217 = vld [vmem:[%s27] sm:$0xf]
        %v2218 = vld [vmem:[%s27 + $0x4] sm:$0xf]
        %v2219 = vld [vmem:[%s27 + $0x8] sm:$0xf]
        %v2220 = vld [vmem:[%s27 + $0xc] sm:$0xf]
        %v2221 = vld [vmem:[%s29] sm:$0x1]
        %v2223 = vlaneseq
        %v2224 = vshrl.u32 %v2223, 7
        %v2225 = vsub.s32 0, %v2224
        %v2226 = vrot.slane %v2221, %v2225
        %v2232 = vunpack.c.l.b16 %v2217
        %v2233 = vunpack.c.l.b16 %v2218
        %v2234 = vunpack.c.l.b16 %v2219
        %v2235 = vunpack.c.l.b16 %v2220
        %v2236 = vpack.c.b16 %v2233, %v2232
        %v2237 = vpack.c.b16 %v2235, %v2234
        %v2241 = vsel %vm1325, %v2209, 0
        %v2244 = vsel %vm1325, %v2210, 0
        %v2247 = vsel %vm1325, %v2211, 0
        %v2250 = vsel %vm1325, %v2212, 0
        %v2253 = vsel %vm1325, %v2213, 0
        %v2256 = vsel %vm1325, %v2214, 0
        %v2259 = vsel %vm1325, %v2215, 0
        %v2262 = vsel %vm1325, %v2216, 0
        %2264 = vmatprep.subr.bf16.mxu0 0
        %2265 = vmatpush1.bf16.msra.mxu0 0
        %2266 = vmatprep.subr.bf16.mxu0 0
        %2267 = vmatpush1.bf16.msra.mxu0 0
        %2268 = vmatprep.subr.bf16.mxu0 0
        %2269 = vmatpush1.bf16.msra.mxu0 0
        %2270 = vmatprep.subr.bf16.mxu0 0
        %2271 = vmatpush1.bf16.msra.mxu0 0
        %2272 = vmatprep.subr.bf16.mxu0 0
        %2273 = vmatpush1.bf16.msra.mxu0 0
        %2274 = vmatprep.subr.bf16.mxu0 0
        %2275 = vmatpush1.bf16.msra.mxu0 0
        %2276 = vmatprep.subr.bf16.mxu0 0
        %2277 = vmatpush1.bf16.msra.mxu0 %v2237
        %2278 = vmatprep.subr.bf16.mxu0 0
        %2279 = vmatpush1.bf16.msra.mxu0 %v2236
        %2280 = vmatprep.subr.bf16.mxu0 0
        %2281 = vmatpush2.bf16.msra.mxu0 0
        %2282 = vmatprep.subr.bf16.mxu0 0
        %2283 = vmatpush2.bf16.msra.mxu0 0
        %2284 = vmatprep.subr.bf16.mxu0 0
        %2285 = vmatpush2.bf16.msra.mxu0 0
        %2286 = vmatprep.subr.bf16.mxu0 0
        %2287 = vmatpush2.bf16.msra.mxu0 0
        %2288 = vmatprep.subr.bf16.mxu0 0
        %2289 = vmatpush2.bf16.msra.mxu0 0
        %2290 = vmatprep.subr.bf16.mxu0 0
        %2291 = vmatpush2.bf16.msra.mxu0 0
        %2292 = vmatprep.subr.bf16.mxu0 0
        %2293 = vmatpush2.bf16.msra.mxu0 0
        %2294 = vmatprep.subr.bf16.mxu0 0
        %2295 = vmatpush2.bf16.msra.mxu0 0
        %2296 = vmatprep.mubr.bf16.mxu0 0
        %2297 = vmatmul.mubr.bf16.gmra.mxu0 %v2241
        %v2298 = vpop.f32.mrf.mxu0
        %v2299 = vadd.f32 %v2226, %v2298
        %v2300 = vpop.f32.mrf.mxu0
        %v2301 = vpop.f32.mrf.mxu0
        %v2302 = vadd.f32 %v2226, %v2301
        %v2303 = vpop.f32.mrf.mxu0
        %2304 = vmatprep.mubr.bf16.mxu0 0
        %2305 = vmatmul.mubr.bf16.gmra.mxu0 %v2244
        %v2306 = vpop.f32.mrf.mxu0
        %v2307 = vadd.f32 %v2226, %v2306
        %v2308 = vpop.f32.mrf.mxu0
        %v2309 = vpop.f32.mrf.mxu0
        %v2310 = vadd.f32 %v2226, %v2309
        %v2311 = vpop.f32.mrf.mxu0
        %2312 = vmatprep.mubr.bf16.mxu0 0
        %2313 = vmatmul.mubr.bf16.gmra.mxu0 %v2247
        %v2314 = vpop.f32.mrf.mxu0
        %v2315 = vadd.f32 %v2226, %v2314
        %v2316 = vpop.f32.mrf.mxu0
        %v2317 = vpop.f32.mrf.mxu0
        %v2318 = vadd.f32 %v2226, %v2317
        %v2319 = vpop.f32.mrf.mxu0
        %2320 = vmatprep.mubr.bf16.mxu0 0
        %2321 = vmatmul.mubr.bf16.gmra.mxu0 %v2250
        %v2322 = vpop.f32.mrf.mxu0
        %v2323 = vadd.f32 %v2226, %v2322
        %v2324 = vpop.f32.mrf.mxu0
        %v2325 = vpop.f32.mrf.mxu0
        %v2326 = vadd.f32 %v2226, %v2325
        %v2327 = vpop.f32.mrf.mxu0
        %2328 = vmatprep.mubr.bf16.mxu0 0
        %2329 = vmatmul.mubr.bf16.gmra.mxu0 %v2253
        %v2330 = vpop.f32.mrf.mxu0
        %v2331 = vadd.f32 %v2226, %v2330
        %v2332 = vpop.f32.mrf.mxu0
        %v2333 = vpop.f32.mrf.mxu0
        %v2334 = vadd.f32 %v2226, %v2333
        %v2335 = vpop.f32.mrf.mxu0
        %2336 = vmatprep.mubr.bf16.mxu0 0
        %2337 = vmatmul.mubr.bf16.gmra.mxu0 %v2256
        %v2338 = vpop.f32.mrf.mxu0
        %v2339 = vadd.f32 %v2226, %v2338
        %v2340 = vpop.f32.mrf.mxu0
        %v2341 = vpop.f32.mrf.mxu0
        %v2342 = vadd.f32 %v2226, %v2341
        %v2343 = vpop.f32.mrf.mxu0
        %2344 = vmatprep.mubr.bf16.mxu0 0
        %2345 = vmatmul.mubr.bf16.gmra.mxu0 %v2259
        %v2346 = vpop.f32.mrf.mxu0
        %v2347 = vadd.f32 %v2226, %v2346
        %v2348 = vpop.f32.mrf.mxu0
        %v2349 = vpop.f32.mrf.mxu0
        %v2350 = vadd.f32 %v2226, %v2349
        %v2351 = vpop.f32.mrf.mxu0
        %2352 = vmatprep.mubr.bf16.mxu0 0
        %2353 = vmatmul.mubr.bf16.gmra.mxu0 %v2262
        %v2354 = vpop.f32.mrf.mxu0
        %v2355 = vadd.f32 %v2226, %v2354
        %v2356 = vpop.f32.mrf.mxu0
        %v2357 = vpop.f32.mrf.mxu0
        %v2358 = vadd.f32 %v2226, %v2357
        %v2359 = vpop.f32.mrf.mxu0
        %2360 = vdwg.mxu0
        %v2361 = vld [vmem:[%s31] sm:$0x1]
        %v2362 = vld [vmem:[%s33] sm:$0x1]
        %v2363 = vsel %vm1325, %v2299, 0.0
        %2364 = vadd.xlane.f32.xlu0 %v2363
        %v2365 = vpop.xlane.xlu0 %2364
        %v2366 = vsel %vm1325, %v2302, 0.0
        %2367 = vadd.xlane.f32.xlu0 %v2366
        %v2368 = vpop.xlane.xlu0 %2367
        %v2369 = vsel %vm1325, %v2307, 0.0
        %2370 = vadd.xlane.f32.xlu0 %v2369
        %v2371 = vpop.xlane.xlu0 %2370
        %v2372 = vsel %vm1325, %v2310, 0.0
        %2373 = vadd.xlane.f32.xlu0 %v2372
        %v2374 = vpop.xlane.xlu0 %2373
        %v2375 = vsel %vm1325, %v2315, 0.0
        %2376 = vadd.xlane.f32.xlu0 %v2375
        %v2377 = vpop.xlane.xlu0 %2376
        %v2378 = vsel %vm1325, %v2318, 0.0
        %2379 = vadd.xlane.f32.xlu0 %v2378
        %v2380 = vpop.xlane.xlu0 %2379
        %v2381 = vsel %vm1325, %v2323, 0.0
        %2382 = vadd.xlane.f32.xlu0 %v2381
        %v2383 = vpop.xlane.xlu0 %2382
        %v2384 = vsel %vm1325, %v2326, 0.0
        %2385 = vadd.xlane.f32.xlu0 %v2384
        %v2386 = vpop.xlane.xlu0 %2385
        %v2387 = vsel %vm1325, %v2331, 0.0
        %2388 = vadd.xlane.f32.xlu0 %v2387
        %v2389 = vpop.xlane.xlu0 %2388
        %v2390 = vsel %vm1325, %v2334, 0.0
        %2391 = vadd.xlane.f32.xlu0 %v2390
        %v2392 = vpop.xlane.xlu0 %2391
        %v2393 = vsel %vm1325, %v2339, 0.0
        %2394 = vadd.xlane.f32.xlu0 %v2393
        %v2395 = vpop.xlane.xlu0 %2394
        %v2396 = vsel %vm1325, %v2342, 0.0
        %2397 = vadd.xlane.f32.xlu0 %v2396
        %v2398 = vpop.xlane.xlu0 %2397
        %v2399 = vsel %vm1325, %v2347, 0.0
        %2400 = vadd.xlane.f32.xlu0 %v2399
        %v2401 = vpop.xlane.xlu0 %2400
        %v2402 = vsel %vm1325, %v2350, 0.0
        %2403 = vadd.xlane.f32.xlu0 %v2402
        %v2404 = vpop.xlane.xlu0 %2403
        %v2405 = vsel %vm1325, %v2355, 0.0
        %2406 = vadd.xlane.f32.xlu0 %v2405
        %v2407 = vpop.xlane.xlu0 %2406
        %v2408 = vsel %vm1325, %v2358, 0.0
        %2409 = vadd.xlane.f32.xlu0 %v2408
        %v2410 = vpop.xlane.xlu0 %2409
        %v2411 = vmul.f32 %v2365, %v1374
        %v2412 = vmul.f32 %v2368, %v1374
        %v2413 = vmul.f32 %v2371, %v1374
        %v2414 = vmul.f32 %v2374, %v1374
        %v2415 = vmul.f32 %v2377, %v1374
        %v2416 = vmul.f32 %v2380, %v1374
        %v2417 = vmul.f32 %v2383, %v1374
        %v2418 = vmul.f32 %v2386, %v1374
        %v2419 = vmul.f32 %v2389, %v1374
        %v2420 = vmul.f32 %v2392, %v1374
        %v2421 = vmul.f32 %v2395, %v1374
        %v2422 = vmul.f32 %v2398, %v1374
        %v2423 = vmul.f32 %v2401, %v1374
        %v2424 = vmul.f32 %v2404, %v1374
        %v2425 = vmul.f32 %v2407, %v1374
        %v2426 = vmul.f32 %v2410, %v1374
        %v2427 = vsub.f32 %v2299, %v2411
        %v2428 = vsub.f32 %v2302, %v2412
        %v2429 = vsub.f32 %v2307, %v2413
        %v2430 = vsub.f32 %v2310, %v2414
        %v2431 = vsub.f32 %v2315, %v2415
        %v2432 = vsub.f32 %v2318, %v2416
        %v2433 = vsub.f32 %v2323, %v2417
        %v2434 = vsub.f32 %v2326, %v2418
        %v2435 = vsub.f32 %v2331, %v2419
        %v2436 = vsub.f32 %v2334, %v2420
        %v2437 = vsub.f32 %v2339, %v2421
        %v2438 = vsub.f32 %v2342, %v2422
        %v2439 = vsub.f32 %v2347, %v2423
        %v2440 = vsub.f32 %v2350, %v2424
        %v2441 = vsub.f32 %v2355, %v2425
        %v2442 = vsub.f32 %v2358, %v2426
        %v2443 = vmul.f32 %v2427, %v2427
        %v2444 = vmul.f32 %v2428, %v2428
        %v2445 = vmul.f32 %v2429, %v2429
        %v2446 = vmul.f32 %v2430, %v2430
        %v2447 = vmul.f32 %v2431, %v2431
        %v2448 = vmul.f32 %v2432, %v2432
        %v2449 = vmul.f32 %v2433, %v2433
        %v2450 = vmul.f32 %v2434, %v2434
        %v2451 = vmul.f32 %v2435, %v2435
        %v2452 = vmul.f32 %v2436, %v2436
        %v2453 = vmul.f32 %v2437, %v2437
        %v2454 = vmul.f32 %v2438, %v2438
        %v2455 = vmul.f32 %v2439, %v2439
        %v2456 = vmul.f32 %v2440, %v2440
        %v2457 = vmul.f32 %v2441, %v2441
        %v2458 = vmul.f32 %v2442, %v2442
        %v2459 = vsel %vm1325, %v2443, 0.0
        %2460 = vadd.xlane.f32.xlu0 %v2459
        %v2461 = vpop.xlane.xlu0 %2460
        %v2462 = vsel %vm1325, %v2444, 0.0
        %2463 = vadd.xlane.f32.xlu0 %v2462
        %v2464 = vpop.xlane.xlu0 %2463
        %v2465 = vsel %vm1325, %v2445, 0.0
        %2466 = vadd.xlane.f32.xlu0 %v2465
        %v2467 = vpop.xlane.xlu0 %2466
        %v2468 = vsel %vm1325, %v2446, 0.0
        %2469 = vadd.xlane.f32.xlu0 %v2468
        %v2470 = vpop.xlane.xlu0 %2469
        %v2471 = vsel %vm1325, %v2447, 0.0
        %2472 = vadd.xlane.f32.xlu0 %v2471
        %v2473 = vpop.xlane.xlu0 %2472
        %v2474 = vsel %vm1325, %v2448, 0.0
        %2475 = vadd.xlane.f32.xlu0 %v2474
        %v2476 = vpop.xlane.xlu0 %2475
        %v2477 = vsel %vm1325, %v2449, 0.0
        %2478 = vadd.xlane.f32.xlu0 %v2477
        %v2479 = vpop.xlane.xlu0 %2478
        %v2480 = vsel %vm1325, %v2450, 0.0
        %2481 = vadd.xlane.f32.xlu0 %v2480
        %v2482 = vpop.xlane.xlu0 %2481
        %v2483 = vsel %vm1325, %v2451, 0.0
        %2484 = vadd.xlane.f32.xlu0 %v2483
        %v2485 = vpop.xlane.xlu0 %2484
        %v2486 = vsel %vm1325, %v2452, 0.0
        %2487 = vadd.xlane.f32.xlu0 %v2486
        %v2488 = vpop.xlane.xlu0 %2487
        %v2489 = vsel %vm1325, %v2453, 0.0
        %2490 = vadd.xlane.f32.xlu0 %v2489
        %v2491 = vpop.xlane.xlu0 %2490
        %v2492 = vsel %vm1325, %v2454, 0.0
        %2493 = vadd.xlane.f32.xlu0 %v2492
        %v2494 = vpop.xlane.xlu0 %2493
        %v2495 = vsel %vm1325, %v2455, 0.0
        %2496 = vadd.xlane.f32.xlu0 %v2495
        %v2497 = vpop.xlane.xlu0 %2496
        %v2498 = vsel %vm1325, %v2456, 0.0
        %2499 = vadd.xlane.f32.xlu0 %v2498
        %v2500 = vpop.xlane.xlu0 %2499
        %v2501 = vsel %vm1325, %v2457, 0.0
        %2502 = vadd.xlane.f32.xlu0 %v2501
        %v2503 = vpop.xlane.xlu0 %2502
        %v2504 = vsel %vm1325, %v2458, 0.0
        %2505 = vadd.xlane.f32.xlu0 %v2504
        %v2506 = vpop.xlane.xlu0 %2505
        %v2507 = vmul.f32 %v2461, %v1374
        %v2508 = vmul.f32 %v2464, %v1374
        %v2509 = vmul.f32 %v2467, %v1374
        %v2510 = vmul.f32 %v2470, %v1374
        %v2511 = vmul.f32 %v2473, %v1374
        %v2512 = vmul.f32 %v2476, %v1374
        %v2513 = vmul.f32 %v2479, %v1374
        %v2514 = vmul.f32 %v2482, %v1374
        %v2515 = vmul.f32 %v2485, %v1374
        %v2516 = vmul.f32 %v2488, %v1374
        %v2517 = vmul.f32 %v2491, %v1374
        %v2518 = vmul.f32 %v2494, %v1374
        %v2519 = vmul.f32 %v2497, %v1374
        %v2520 = vmul.f32 %v2500, %v1374
        %v2521 = vmul.f32 %v2503, %v1374
        %v2522 = vmul.f32 %v2506, %v1374
        %v2523 = vadd.f32 %v2507, 1e-05
        %v2524 = vadd.f32 %v2508, 1e-05
        %v2525 = vadd.f32 %v2509, 1e-05
        %v2526 = vadd.f32 %v2510, 1e-05
        %v2527 = vadd.f32 %v2511, 1e-05
        %v2528 = vadd.f32 %v2512, 1e-05
        %v2529 = vadd.f32 %v2513, 1e-05
        %v2530 = vadd.f32 %v2514, 1e-05
        %v2531 = vadd.f32 %v2515, 1e-05
        %v2532 = vadd.f32 %v2516, 1e-05
        %v2533 = vadd.f32 %v2517, 1e-05
        %v2534 = vadd.f32 %v2518, 1e-05
        %v2535 = vadd.f32 %v2519, 1e-05
        %v2536 = vadd.f32 %v2520, 1e-05
        %v2537 = vadd.f32 %v2521, 1e-05
        %v2538 = vadd.f32 %v2522, 1e-05
        %v2539 = vrsqrt.pop %v2523
        %v2540 = vrsqrt.pop %v2524
        %v2541 = vrsqrt.pop %v2525
        %v2542 = vrsqrt.pop %v2526
        %v2543 = vrsqrt.pop %v2527
        %v2544 = vrsqrt.pop %v2528
        %v2545 = vrsqrt.pop %v2529
        %v2546 = vrsqrt.pop %v2530
        %v2547 = vrsqrt.pop %v2531
        %v2548 = vrsqrt.pop %v2532
        %v2549 = vrsqrt.pop %v2533
        %v2550 = vrsqrt.pop %v2534
        %v2551 = vrsqrt.pop %v2535
        %v2552 = vrsqrt.pop %v2536
        %v2553 = vrsqrt.pop %v2537
        %v2554 = vrsqrt.pop %v2538
        %v2555 = vmul.f32 %v2427, %v2539
        %v2556 = vmul.f32 %v2428, %v2540
        %v2557 = vmul.f32 %v2429, %v2541
        %v2558 = vmul.f32 %v2430, %v2542
        %v2559 = vmul.f32 %v2431, %v2543
        %v2560 = vmul.f32 %v2432, %v2544
        %v2561 = vmul.f32 %v2433, %v2545
        %v2562 = vmul.f32 %v2434, %v2546
        %v2563 = vmul.f32 %v2435, %v2547
        %v2564 = vmul.f32 %v2436, %v2548
        %v2565 = vmul.f32 %v2437, %v2549
        %v2566 = vmul.f32 %v2438, %v2550
        %v2567 = vmul.f32 %v2439, %v2551
        %v2568 = vmul.f32 %v2440, %v2552
        %v2569 = vmul.f32 %v2441, %v2553
        %v2570 = vmul.f32 %v2442, %v2554
        %v2572 = vlaneseq
        %v2573 = vshrl.u32 %v2572, 7
        %v2574 = vsub.s32 0, %v2573
        %v2575 = vrot.slane %v2361, %v2574
        %v2577 = vmul.f32 %v2555, %v2575
        %v2578 = vmul.f32 %v2556, %v2575
        %v2579 = vmul.f32 %v2557, %v2575
        %v2580 = vmul.f32 %v2558, %v2575
        %v2581 = vmul.f32 %v2559, %v2575
        %v2582 = vmul.f32 %v2560, %v2575
        %v2583 = vmul.f32 %v2561, %v2575
        %v2584 = vmul.f32 %v2562, %v2575
        %v2585 = vmul.f32 %v2563, %v2575
        %v2586 = vmul.f32 %v2564, %v2575
        %v2587 = vmul.f32 %v2565, %v2575
        %v2588 = vmul.f32 %v2566, %v2575
        %v2589 = vmul.f32 %v2567, %v2575
        %v2590 = vmul.f32 %v2568, %v2575
        %v2591 = vmul.f32 %v2569, %v2575
        %v2592 = vmul.f32 %v2570, %v2575
        %v2594 = vlaneseq
        %v2595 = vshrl.u32 %v2594, 7
        %v2596 = vsub.s32 0, %v2595
        %v2597 = vrot.slane %v2362, %v2596
        %v2599 = vadd.f32 %v2577, %v2597
        %v2600 = vadd.f32 %v2578, %v2597
        %v2601 = vadd.f32 %v2579, %v2597
        %v2602 = vadd.f32 %v2580, %v2597
        %v2603 = vadd.f32 %v2581, %v2597
        %v2604 = vadd.f32 %v2582, %v2597
        %v2605 = vadd.f32 %v2583, %v2597
        %v2606 = vadd.f32 %v2584, %v2597
        %v2607 = vadd.f32 %v2585, %v2597
        %v2608 = vadd.f32 %v2586, %v2597
        %v2609 = vadd.f32 %v2587, %v2597
        %v2610 = vadd.f32 %v2588, %v2597
        %v2611 = vadd.f32 %v2589, %v2597
        %v2612 = vadd.f32 %v2590, %v2597
        %v2613 = vadd.f32 %v2591, %v2597
        %v2614 = vadd.f32 %v2592, %v2597
        %v2615 = vxor.u32 %v2599, 2147483648
        %v2616 = vxor.u32 %v2600, 2147483648
        %v2617 = vxor.u32 %v2601, 2147483648
        %v2618 = vxor.u32 %v2602, 2147483648
        %v2619 = vxor.u32 %v2603, 2147483648
        %v2620 = vxor.u32 %v2604, 2147483648
        %v2621 = vxor.u32 %v2605, 2147483648
        %v2622 = vxor.u32 %v2606, 2147483648
        %v2623 = vxor.u32 %v2607, 2147483648
        %v2624 = vxor.u32 %v2608, 2147483648
        %v2625 = vxor.u32 %v2609, 2147483648
        %v2626 = vxor.u32 %v2610, 2147483648
        %v2627 = vxor.u32 %v2611, 2147483648
        %v2628 = vxor.u32 %v2612, 2147483648
        %v2629 = vxor.u32 %v2613, 2147483648
        %v2630 = vxor.u32 %v2614, 2147483648
        %v2631 = vmul.f32 %v2615, 1.442695
        %v2632 = vpow.pop %v2631
        %v2633 = vmul.f32 %v2616, 1.442695
        %v2634 = vpow.pop %v2633
        %v2635 = vmul.f32 %v2617, 1.442695
        %v2636 = vpow.pop %v2635
        %v2637 = vmul.f32 %v2618, 1.442695
        %v2638 = vpow.pop %v2637
        %v2639 = vmul.f32 %v2619, 1.442695
        %v2640 = vpow.pop %v2639
        %v2641 = vmul.f32 %v2620, 1.442695
        %v2642 = vpow.pop %v2641
        %v2643 = vmul.f32 %v2621, 1.442695
        %v2644 = vpow.pop %v2643
        %v2645 = vmul.f32 %v2622, 1.442695
        %v2646 = vpow.pop %v2645
        %v2647 = vmul.f32 %v2623, 1.442695
        %v2648 = vpow.pop %v2647
        %v2649 = vmul.f32 %v2624, 1.442695
        %v2650 = vpow.pop %v2649
        %v2651 = vmul.f32 %v2625, 1.442695
        %v2652 = vpow.pop %v2651
        %v2653 = vmul.f32 %v2626, 1.442695
        %v2654 = vpow.pop %v2653
        %v2655 = vmul.f32 %v2627, 1.442695
        %v2656 = vpow.pop %v2655
        %v2657 = vmul.f32 %v2628, 1.442695
        %v2658 = vpow.pop %v2657
        %v2659 = vmul.f32 %v2629, 1.442695
        %v2660 = vpow.pop %v2659
        %v2661 = vmul.f32 %v2630, 1.442695
        %v2662 = vpow.pop %v2661
        %v2663 = vadd.f32 %v2632, 1.0
        %v2664 = vadd.f32 %v2634, 1.0
        %v2665 = vadd.f32 %v2636, 1.0
        %v2666 = vadd.f32 %v2638, 1.0
        %v2667 = vadd.f32 %v2640, 1.0
        %v2668 = vadd.f32 %v2642, 1.0
        %v2669 = vadd.f32 %v2644, 1.0
        %v2670 = vadd.f32 %v2646, 1.0
        %v2671 = vadd.f32 %v2648, 1.0
        %v2672 = vadd.f32 %v2650, 1.0
        %v2673 = vadd.f32 %v2652, 1.0
        %v2674 = vadd.f32 %v2654, 1.0
        %v2675 = vadd.f32 %v2656, 1.0
        %v2676 = vadd.f32 %v2658, 1.0
        %v2677 = vadd.f32 %v2660, 1.0
        %v2678 = vadd.f32 %v2662, 1.0
        %v2679 = vrcp.pop %v2663
        %v2680 = vmul.f32 1.0, %v2679
        %v2681 = vrcp.pop %v2664
        %v2682 = vmul.f32 1.0, %v2681
        %v2683 = vrcp.pop %v2665
        %v2684 = vmul.f32 1.0, %v2683
        %v2685 = vrcp.pop %v2666
        %v2686 = vmul.f32 1.0, %v2685
        %v2687 = vrcp.pop %v2667
        %v2688 = vmul.f32 1.0, %v2687
        %v2689 = vrcp.pop %v2668
        %v2690 = vmul.f32 1.0, %v2689
        %v2691 = vrcp.pop %v2669
        %v2692 = vmul.f32 1.0, %v2691
        %v2693 = vrcp.pop %v2670
        %v2694 = vmul.f32 1.0, %v2693
        %v2695 = vrcp.pop %v2671
        %v2696 = vmul.f32 1.0, %v2695
        %v2697 = vrcp.pop %v2672
        %v2698 = vmul.f32 1.0, %v2697
        %v2699 = vrcp.pop %v2673
        %v2700 = vmul.f32 1.0, %v2699
        %v2701 = vrcp.pop %v2674
        %v2702 = vmul.f32 1.0, %v2701
        %v2703 = vrcp.pop %v2675
        %v2704 = vmul.f32 1.0, %v2703
        %v2705 = vrcp.pop %v2676
        %v2706 = vmul.f32 1.0, %v2705
        %v2707 = vrcp.pop %v2677
        %v2708 = vmul.f32 1.0, %v2707
        %v2709 = vrcp.pop %v2678
        %v2710 = vmul.f32 1.0, %v2709
        %v2711 = vmul.f32 %v2599, %v2680
        %v2712 = vmul.f32 %v2600, %v2682
        %v2713 = vmul.f32 %v2601, %v2684
        %v2714 = vmul.f32 %v2602, %v2686
        %v2715 = vmul.f32 %v2603, %v2688
        %v2716 = vmul.f32 %v2604, %v2690
        %v2717 = vmul.f32 %v2605, %v2692
        %v2718 = vmul.f32 %v2606, %v2694
        %v2719 = vmul.f32 %v2607, %v2696
        %v2720 = vmul.f32 %v2608, %v2698
        %v2721 = vmul.f32 %v2609, %v2700
        %v2722 = vmul.f32 %v2610, %v2702
        %v2723 = vmul.f32 %v2611, %v2704
        %v2724 = vmul.f32 %v2612, %v2706
        %v2725 = vmul.f32 %v2613, %v2708
        %v2726 = vmul.f32 %v2614, %v2710
        %v2727 = vld [vmem:[%s1130] sm:$0xff]
        %v2728 = vld [vmem:[%s1130 + $0x8] sm:$0xff]
        %v2729 = vld [vmem:[%s1130 + $0x10] sm:$0xff]
        %v2730 = vld [vmem:[%s1130 + $0x18] sm:$0xff]
        %v2731 = vld [vmem:[%s1130 + $0x20] sm:$0xff]
        %v2732 = vld [vmem:[%s1130 + $0x28] sm:$0xff]
        %v2733 = vld [vmem:[%s1130 + $0x30] sm:$0xff]
        %v2734 = vld [vmem:[%s1130 + $0x38] sm:$0xff]
        %v2735 = vld [vmem:[%s1130 + $0x40] sm:$0xff]
        %v2736 = vld [vmem:[%s1130 + $0x48] sm:$0xff]
        %v2737 = vld [vmem:[%s1130 + $0x50] sm:$0xff]
        %v2738 = vld [vmem:[%s1130 + $0x58] sm:$0xff]
        %v2739 = vld [vmem:[%s1130 + $0x60] sm:$0xff]
        %v2740 = vld [vmem:[%s1130 + $0x68] sm:$0xff]
        %v2741 = vld [vmem:[%s1130 + $0x70] sm:$0xff]
        %v2742 = vld [vmem:[%s1130 + $0x78] sm:$0xff]
        %v2743 = vxor.u32 %v2727, 2147483648
        %v2744 = vxor.u32 %v2728, 2147483648
        %v2745 = vxor.u32 %v2729, 2147483648
        %v2746 = vxor.u32 %v2730, 2147483648
        %v2747 = vxor.u32 %v2731, 2147483648
        %v2748 = vxor.u32 %v2732, 2147483648
        %v2749 = vxor.u32 %v2733, 2147483648
        %v2750 = vxor.u32 %v2734, 2147483648
        %v2751 = vxor.u32 %v2735, 2147483648
        %v2752 = vxor.u32 %v2736, 2147483648
        %v2753 = vxor.u32 %v2737, 2147483648
        %v2754 = vxor.u32 %v2738, 2147483648
        %v2755 = vxor.u32 %v2739, 2147483648
        %v2756 = vxor.u32 %v2740, 2147483648
        %v2757 = vxor.u32 %v2741, 2147483648
        %v2758 = vxor.u32 %v2742, 2147483648
        %v2759 = vmul.f32 %v2743, 1.442695
        %v2760 = vpow.pop %v2759
        %v2761 = vmul.f32 %v2744, 1.442695
        %v2762 = vpow.pop %v2761
        %v2763 = vmul.f32 %v2745, 1.442695
        %v2764 = vpow.pop %v2763
        %v2765 = vmul.f32 %v2746, 1.442695
        %v2766 = vpow.pop %v2765
        %v2767 = vmul.f32 %v2747, 1.442695
        %v2768 = vpow.pop %v2767
        %v2769 = vmul.f32 %v2748, 1.442695
        %v2770 = vpow.pop %v2769
        %v2771 = vmul.f32 %v2749, 1.442695
        %v2772 = vpow.pop %v2771
        %v2773 = vmul.f32 %v2750, 1.442695
        %v2774 = vpow.pop %v2773
        %v2775 = vmul.f32 %v2751, 1.442695
        %v2776 = vpow.pop %v2775
        %v2777 = vmul.f32 %v2752, 1.442695
        %v2778 = vpow.pop %v2777
        %v2779 = vmul.f32 %v2753, 1.442695
        %v2780 = vpow.pop %v2779
        %v2781 = vmul.f32 %v2754, 1.442695
        %v2782 = vpow.pop %v2781
        %v2783 = vmul.f32 %v2755, 1.442695
        %v2784 = vpow.pop %v2783
        %v2785 = vmul.f32 %v2756, 1.442695
        %v2786 = vpow.pop %v2785
        %v2787 = vmul.f32 %v2757, 1.442695
        %v2788 = vpow.pop %v2787
        %v2789 = vmul.f32 %v2758, 1.442695
        %v2790 = vpow.pop %v2789
        %v2791 = vadd.f32 %v2760, 1.0
        %v2792 = vadd.f32 %v2762, 1.0
        %v2793 = vadd.f32 %v2764, 1.0
        %v2794 = vadd.f32 %v2766, 1.0
        %v2795 = vadd.f32 %v2768, 1.0
        %v2796 = vadd.f32 %v2770, 1.0
        %v2797 = vadd.f32 %v2772, 1.0
        %v2798 = vadd.f32 %v2774, 1.0
        %v2799 = vadd.f32 %v2776, 1.0
        %v2800 = vadd.f32 %v2778, 1.0
        %v2801 = vadd.f32 %v2780, 1.0
        %v2802 = vadd.f32 %v2782, 1.0
        %v2803 = vadd.f32 %v2784, 1.0
        %v2804 = vadd.f32 %v2786, 1.0
        %v2805 = vadd.f32 %v2788, 1.0
        %v2806 = vadd.f32 %v2790, 1.0
        %v2807 = vrcp.pop %v2791
        %v2808 = vmul.f32 1.0, %v2807
        %v2809 = vrcp.pop %v2792
        %v2810 = vmul.f32 1.0, %v2809
        %v2811 = vrcp.pop %v2793
        %v2812 = vmul.f32 1.0, %v2811
        %v2813 = vrcp.pop %v2794
        %v2814 = vmul.f32 1.0, %v2813
        %v2815 = vrcp.pop %v2795
        %v2816 = vmul.f32 1.0, %v2815
        %v2817 = vrcp.pop %v2796
        %v2818 = vmul.f32 1.0, %v2817
        %v2819 = vrcp.pop %v2797
        %v2820 = vmul.f32 1.0, %v2819
        %v2821 = vrcp.pop %v2798
        %v2822 = vmul.f32 1.0, %v2821
        %v2823 = vrcp.pop %v2799
        %v2824 = vmul.f32 1.0, %v2823
        %v2825 = vrcp.pop %v2800
        %v2826 = vmul.f32 1.0, %v2825
        %v2827 = vrcp.pop %v2801
        %v2828 = vmul.f32 1.0, %v2827
        %v2829 = vrcp.pop %v2802
        %v2830 = vmul.f32 1.0, %v2829
        %v2831 = vrcp.pop %v2803
        %v2832 = vmul.f32 1.0, %v2831
        %v2833 = vrcp.pop %v2804
        %v2834 = vmul.f32 1.0, %v2833
        %v2835 = vrcp.pop %v2805
        %v2836 = vmul.f32 1.0, %v2835
        %v2837 = vrcp.pop %v2806
        %v2838 = vmul.f32 1.0, %v2837
        %v2839 = vld [vmem:[%s1124] sm:$0xf]
        %v2840 = vld [vmem:[%s1124 + $0x4] sm:$0xf]
        %v2841 = vld [vmem:[%s1124 + $0x8] sm:$0xf]
        %v2842 = vld [vmem:[%s1124 + $0xc] sm:$0xf]
        %v2843 = vld [vmem:[%s1124 + $0x10] sm:$0xf]
        %v2844 = vld [vmem:[%s1124 + $0x14] sm:$0xf]
        %v2845 = vld [vmem:[%s1124 + $0x18] sm:$0xf]
        %v2846 = vld [vmem:[%s1124 + $0x1c] sm:$0xf]
        %v2847 = vld [vmem:[%s1124 + $0x20] sm:$0xf]
        %v2848 = vld [vmem:[%s1124 + $0x24] sm:$0xf]
        %v2849 = vld [vmem:[%s1124 + $0x28] sm:$0xf]
        %v2850 = vld [vmem:[%s1124 + $0x2c] sm:$0xf]
        %v2851 = vld [vmem:[%s1124 + $0x30] sm:$0xf]
        %v2852 = vld [vmem:[%s1124 + $0x34] sm:$0xf]
        %v2853 = vld [vmem:[%s1124 + $0x38] sm:$0xf]
        %v2854 = vld [vmem:[%s1124 + $0x3c] sm:$0xf]
        %v2855 = vld [vmem:[%s35] sm:$0xf]
        %v2856 = vld [vmem:[%s35 + $0x4] sm:$0xf]
        %v2857 = vld [vmem:[%s35 + $0x8] sm:$0xf]
        %v2858 = vld [vmem:[%s35 + $0xc] sm:$0xf]
        %v2859 = vld [vmem:[%s35 + $0x10] sm:$0xf]
        %v2860 = vld [vmem:[%s35 + $0x14] sm:$0xf]
        %v2861 = vld [vmem:[%s37] sm:$0x1]
        %v2863 = vlaneseq
        %v2864 = vshrl.u32 %v2863, 7
        %v2865 = vsub.s32 0, %v2864
        %v2866 = vrot.slane %v2861, %v2865
        %v2884 = vunpack.c.l.b16 %v2839
        %v2885 = vunpack.c.l.b16 %v2840
        %v2886 = vunpack.c.l.b16 %v2841
        %v2887 = vunpack.c.l.b16 %v2842
        %v2888 = vunpack.c.l.b16 %v2843
        %v2889 = vunpack.c.l.b16 %v2844
        %v2890 = vunpack.c.l.b16 %v2845
        %v2891 = vunpack.c.l.b16 %v2846
        %v2892 = vunpack.c.l.b16 %v2847
        %v2893 = vunpack.c.l.b16 %v2848
        %v2894 = vunpack.c.l.b16 %v2849
        %v2895 = vunpack.c.l.b16 %v2850
        %v2896 = vunpack.c.l.b16 %v2851
        %v2897 = vunpack.c.l.b16 %v2852
        %v2898 = vunpack.c.l.b16 %v2853
        %v2899 = vunpack.c.l.b16 %v2854
        %v2900 = vpack.c.b16 %v2885, %v2884
        %v2901 = vpack.c.b16 %v2887, %v2886
        %v2902 = vpack.c.b16 %v2889, %v2888
        %v2903 = vpack.c.b16 %v2891, %v2890
        %v2904 = vpack.c.b16 %v2893, %v2892
        %v2905 = vpack.c.b16 %v2895, %v2894
        %v2906 = vpack.c.b16 %v2897, %v2896
        %v2907 = vpack.c.b16 %v2899, %v2898
        %v2914 = vunpack.c.l.b16 %v2855
        %v2915 = vunpack.c.l.b16 %v2856
        %v2916 = vunpack.c.l.b16 %v2857
        %v2917 = vunpack.c.l.b16 %v2858
        %v2918 = vunpack.c.l.b16 %v2859
        %v2919 = vunpack.c.l.b16 %v2860
        %v2920 = vpack.c.b16 %v2915, %v2914
        %v2921 = vpack.c.b16 %v2917, %v2916
        %v2922 = vpack.c.b16 %v2919, %v2918
        %vm2926 = vcmask 392192
        %v2928 = vsel %vm2926, %v2900, 0
        %v2931 = vsel %vm2926, %v2901, 0
        %v2934 = vsel %vm2926, %v2902, 0
        %v2937 = vsel %vm2926, %v2903, 0
        %v2940 = vsel %vm2926, %v2904, 0
        %v2943 = vsel %vm2926, %v2905, 0
        %v2946 = vsel %vm2926, %v2906, 0
        %v2949 = vsel %vm2926, %v2907, 0
        %2951 = vmatprep.subr.bf16.mxu0 0
        %2952 = vmatpush1.bf16.msra.mxu0 0
        %2953 = vmatprep.subr.bf16.mxu0 0
        %2954 = vmatpush1.bf16.msra.mxu0 0
        %2955 = vmatprep.subr.bf16.mxu0 0
        %2956 = vmatpush1.bf16.msra.mxu0 0
        %2957 = vmatprep.subr.bf16.mxu0 0
        %2958 = vmatpush1.bf16.msra.mxu0 0
        %2959 = vmatprep.subr.bf16.mxu0 0
        %2960 = vmatpush1.bf16.msra.mxu0 0
        %2961 = vmatprep.subr.bf16.mxu0 0
        %2962 = vmatpush1.bf16.msra.mxu0 %v2922
        %2963 = vmatprep.subr.bf16.mxu0 0
        %2964 = vmatpush1.bf16.msra.mxu0 %v2921
        %2965 = vmatprep.subr.bf16.mxu0 0
        %2966 = vmatpush1.bf16.msra.mxu0 %v2920
        %2967 = vmatprep.subr.bf16.mxu0 0
        %2968 = vmatpush2.bf16.msra.mxu0 0
        %2969 = vmatprep.subr.bf16.mxu0 0
        %2970 = vmatpush2.bf16.msra.mxu0 0
        %2971 = vmatprep.subr.bf16.mxu0 0
        %2972 = vmatpush2.bf16.msra.mxu0 0
        %2973 = vmatprep.subr.bf16.mxu0 0
        %2974 = vmatpush2.bf16.msra.mxu0 0
        %2975 = vmatprep.subr.bf16.mxu0 0
        %2976 = vmatpush2.bf16.msra.mxu0 0
        %2977 = vmatprep.subr.bf16.mxu0 0
        %2978 = vmatpush2.bf16.msra.mxu0 0
        %2979 = vmatprep.subr.bf16.mxu0 0
        %2980 = vmatpush2.bf16.msra.mxu0 0
        %2981 = vmatprep.subr.bf16.mxu0 0
        %2982 = vmatpush2.bf16.msra.mxu0 0
        %2983 = vmatprep.mubr.bf16.mxu0 0
        %2984 = vmatmul.mubr.bf16.gmra.mxu0 %v2928
        %v2985 = vpop.f32.mrf.mxu0
        %v2986 = vadd.f32 %v2866, %v2985
        %v2987 = vpop.f32.mrf.mxu0
        %v2988 = vpop.f32.mrf.mxu0
        %v2989 = vadd.f32 %v2866, %v2988
        %v2990 = vpop.f32.mrf.mxu0
        %2991 = vmatprep.mubr.bf16.mxu0 0
        %2992 = vmatmul.mubr.bf16.gmra.mxu0 %v2931
        %v2993 = vpop.f32.mrf.mxu0
        %v2994 = vadd.f32 %v2866, %v2993
        %v2995 = vpop.f32.mrf.mxu0
        %v2996 = vpop.f32.mrf.mxu0
        %v2997 = vadd.f32 %v2866, %v2996
        %v2998 = vpop.f32.mrf.mxu0
        %2999 = vmatprep.mubr.bf16.mxu0 0
        %3000 = vmatmul.mubr.bf16.gmra.mxu0 %v2934
        %v3001 = vpop.f32.mrf.mxu0
        %v3002 = vadd.f32 %v2866, %v3001
        %v3003 = vpop.f32.mrf.mxu0
        %v3004 = vpop.f32.mrf.mxu0
        %v3005 = vadd.f32 %v2866, %v3004
        %v3006 = vpop.f32.mrf.mxu0
        %3007 = vmatprep.mubr.bf16.mxu0 0
        %3008 = vmatmul.mubr.bf16.gmra.mxu0 %v2937
        %v3009 = vpop.f32.mrf.mxu0
        %v3010 = vadd.f32 %v2866, %v3009
        %v3011 = vpop.f32.mrf.mxu0
        %v3012 = vpop.f32.mrf.mxu0
        %v3013 = vadd.f32 %v2866, %v3012
        %v3014 = vpop.f32.mrf.mxu0
        %3015 = vmatprep.mubr.bf16.mxu0 0
        %3016 = vmatmul.mubr.bf16.gmra.mxu0 %v2940
        %v3017 = vpop.f32.mrf.mxu0
        %v3018 = vadd.f32 %v2866, %v3017
        %v3019 = vpop.f32.mrf.mxu0
        %v3020 = vpop.f32.mrf.mxu0
        %v3021 = vadd.f32 %v2866, %v3020
        %v3022 = vpop.f32.mrf.mxu0
        %3023 = vmatprep.mubr.bf16.mxu0 0
        %3024 = vmatmul.mubr.bf16.gmra.mxu0 %v2943
        %v3025 = vpop.f32.mrf.mxu0
        %v3026 = vadd.f32 %v2866, %v3025
        %v3027 = vpop.f32.mrf.mxu0
        %v3028 = vpop.f32.mrf.mxu0
        %v3029 = vadd.f32 %v2866, %v3028
        %v3030 = vpop.f32.mrf.mxu0
        %3031 = vmatprep.mubr.bf16.mxu0 0
        %3032 = vmatmul.mubr.bf16.gmra.mxu0 %v2946
        %v3033 = vpop.f32.mrf.mxu0
        %v3034 = vadd.f32 %v2866, %v3033
        %v3035 = vpop.f32.mrf.mxu0
        %v3036 = vpop.f32.mrf.mxu0
        %v3037 = vadd.f32 %v2866, %v3036
        %v3038 = vpop.f32.mrf.mxu0
        %3039 = vmatprep.mubr.bf16.mxu0 0
        %3040 = vmatmul.mubr.bf16.gmra.mxu0 %v2949
        %v3041 = vpop.f32.mrf.mxu0
        %v3042 = vadd.f32 %v2866, %v3041
        %v3043 = vpop.f32.mrf.mxu0
        %v3044 = vpop.f32.mrf.mxu0
        %v3045 = vadd.f32 %v2866, %v3044
        %v3046 = vpop.f32.mrf.mxu0
        %3047 = vdwg.mxu0
        %v3048 = vxor.u32 %v2986, 2147483648
        %v3049 = vxor.u32 %v2989, 2147483648
        %v3050 = vxor.u32 %v2994, 2147483648
        %v3051 = vxor.u32 %v2997, 2147483648
        %v3052 = vxor.u32 %v3002, 2147483648
        %v3053 = vxor.u32 %v3005, 2147483648
        %v3054 = vxor.u32 %v3010, 2147483648
        %v3055 = vxor.u32 %v3013, 2147483648
        %v3056 = vxor.u32 %v3018, 2147483648
        %v3057 = vxor.u32 %v3021, 2147483648
        %v3058 = vxor.u32 %v3026, 2147483648
        %v3059 = vxor.u32 %v3029, 2147483648
        %v3060 = vxor.u32 %v3034, 2147483648
        %v3061 = vxor.u32 %v3037, 2147483648
        %v3062 = vxor.u32 %v3042, 2147483648
        %v3063 = vxor.u32 %v3045, 2147483648
        %v3064 = vmul.f32 %v3048, 1.442695
        %v3065 = vpow.pop %v3064
        %v3066 = vmul.f32 %v3049, 1.442695
        %v3067 = vpow.pop %v3066
        %v3068 = vmul.f32 %v3050, 1.442695
        %v3069 = vpow.pop %v3068
        %v3070 = vmul.f32 %v3051, 1.442695
        %v3071 = vpow.pop %v3070
        %v3072 = vmul.f32 %v3052, 1.442695
        %v3073 = vpow.pop %v3072
        %v3074 = vmul.f32 %v3053, 1.442695
        %v3075 = vpow.pop %v3074
        %v3076 = vmul.f32 %v3054, 1.442695
        %v3077 = vpow.pop %v3076
        %v3078 = vmul.f32 %v3055, 1.442695
        %v3079 = vpow.pop %v3078
        %v3080 = vmul.f32 %v3056, 1.442695
        %v3081 = vpow.pop %v3080
        %v3082 = vmul.f32 %v3057, 1.442695
        %v3083 = vpow.pop %v3082
        %v3084 = vmul.f32 %v3058, 1.442695
        %v3085 = vpow.pop %v3084
        %v3086 = vmul.f32 %v3059, 1.442695
        %v3087 = vpow.pop %v3086
        %v3088 = vmul.f32 %v3060, 1.442695
        %v3089 = vpow.pop %v3088
        %v3090 = vmul.f32 %v3061, 1.442695
        %v3091 = vpow.pop %v3090
        %v3092 = vmul.f32 %v3062, 1.442695
        %v3093 = vpow.pop %v3092
        %v3094 = vmul.f32 %v3063, 1.442695
        %v3095 = vpow.pop %v3094
        %v3096 = vadd.f32 %v3065, 1.0
        %v3097 = vadd.f32 %v3067, 1.0
        %v3098 = vadd.f32 %v3069, 1.0
        %v3099 = vadd.f32 %v3071, 1.0
        %v3100 = vadd.f32 %v3073, 1.0
        %v3101 = vadd.f32 %v3075, 1.0
        %v3102 = vadd.f32 %v3077, 1.0
        %v3103 = vadd.f32 %v3079, 1.0
        %v3104 = vadd.f32 %v3081, 1.0
        %v3105 = vadd.f32 %v3083, 1.0
        %v3106 = vadd.f32 %v3085, 1.0
        %v3107 = vadd.f32 %v3087, 1.0
        %v3108 = vadd.f32 %v3089, 1.0
        %v3109 = vadd.f32 %v3091, 1.0
        %v3110 = vadd.f32 %v3093, 1.0
        %v3111 = vadd.f32 %v3095, 1.0
        %v3112 = vrcp.pop %v3096
        %v3113 = vmul.f32 1.0, %v3112
        %v3114 = vrcp.pop %v3097
        %v3115 = vmul.f32 1.0, %v3114
        %v3116 = vrcp.pop %v3098
        %v3117 = vmul.f32 1.0, %v3116
        %v3118 = vrcp.pop %v3099
        %v3119 = vmul.f32 1.0, %v3118
        %v3120 = vrcp.pop %v3100
        %v3121 = vmul.f32 1.0, %v3120
        %v3122 = vrcp.pop %v3101
        %v3123 = vmul.f32 1.0, %v3122
        %v3124 = vrcp.pop %v3102
        %v3125 = vmul.f32 1.0, %v3124
        %v3126 = vrcp.pop %v3103
        %v3127 = vmul.f32 1.0, %v3126
        %v3128 = vrcp.pop %v3104
        %v3129 = vmul.f32 1.0, %v3128
        %v3130 = vrcp.pop %v3105
        %v3131 = vmul.f32 1.0, %v3130
        %v3132 = vrcp.pop %v3106
        %v3133 = vmul.f32 1.0, %v3132
        %v3134 = vrcp.pop %v3107
        %v3135 = vmul.f32 1.0, %v3134
        %v3136 = vrcp.pop %v3108
        %v3137 = vmul.f32 1.0, %v3136
        %v3138 = vrcp.pop %v3109
        %v3139 = vmul.f32 1.0, %v3138
        %v3140 = vrcp.pop %v3110
        %v3141 = vmul.f32 1.0, %v3140
        %v3142 = vrcp.pop %v3111
        %v3143 = vmul.f32 1.0, %v3142
        %v3144 = vmul.f32 %v2986, %v3113
        %v3145 = vmul.f32 %v2989, %v3115
        %v3146 = vmul.f32 %v2994, %v3117
        %v3147 = vmul.f32 %v2997, %v3119
        %v3148 = vmul.f32 %v3002, %v3121
        %v3149 = vmul.f32 %v3005, %v3123
        %v3150 = vmul.f32 %v3010, %v3125
        %v3151 = vmul.f32 %v3013, %v3127
        %v3152 = vmul.f32 %v3018, %v3129
        %v3153 = vmul.f32 %v3021, %v3131
        %v3154 = vmul.f32 %v3026, %v3133
        %v3155 = vmul.f32 %v3029, %v3135
        %v3156 = vmul.f32 %v3034, %v3137
        %v3157 = vmul.f32 %v3037, %v3139
        %v3158 = vmul.f32 %v3042, %v3141
        %v3159 = vmul.f32 %v3045, %v3143
        %v3160 = vpack.c.bf16 %v3145, %v3144
        %v3161 = vpack.c.bf16 %v3147, %v3146
        %v3162 = vpack.c.bf16 %v3149, %v3148
        %v3163 = vpack.c.bf16 %v3151, %v3150
        %v3164 = vpack.c.bf16 %v3153, %v3152
        %v3165 = vpack.c.bf16 %v3155, %v3154
        %v3166 = vpack.c.bf16 %v3157, %v3156
        %v3167 = vpack.c.bf16 %v3159, %v3158
        %v3168 = vld [vmem:[%s39] sm:$0xf]
        %v3169 = vld [vmem:[%s39 + $0x4] sm:$0xf]
        %v3170 = vld [vmem:[%s39 + $0x8] sm:$0xf]
        %v3171 = vld [vmem:[%s39 + $0xc] sm:$0xf]
        %v3172 = vld [vmem:[%s39 + $0x10] sm:$0xf]
        %v3173 = vld [vmem:[%s39 + $0x14] sm:$0xf]
        %v3174 = vld [vmem:[%s39 + $0x18] sm:$0xf]
        %v3175 = vld [vmem:[%s39 + $0x1c] sm:$0xf]
        %v3176 = vld [vmem:[%s41] sm:$0x1]
        %v3178 = vlaneseq
        %v3179 = vshrl.u32 %v3178, 7
        %v3180 = vsub.s32 0, %v3179
        %v3181 = vrot.slane %v3176, %v3180
        %v3191 = vunpack.c.l.b16 %v3168
        %v3192 = vunpack.c.l.b16 %v3169
        %v3193 = vunpack.c.l.b16 %v3170
        %v3194 = vunpack.c.l.b16 %v3171
        %v3195 = vunpack.c.l.b16 %v3172
        %v3196 = vunpack.c.l.b16 %v3173
        %v3197 = vunpack.c.l.b16 %v3174
        %v3198 = vunpack.c.l.b16 %v3175
        %v3199 = vpack.c.b16 %v3192, %v3191
        %v3200 = vpack.c.b16 %v3194, %v3193
        %v3201 = vpack.c.b16 %v3196, %v3195
        %v3202 = vpack.c.b16 %v3198, %v3197
        %vm3207 = vcmask 523264
        %v3209 = vsel %vm3207, %v3160, 0
        %v3212 = vsel %vm3207, %v3161, 0
        %v3215 = vsel %vm3207, %v3162, 0
        %v3218 = vsel %vm3207, %v3163, 0
        %v3221 = vsel %vm3207, %v3164, 0
        %v3224 = vsel %vm3207, %v3165, 0
        %v3227 = vsel %vm3207, %v3166, 0
        %v3230 = vsel %vm3207, %v3167, 0
        %3232 = vmatprep.subr.bf16.mxu0 0
        %3233 = vmatpush1.bf16.msra.mxu0 0
        %3234 = vmatprep.subr.bf16.mxu0 0
        %3235 = vmatpush1.bf16.msra.mxu0 0
        %3236 = vmatprep.subr.bf16.mxu0 0
        %3237 = vmatpush1.bf16.msra.mxu0 0
        %3238 = vmatprep.subr.bf16.mxu0 0
        %3239 = vmatpush1.bf16.msra.mxu0 0
        %3240 = vmatprep.subr.bf16.mxu0 0
        %3241 = vmatpush1.bf16.msra.mxu0 %v3202
        %3242 = vmatprep.subr.bf16.mxu0 0
        %3243 = vmatpush1.bf16.msra.mxu0 %v3201
        %3244 = vmatprep.subr.bf16.mxu0 0
        %3245 = vmatpush1.bf16.msra.mxu0 %v3200
        %3246 = vmatprep.subr.bf16.mxu0 0
        %3247 = vmatpush1.bf16.msra.mxu0 %v3199
        %3248 = vmatprep.subr.bf16.mxu0 0
        %3249 = vmatpush2.bf16.msra.mxu0 0
        %3250 = vmatprep.subr.bf16.mxu0 0
        %3251 = vmatpush2.bf16.msra.mxu0 0
        %3252 = vmatprep.subr.bf16.mxu0 0
        %3253 = vmatpush2.bf16.msra.mxu0 0
        %3254 = vmatprep.subr.bf16.mxu0 0
        %3255 = vmatpush2.bf16.msra.mxu0 0
        %3256 = vmatprep.subr.bf16.mxu0 0
        %3257 = vmatpush2.bf16.msra.mxu0 0
        %3258 = vmatprep.subr.bf16.mxu0 0
        %3259 = vmatpush2.bf16.msra.mxu0 0
        %3260 = vmatprep.subr.bf16.mxu0 0
        %3261 = vmatpush2.bf16.msra.mxu0 0
        %3262 = vmatprep.subr.bf16.mxu0 0
        %3263 = vmatpush2.bf16.msra.mxu0 0
        %3264 = vmatprep.mubr.bf16.mxu0 0
        %3265 = vmatmul.mubr.bf16.gmra.mxu0 %v3209
        %v3266 = vpop.f32.mrf.mxu0
        %v3267 = vadd.f32 %v3181, %v3266
        %v3268 = vpop.f32.mrf.mxu0
        %v3269 = vpop.f32.mrf.mxu0
        %v3270 = vadd.f32 %v3181, %v3269
        %v3271 = vpop.f32.mrf.mxu0
        %3272 = vmatprep.mubr.bf16.mxu0 0
        %3273 = vmatmul.mubr.bf16.gmra.mxu0 %v3212
        %v3274 = vpop.f32.mrf.mxu0
        %v3275 = vadd.f32 %v3181, %v3274
        %v3276 = vpop.f32.mrf.mxu0
        %v3277 = vpop.f32.mrf.mxu0
        %v3278 = vadd.f32 %v3181, %v3277
        %v3279 = vpop.f32.mrf.mxu0
        %3280 = vmatprep.mubr.bf16.mxu0 0
        %3281 = vmatmul.mubr.bf16.gmra.mxu0 %v3215
        %v3282 = vpop.f32.mrf.mxu0
        %v3283 = vadd.f32 %v3181, %v3282
        %v3284 = vpop.f32.mrf.mxu0
        %v3285 = vpop.f32.mrf.mxu0
        %v3286 = vadd.f32 %v3181, %v3285
        %v3287 = vpop.f32.mrf.mxu0
        %3288 = vmatprep.mubr.bf16.mxu0 0
        %3289 = vmatmul.mubr.bf16.gmra.mxu0 %v3218
        %v3290 = vpop.f32.mrf.mxu0
        %v3291 = vadd.f32 %v3181, %v3290
        %v3292 = vpop.f32.mrf.mxu0
        %v3293 = vpop.f32.mrf.mxu0
        %v3294 = vadd.f32 %v3181, %v3293
        %v3295 = vpop.f32.mrf.mxu0
        %3296 = vmatprep.mubr.bf16.mxu0 0
        %3297 = vmatmul.mubr.bf16.gmra.mxu0 %v3221
        %v3298 = vpop.f32.mrf.mxu0
        %v3299 = vadd.f32 %v3181, %v3298
        %v3300 = vpop.f32.mrf.mxu0
        %v3301 = vpop.f32.mrf.mxu0
        %v3302 = vadd.f32 %v3181, %v3301
        %v3303 = vpop.f32.mrf.mxu0
        %3304 = vmatprep.mubr.bf16.mxu0 0
        %3305 = vmatmul.mubr.bf16.gmra.mxu0 %v3224
        %v3306 = vpop.f32.mrf.mxu0
        %v3307 = vadd.f32 %v3181, %v3306
        %v3308 = vpop.f32.mrf.mxu0
        %v3309 = vpop.f32.mrf.mxu0
        %v3310 = vadd.f32 %v3181, %v3309
        %v3311 = vpop.f32.mrf.mxu0
        %3312 = vmatprep.mubr.bf16.mxu0 0
        %3313 = vmatmul.mubr.bf16.gmra.mxu0 %v3227
        %v3314 = vpop.f32.mrf.mxu0
        %v3315 = vadd.f32 %v3181, %v3314
        %v3316 = vpop.f32.mrf.mxu0
        %v3317 = vpop.f32.mrf.mxu0
        %v3318 = vadd.f32 %v3181, %v3317
        %v3319 = vpop.f32.mrf.mxu0
        %3320 = vmatprep.mubr.bf16.mxu0 0
        %3321 = vmatmul.mubr.bf16.gmra.mxu0 %v3230
        %v3322 = vpop.f32.mrf.mxu0
        %v3323 = vadd.f32 %v3181, %v3322
        %v3324 = vpop.f32.mrf.mxu0
        %v3325 = vpop.f32.mrf.mxu0
        %v3326 = vadd.f32 %v3181, %v3325
        %v3327 = vpop.f32.mrf.mxu0
        %3328 = vdwg.mxu0
        %v3329 = vxor.u32 %v3267, 2147483648
        %v3330 = vxor.u32 %v3270, 2147483648
        %v3331 = vxor.u32 %v3275, 2147483648
        %v3332 = vxor.u32 %v3278, 2147483648
        %v3333 = vxor.u32 %v3283, 2147483648
        %v3334 = vxor.u32 %v3286, 2147483648
        %v3335 = vxor.u32 %v3291, 2147483648
        %v3336 = vxor.u32 %v3294, 2147483648
        %v3337 = vxor.u32 %v3299, 2147483648
        %v3338 = vxor.u32 %v3302, 2147483648
        %v3339 = vxor.u32 %v3307, 2147483648
        %v3340 = vxor.u32 %v3310, 2147483648
        %v3341 = vxor.u32 %v3315, 2147483648
        %v3342 = vxor.u32 %v3318, 2147483648
        %v3343 = vxor.u32 %v3323, 2147483648
        %v3344 = vxor.u32 %v3326, 2147483648
        %v3345 = vmul.f32 %v3329, 1.442695
        %v3346 = vpow.pop %v3345
        %v3347 = vmul.f32 %v3330, 1.442695
        %v3348 = vpow.pop %v3347
        %v3349 = vmul.f32 %v3331, 1.442695
        %v3350 = vpow.pop %v3349
        %v3351 = vmul.f32 %v3332, 1.442695
        %v3352 = vpow.pop %v3351
        %v3353 = vmul.f32 %v3333, 1.442695
        %v3354 = vpow.pop %v3353
        %v3355 = vmul.f32 %v3334, 1.442695
        %v3356 = vpow.pop %v3355
        %v3357 = vmul.f32 %v3335, 1.442695
        %v3358 = vpow.pop %v3357
        %v3359 = vmul.f32 %v3336, 1.442695
        %v3360 = vpow.pop %v3359
        %v3361 = vmul.f32 %v3337, 1.442695
        %v3362 = vpow.pop %v3361
        %v3363 = vmul.f32 %v3338, 1.442695
        %v3364 = vpow.pop %v3363
        %v3365 = vmul.f32 %v3339, 1.442695
        %v3366 = vpow.pop %v3365
        %v3367 = vmul.f32 %v3340, 1.442695
        %v3368 = vpow.pop %v3367
        %v3369 = vmul.f32 %v3341, 1.442695
        %v3370 = vpow.pop %v3369
        %v3371 = vmul.f32 %v3342, 1.442695
        %v3372 = vpow.pop %v3371
        %v3373 = vmul.f32 %v3343, 1.442695
        %v3374 = vpow.pop %v3373
        %v3375 = vmul.f32 %v3344, 1.442695
        %v3376 = vpow.pop %v3375
        %v3377 = vadd.f32 %v3346, 1.0
        %v3378 = vadd.f32 %v3348, 1.0
        %v3379 = vadd.f32 %v3350, 1.0
        %v3380 = vadd.f32 %v3352, 1.0
        %v3381 = vadd.f32 %v3354, 1.0
        %v3382 = vadd.f32 %v3356, 1.0
        %v3383 = vadd.f32 %v3358, 1.0
        %v3384 = vadd.f32 %v3360, 1.0
        %v3385 = vadd.f32 %v3362, 1.0
        %v3386 = vadd.f32 %v3364, 1.0
        %v3387 = vadd.f32 %v3366, 1.0
        %v3388 = vadd.f32 %v3368, 1.0
        %v3389 = vadd.f32 %v3370, 1.0
        %v3390 = vadd.f32 %v3372, 1.0
        %v3391 = vadd.f32 %v3374, 1.0
        %v3392 = vadd.f32 %v3376, 1.0
        %v3393 = vrcp.pop %v3377
        %v3394 = vmul.f32 1.0, %v3393
        %v3395 = vrcp.pop %v3378
        %v3396 = vmul.f32 1.0, %v3395
        %v3397 = vrcp.pop %v3379
        %v3398 = vmul.f32 1.0, %v3397
        %v3399 = vrcp.pop %v3380
        %v3400 = vmul.f32 1.0, %v3399
        %v3401 = vrcp.pop %v3381
        %v3402 = vmul.f32 1.0, %v3401
        %v3403 = vrcp.pop %v3382
        %v3404 = vmul.f32 1.0, %v3403
        %v3405 = vrcp.pop %v3383
        %v3406 = vmul.f32 1.0, %v3405
        %v3407 = vrcp.pop %v3384
        %v3408 = vmul.f32 1.0, %v3407
        %v3409 = vrcp.pop %v3385
        %v3410 = vmul.f32 1.0, %v3409
        %v3411 = vrcp.pop %v3386
        %v3412 = vmul.f32 1.0, %v3411
        %v3413 = vrcp.pop %v3387
        %v3414 = vmul.f32 1.0, %v3413
        %v3415 = vrcp.pop %v3388
        %v3416 = vmul.f32 1.0, %v3415
        %v3417 = vrcp.pop %v3389
        %v3418 = vmul.f32 1.0, %v3417
        %v3419 = vrcp.pop %v3390
        %v3420 = vmul.f32 1.0, %v3419
        %v3421 = vrcp.pop %v3391
        %v3422 = vmul.f32 1.0, %v3421
        %v3423 = vrcp.pop %v3392
        %v3424 = vmul.f32 1.0, %v3423
        %v3425 = vmul.f32 %v3267, %v3394
        %v3426 = vmul.f32 %v3270, %v3396
        %v3427 = vmul.f32 %v3275, %v3398
        %v3428 = vmul.f32 %v3278, %v3400
        %v3429 = vmul.f32 %v3283, %v3402
        %v3430 = vmul.f32 %v3286, %v3404
        %v3431 = vmul.f32 %v3291, %v3406
        %v3432 = vmul.f32 %v3294, %v3408
        %v3433 = vmul.f32 %v3299, %v3410
        %v3434 = vmul.f32 %v3302, %v3412
        %v3435 = vmul.f32 %v3307, %v3414
        %v3436 = vmul.f32 %v3310, %v3416
        %v3437 = vmul.f32 %v3315, %v3418
        %v3438 = vmul.f32 %v3318, %v3420
        %v3439 = vmul.f32 %v3323, %v3422
        %v3440 = vmul.f32 %v3326, %v3424
        %v3441 = vld [vmem:[%s43] sm:$0x1]
        %v3443 = vlaneseq
        %v3444 = vshrl.u32 %v3443, 7
        %v3445 = vsub.s32 0, %v3444
        %v3446 = vrot.slane %v3441, %v3445
        %v3448 = vmul.f32 %v3425, %v3446
        %v3449 = vmul.f32 %v3426, %v3446
        %v3450 = vmul.f32 %v3427, %v3446
        %v3451 = vmul.f32 %v3428, %v3446
        %v3452 = vmul.f32 %v3429, %v3446
        %v3453 = vmul.f32 %v3430, %v3446
        %v3454 = vmul.f32 %v3431, %v3446
        %v3455 = vmul.f32 %v3432, %v3446
        %v3456 = vmul.f32 %v3433, %v3446
        %v3457 = vmul.f32 %v3434, %v3446
        %v3458 = vmul.f32 %v3435, %v3446
        %v3459 = vmul.f32 %v3436, %v3446
        %v3460 = vmul.f32 %v3437, %v3446
        %v3461 = vmul.f32 %v3438, %v3446
        %v3462 = vmul.f32 %v3439, %v3446
        %v3463 = vmul.f32 %v3440, %v3446
        %v3464 = vsel %vm3207, %v3448, 0.0
        %3465 = vadd.xlane.f32.xlu0 %v3464
        %v3466 = vpop.xlane.xlu0 %3465
        %v3467 = vsel %vm3207, %v3449, 0.0
        %3468 = vadd.xlane.f32.xlu0 %v3467
        %v3469 = vpop.xlane.xlu0 %3468
        %v3470 = vsel %vm3207, %v3450, 0.0
        %3471 = vadd.xlane.f32.xlu0 %v3470
        %v3472 = vpop.xlane.xlu0 %3471
        %v3473 = vsel %vm3207, %v3451, 0.0
        %3474 = vadd.xlane.f32.xlu0 %v3473
        %v3475 = vpop.xlane.xlu0 %3474
        %v3476 = vsel %vm3207, %v3452, 0.0
        %3477 = vadd.xlane.f32.xlu0 %v3476
        %v3478 = vpop.xlane.xlu0 %3477
        %v3479 = vsel %vm3207, %v3453, 0.0
        %3480 = vadd.xlane.f32.xlu0 %v3479
        %v3481 = vpop.xlane.xlu0 %3480
        %v3482 = vsel %vm3207, %v3454, 0.0
        %3483 = vadd.xlane.f32.xlu0 %v3482
        %v3484 = vpop.xlane.xlu0 %3483
        %v3485 = vsel %vm3207, %v3455, 0.0
        %3486 = vadd.xlane.f32.xlu0 %v3485
        %v3487 = vpop.xlane.xlu0 %3486
        %v3488 = vsel %vm3207, %v3456, 0.0
        %3489 = vadd.xlane.f32.xlu0 %v3488
        %v3490 = vpop.xlane.xlu0 %3489
        %v3491 = vsel %vm3207, %v3457, 0.0
        %3492 = vadd.xlane.f32.xlu0 %v3491
        %v3493 = vpop.xlane.xlu0 %3492
        %v3494 = vsel %vm3207, %v3458, 0.0
        %3495 = vadd.xlane.f32.xlu0 %v3494
        %v3496 = vpop.xlane.xlu0 %3495
        %v3497 = vsel %vm3207, %v3459, 0.0
        %3498 = vadd.xlane.f32.xlu0 %v3497
        %v3499 = vpop.xlane.xlu0 %3498
        %v3500 = vsel %vm3207, %v3460, 0.0
        %3501 = vadd.xlane.f32.xlu0 %v3500
        %v3502 = vpop.xlane.xlu0 %3501
        %v3503 = vsel %vm3207, %v3461, 0.0
        %3504 = vadd.xlane.f32.xlu0 %v3503
        %v3505 = vpop.xlane.xlu0 %3504
        %v3506 = vsel %vm3207, %v3462, 0.0
        %3507 = vadd.xlane.f32.xlu0 %v3506
        %v3508 = vpop.xlane.xlu0 %3507
        %v3509 = vsel %vm3207, %v3463, 0.0
        %3510 = vadd.xlane.f32.xlu0 %v3509
        %v3511 = vpop.xlane.xlu0 %3510
        %s3512 = sld [smem:[#allocation2]]
        %v3513 = vstv %s3512
        %v3514 = vadd.f32 %v3466, %v3513
        %v3515 = vadd.f32 %v3469, %v3513
        %v3516 = vadd.f32 %v3472, %v3513
        %v3517 = vadd.f32 %v3475, %v3513
        %v3518 = vadd.f32 %v3478, %v3513
        %v3519 = vadd.f32 %v3481, %v3513
        %v3520 = vadd.f32 %v3484, %v3513
        %v3521 = vadd.f32 %v3487, %v3513
        %v3522 = vadd.f32 %v3490, %v3513
        %v3523 = vadd.f32 %v3493, %v3513
        %v3524 = vadd.f32 %v3496, %v3513
        %v3525 = vadd.f32 %v3499, %v3513
        %v3526 = vadd.f32 %v3502, %v3513
        %v3527 = vadd.f32 %v3505, %v3513
        %v3528 = vadd.f32 %v3508, %v3513
        %v3529 = vadd.f32 %v3511, %v3513
        %v3530 = vxor.u32 %v3514, 2147483648
        %v3531 = vxor.u32 %v3515, 2147483648
        %v3532 = vxor.u32 %v3516, 2147483648
        %v3533 = vxor.u32 %v3517, 2147483648
        %v3534 = vxor.u32 %v3518, 2147483648
        %v3535 = vxor.u32 %v3519, 2147483648
        %v3536 = vxor.u32 %v3520, 2147483648
        %v3537 = vxor.u32 %v3521, 2147483648
        %v3538 = vxor.u32 %v3522, 2147483648
        %v3539 = vxor.u32 %v3523, 2147483648
        %v3540 = vxor.u32 %v3524, 2147483648
        %v3541 = vxor.u32 %v3525, 2147483648
        %v3542 = vxor.u32 %v3526, 2147483648
        %v3543 = vxor.u32 %v3527, 2147483648
        %v3544 = vxor.u32 %v3528, 2147483648
        %v3545 = vxor.u32 %v3529, 2147483648
        %v3546 = vmul.f32 %v3530, 1.442695
        %v3547 = vpow.pop %v3546
        %v3548 = vmul.f32 %v3531, 1.442695
        %v3549 = vpow.pop %v3548
        %v3550 = vmul.f32 %v3532, 1.442695
        %v3551 = vpow.pop %v3550
        %v3552 = vmul.f32 %v3533, 1.442695
        %v3553 = vpow.pop %v3552
        %v3554 = vmul.f32 %v3534, 1.442695
        %v3555 = vpow.pop %v3554
        %v3556 = vmul.f32 %v3535, 1.442695
        %v3557 = vpow.pop %v3556
        %v3558 = vmul.f32 %v3536, 1.442695
        %v3559 = vpow.pop %v3558
        %v3560 = vmul.f32 %v3537, 1.442695
        %v3561 = vpow.pop %v3560
        %v3562 = vmul.f32 %v3538, 1.442695
        %v3563 = vpow.pop %v3562
        %v3564 = vmul.f32 %v3539, 1.442695
        %v3565 = vpow.pop %v3564
        %v3566 = vmul.f32 %v3540, 1.442695
        %v3567 = vpow.pop %v3566
        %v3568 = vmul.f32 %v3541, 1.442695
        %v3569 = vpow.pop %v3568
        %v3570 = vmul.f32 %v3542, 1.442695
        %v3571 = vpow.pop %v3570
        %v3572 = vmul.f32 %v3543, 1.442695
        %v3573 = vpow.pop %v3572
        %v3574 = vmul.f32 %v3544, 1.442695
        %v3575 = vpow.pop %v3574
        %v3576 = vmul.f32 %v3545, 1.442695
        %v3577 = vpow.pop %v3576
        %v3578 = vadd.f32 %v3547, 1.0
        %v3579 = vadd.f32 %v3549, 1.0
        %v3580 = vadd.f32 %v3551, 1.0
        %v3581 = vadd.f32 %v3553, 1.0
        %v3582 = vadd.f32 %v3555, 1.0
        %v3583 = vadd.f32 %v3557, 1.0
        %v3584 = vadd.f32 %v3559, 1.0
        %v3585 = vadd.f32 %v3561, 1.0
        %v3586 = vadd.f32 %v3563, 1.0
        %v3587 = vadd.f32 %v3565, 1.0
        %v3588 = vadd.f32 %v3567, 1.0
        %v3589 = vadd.f32 %v3569, 1.0
        %v3590 = vadd.f32 %v3571, 1.0
        %v3591 = vadd.f32 %v3573, 1.0
        %v3592 = vadd.f32 %v3575, 1.0
        %v3593 = vadd.f32 %v3577, 1.0
        %v3594 = vrcp.pop %v3578
        %v3595 = vmul.f32 1.0, %v3594
        %v3596 = vrcp.pop %v3579
        %v3597 = vmul.f32 1.0, %v3596
        %v3598 = vrcp.pop %v3580
        %v3599 = vmul.f32 1.0, %v3598
        %v3600 = vrcp.pop %v3581
        %v3601 = vmul.f32 1.0, %v3600
        %v3602 = vrcp.pop %v3582
        %v3603 = vmul.f32 1.0, %v3602
        %v3604 = vrcp.pop %v3583
        %v3605 = vmul.f32 1.0, %v3604
        %v3606 = vrcp.pop %v3584
        %v3607 = vmul.f32 1.0, %v3606
        %v3608 = vrcp.pop %v3585
        %v3609 = vmul.f32 1.0, %v3608
        %v3610 = vrcp.pop %v3586
        %v3611 = vmul.f32 1.0, %v3610
        %v3612 = vrcp.pop %v3587
        %v3613 = vmul.f32 1.0, %v3612
        %v3614 = vrcp.pop %v3588
        %v3615 = vmul.f32 1.0, %v3614
        %v3616 = vrcp.pop %v3589
        %v3617 = vmul.f32 1.0, %v3616
        %v3618 = vrcp.pop %v3590
        %v3619 = vmul.f32 1.0, %v3618
        %v3620 = vrcp.pop %v3591
        %v3621 = vmul.f32 1.0, %v3620
        %v3622 = vrcp.pop %v3592
        %v3623 = vmul.f32 1.0, %v3622
        %v3624 = vrcp.pop %v3593
        %v3625 = vmul.f32 1.0, %v3624
        %v3626 = vld [vmem:[%s1106] sm:$0xf]
        %v3627 = vld [vmem:[%s1106 + $0x4] sm:$0xf]
        %v3628 = vld [vmem:[%s1106 + $0x8] sm:$0xf]
        %v3629 = vld [vmem:[%s1106 + $0xc] sm:$0xf]
        %v3630 = vld [vmem:[%s1106 + $0x10] sm:$0xf]
        %v3631 = vld [vmem:[%s1106 + $0x14] sm:$0xf]
        %v3632 = vld [vmem:[%s1106 + $0x18] sm:$0xf]
        %v3633 = vld [vmem:[%s1106 + $0x1c] sm:$0xf]
        %v3634 = vld [vmem:[%s1106 + $0x20] sm:$0xf]
        %v3635 = vld [vmem:[%s1106 + $0x24] sm:$0xf]
        %v3636 = vld [vmem:[%s1106 + $0x28] sm:$0xf]
        %v3637 = vld [vmem:[%s1106 + $0x2c] sm:$0xf]
        %v3638 = vld [vmem:[%s1106 + $0x30] sm:$0xf]
        %v3639 = vld [vmem:[%s1106 + $0x34] sm:$0xf]
        %v3640 = vld [vmem:[%s1106 + $0x38] sm:$0xf]
        %v3641 = vld [vmem:[%s1106 + $0x3c] sm:$0xf]
        %v3642 = vld [vmem:[%s45] sm:$0xf]
        %v3643 = vld [vmem:[%s45 + $0x4] sm:$0xf]
        %v3644 = vld [vmem:[%s45 + $0x8] sm:$0xf]
        %v3645 = vld [vmem:[%s45 + $0xc] sm:$0xf]
        %v3646 = vld [vmem:[%s1112] sm:$0xf]
        %v3647 = vld [vmem:[%s1112 + $0x4] sm:$0xf]
        %v3648 = vld [vmem:[%s1112 + $0x8] sm:$0xf]
        %v3649 = vld [vmem:[%s1112 + $0xc] sm:$0xf]
        %v3650 = vld [vmem:[%s1112 + $0x10] sm:$0xf]
        %v3651 = vld [vmem:[%s1112 + $0x14] sm:$0xf]
        %v3652 = vld [vmem:[%s1112 + $0x18] sm:$0xf]
        %v3653 = vld [vmem:[%s1112 + $0x1c] sm:$0xf]
        %v3654 = vld [vmem:[%s1112 + $0x20] sm:$0xf]
        %v3655 = vld [vmem:[%s1112 + $0x24] sm:$0xf]
        %v3656 = vld [vmem:[%s1112 + $0x28] sm:$0xf]
        %v3657 = vld [vmem:[%s1112 + $0x2c] sm:$0xf]
        %v3658 = vld [vmem:[%s1112 + $0x30] sm:$0xf]
        %v3659 = vld [vmem:[%s1112 + $0x34] sm:$0xf]
        %v3660 = vld [vmem:[%s1112 + $0x38] sm:$0xf]
        %v3661 = vld [vmem:[%s1112 + $0x3c] sm:$0xf]
        %v3662 = vld [vmem:[%s47] sm:$0xf]
        %v3663 = vld [vmem:[%s47 + $0x4] sm:$0xf]
        %v3664 = vld [vmem:[%s47 + $0x8] sm:$0xf]
        %v3665 = vld [vmem:[%s47 + $0xc] sm:$0xf]
        %v3682 = vunpack.c.l.b16 %v3646
        %v3683 = vunpack.c.l.b16 %v3647
        %v3684 = vunpack.c.l.b16 %v3648
        %v3685 = vunpack.c.l.b16 %v3649
        %v3686 = vunpack.c.l.b16 %v3650
        %v3687 = vunpack.c.l.b16 %v3651
        %v3688 = vunpack.c.l.b16 %v3652
        %v3689 = vunpack.c.l.b16 %v3653
        %v3690 = vunpack.c.l.b16 %v3654
        %v3691 = vunpack.c.l.b16 %v3655
        %v3692 = vunpack.c.l.b16 %v3656
        %v3693 = vunpack.c.l.b16 %v3657
        %v3694 = vunpack.c.l.b16 %v3658
        %v3695 = vunpack.c.l.b16 %v3659
        %v3696 = vunpack.c.l.b16 %v3660
        %v3697 = vunpack.c.l.b16 %v3661
        %v3698 = vpack.c.b16 %v3683, %v3682
        %v3699 = vpack.c.b16 %v3685, %v3684
        %v3700 = vpack.c.b16 %v3687, %v3686
        %v3701 = vpack.c.b16 %v3689, %v3688
        %v3702 = vpack.c.b16 %v3691, %v3690
        %v3703 = vpack.c.b16 %v3693, %v3692
        %v3704 = vpack.c.b16 %v3695, %v3694
        %v3705 = vpack.c.b16 %v3697, %v3696
        %v3710 = vunpack.c.l.b16 %v3662
        %v3711 = vunpack.c.l.b16 %v3663
        %v3712 = vunpack.c.l.b16 %v3664
        %v3713 = vunpack.c.l.b16 %v3665
        %v3714 = vpack.c.b16 %v3711, %v3710
        %v3715 = vpack.c.b16 %v3713, %v3712
        %v3719 = vsel %vm1325, %v3698, 0
        %v3722 = vsel %vm1325, %v3699, 0
        %v3725 = vsel %vm1325, %v3700, 0
        %v3728 = vsel %vm1325, %v3701, 0
        %v3731 = vsel %vm1325, %v3702, 0
        %v3734 = vsel %vm1325, %v3703, 0
        %v3737 = vsel %vm1325, %v3704, 0
        %v3740 = vsel %vm1325, %v3705, 0
        %3742 = vmatprep.subr.bf16.mxu0 0
        %3743 = vmatpush1.bf16.msra.mxu0 0
        %3744 = vmatprep.subr.bf16.mxu0 0
        %3745 = vmatpush1.bf16.msra.mxu0 0
        %3746 = vmatprep.subr.bf16.mxu0 0
        %3747 = vmatpush1.bf16.msra.mxu0 0
        %3748 = vmatprep.subr.bf16.mxu0 0
        %3749 = vmatpush1.bf16.msra.mxu0 0
        %3750 = vmatprep.subr.bf16.mxu0 0
        %3751 = vmatpush1.bf16.msra.mxu0 0
        %3752 = vmatprep.subr.bf16.mxu0 0
        %3753 = vmatpush1.bf16.msra.mxu0 0
        %3754 = vmatprep.subr.bf16.mxu0 0
        %3755 = vmatpush1.bf16.msra.mxu0 %v3715
        %3756 = vmatprep.subr.bf16.mxu0 0
        %3757 = vmatpush1.bf16.msra.mxu0 %v3714
        %3758 = vmatprep.subr.bf16.mxu0 0
        %3759 = vmatpush2.bf16.msra.mxu0 0
        %3760 = vmatprep.subr.bf16.mxu0 0
        %3761 = vmatpush2.bf16.msra.mxu0 0
        %3762 = vmatprep.subr.bf16.mxu0 0
        %3763 = vmatpush2.bf16.msra.mxu0 0
        %3764 = vmatprep.subr.bf16.mxu0 0
        %3765 = vmatpush2.bf16.msra.mxu0 0
        %3766 = vmatprep.subr.bf16.mxu0 0
        %3767 = vmatpush2.bf16.msra.mxu0 0
        %3768 = vmatprep.subr.bf16.mxu0 0
        %3769 = vmatpush2.bf16.msra.mxu0 0
        %3770 = vmatprep.subr.bf16.mxu0 0
        %3771 = vmatpush2.bf16.msra.mxu0 0
        %3772 = vmatprep.subr.bf16.mxu0 0
        %3773 = vmatpush2.bf16.msra.mxu0 0
        %3774 = vmatprep.mubr.bf16.mxu0 0
        %3775 = vmatmul.mubr.bf16.gmra.mxu0 %v3719
        %v3776 = vpop.f32.mrf.mxu0
        %v3777 = vadd.f32 0.0, %v3776
        %v3778 = vpop.f32.mrf.mxu0
        %v3779 = vpop.f32.mrf.mxu0
        %v3780 = vadd.f32 0.0, %v3779
        %v3781 = vpop.f32.mrf.mxu0
        %3782 = vmatprep.mubr.bf16.mxu0 0
        %3783 = vmatmul.mubr.bf16.gmra.mxu0 %v3722
        %v3784 = vpop.f32.mrf.mxu0
        %v3785 = vadd.f32 0.0, %v3784
        %v3786 = vpop.f32.mrf.mxu0
        %v3787 = vpop.f32.mrf.mxu0
        %v3788 = vadd.f32 0.0, %v3787
        %v3789 = vpop.f32.mrf.mxu0
        %3790 = vmatprep.mubr.bf16.mxu0 0
        %3791 = vmatmul.mubr.bf16.gmra.mxu0 %v3725
        %v3792 = vpop.f32.mrf.mxu0
        %v3793 = vadd.f32 0.0, %v3792
        %v3794 = vpop.f32.mrf.mxu0
        %v3795 = vpop.f32.mrf.mxu0
        %v3796 = vadd.f32 0.0, %v3795
        %v3797 = vpop.f32.mrf.mxu0
        %3798 = vmatprep.mubr.bf16.mxu0 0
        %3799 = vmatmul.mubr.bf16.gmra.mxu0 %v3728
        %v3800 = vpop.f32.mrf.mxu0
        %v3801 = vadd.f32 0.0, %v3800
        %v3802 = vpop.f32.mrf.mxu0
        %v3803 = vpop.f32.mrf.mxu0
        %v3804 = vadd.f32 0.0, %v3803
        %v3805 = vpop.f32.mrf.mxu0
        %3806 = vmatprep.mubr.bf16.mxu0 0
        %3807 = vmatmul.mubr.bf16.gmra.mxu0 %v3731
        %v3808 = vpop.f32.mrf.mxu0
        %v3809 = vadd.f32 0.0, %v3808
        %v3810 = vpop.f32.mrf.mxu0
        %v3811 = vpop.f32.mrf.mxu0
        %v3812 = vadd.f32 0.0, %v3811
        %v3813 = vpop.f32.mrf.mxu0
        %3814 = vmatprep.mubr.bf16.mxu0 0
        %3815 = vmatmul.mubr.bf16.gmra.mxu0 %v3734
        %v3816 = vpop.f32.mrf.mxu0
        %v3817 = vadd.f32 0.0, %v3816
        %v3818 = vpop.f32.mrf.mxu0
        %v3819 = vpop.f32.mrf.mxu0
        %v3820 = vadd.f32 0.0, %v3819
        %v3821 = vpop.f32.mrf.mxu0
        %3822 = vmatprep.mubr.bf16.mxu0 0
        %3823 = vmatmul.mubr.bf16.gmra.mxu0 %v3737
        %v3824 = vpop.f32.mrf.mxu0
        %v3825 = vadd.f32 0.0, %v3824
        %v3826 = vpop.f32.mrf.mxu0
        %v3827 = vpop.f32.mrf.mxu0
        %v3828 = vadd.f32 0.0, %v3827
        %v3829 = vpop.f32.mrf.mxu0
        %3830 = vmatprep.mubr.bf16.mxu0 0
        %3831 = vmatmul.mubr.bf16.gmra.mxu0 %v3740
        %v3832 = vpop.f32.mrf.mxu0
        %v3833 = vadd.f32 0.0, %v3832
        %v3834 = vpop.f32.mrf.mxu0
        %v3835 = vpop.f32.mrf.mxu0
        %v3836 = vadd.f32 0.0, %v3835
        %v3837 = vpop.f32.mrf.mxu0
        %3838 = vdwg.mxu0
        %v3855 = vunpack.c.l.b16 %v3626
        %v3856 = vunpack.c.l.b16 %v3627
        %v3857 = vunpack.c.l.b16 %v3628
        %v3858 = vunpack.c.l.b16 %v3629
        %v3859 = vunpack.c.l.b16 %v3630
        %v3860 = vunpack.c.l.b16 %v3631
        %v3861 = vunpack.c.l.b16 %v3632
        %v3862 = vunpack.c.l.b16 %v3633
        %v3863 = vunpack.c.l.b16 %v3634
        %v3864 = vunpack.c.l.b16 %v3635
        %v3865 = vunpack.c.l.b16 %v3636
        %v3866 = vunpack.c.l.b16 %v3637
        %v3867 = vunpack.c.l.b16 %v3638
        %v3868 = vunpack.c.l.b16 %v3639
        %v3869 = vunpack.c.l.b16 %v3640
        %v3870 = vunpack.c.l.b16 %v3641
        %v3871 = vpack.c.b16 %v3856, %v3855
        %v3872 = vpack.c.b16 %v3858, %v3857
        %v3873 = vpack.c.b16 %v3860, %v3859
        %v3874 = vpack.c.b16 %v3862, %v3861
        %v3875 = vpack.c.b16 %v3864, %v3863
        %v3876 = vpack.c.b16 %v3866, %v3865
        %v3877 = vpack.c.b16 %v3868, %v3867
        %v3878 = vpack.c.b16 %v3870, %v3869
        %v3883 = vunpack.c.l.b16 %v3642
        %v3884 = vunpack.c.l.b16 %v3643
        %v3885 = vunpack.c.l.b16 %v3644
        %v3886 = vunpack.c.l.b16 %v3645
        %v3887 = vpack.c.b16 %v3884, %v3883
        %v3888 = vpack.c.b16 %v3886, %v3885
        %v3892 = vsel %vm1325, %v3871, 0
        %v3895 = vsel %vm1325, %v3872, 0
        %v3898 = vsel %vm1325, %v3873, 0
        %v3901 = vsel %vm1325, %v3874, 0
        %v3904 = vsel %vm1325, %v3875, 0
        %v3907 = vsel %vm1325, %v3876, 0
        %v3910 = vsel %vm1325, %v3877, 0
        %v3913 = vsel %vm1325, %v3878, 0
        %3915 = vmatprep.subr.bf16.mxu0 0
        %3916 = vmatpush1.bf16.msra.mxu0 0
        %3917 = vmatprep.subr.bf16.mxu0 0
        %3918 = vmatpush1.bf16.msra.mxu0 0
        %3919 = vmatprep.subr.bf16.mxu0 0
        %3920 = vmatpush1.bf16.msra.mxu0 0
        %3921 = vmatprep.subr.bf16.mxu0 0
        %3922 = vmatpush1.bf16.msra.mxu0 0
        %3923 = vmatprep.subr.bf16.mxu0 0
        %3924 = vmatpush1.bf16.msra.mxu0 0
        %3925 = vmatprep.subr.bf16.mxu0 0
        %3926 = vmatpush1.bf16.msra.mxu0 0
        %3927 = vmatprep.subr.bf16.mxu0 0
        %3928 = vmatpush1.bf16.msra.mxu0 %v3888
        %3929 = vmatprep.subr.bf16.mxu0 0
        %3930 = vmatpush1.bf16.msra.mxu0 %v3887
        %3931 = vmatprep.subr.bf16.mxu0 0
        %3932 = vmatpush2.bf16.msra.mxu0 0
        %3933 = vmatprep.subr.bf16.mxu0 0
        %3934 = vmatpush2.bf16.msra.mxu0 0
        %3935 = vmatprep.subr.bf16.mxu0 0
        %3936 = vmatpush2.bf16.msra.mxu0 0
        %3937 = vmatprep.subr.bf16.mxu0 0
        %3938 = vmatpush2.bf16.msra.mxu0 0
        %3939 = vmatprep.subr.bf16.mxu0 0
        %3940 = vmatpush2.bf16.msra.mxu0 0
        %3941 = vmatprep.subr.bf16.mxu0 0
        %3942 = vmatpush2.bf16.msra.mxu0 0
        %3943 = vmatprep.subr.bf16.mxu0 0
        %3944 = vmatpush2.bf16.msra.mxu0 0
        %3945 = vmatprep.subr.bf16.mxu0 0
        %3946 = vmatpush2.bf16.msra.mxu0 0
        %3947 = vmatprep.mubr.bf16.mxu0 0
        %3948 = vmatmul.mubr.bf16.gmra.mxu0 %v3892
        %v3949 = vpop.f32.mrf.mxu0
        %v3950 = vadd.f32 %v3777, %v3949
        %v3951 = vpop.f32.mrf.mxu0
        %v3952 = vpop.f32.mrf.mxu0
        %v3953 = vadd.f32 %v3780, %v3952
        %v3954 = vpop.f32.mrf.mxu0
        %3955 = vmatprep.mubr.bf16.mxu0 0
        %3956 = vmatmul.mubr.bf16.gmra.mxu0 %v3895
        %v3957 = vpop.f32.mrf.mxu0
        %v3958 = vadd.f32 %v3785, %v3957
        %v3959 = vpop.f32.mrf.mxu0
        %v3960 = vpop.f32.mrf.mxu0
        %v3961 = vadd.f32 %v3788, %v3960
        %v3962 = vpop.f32.mrf.mxu0
        %3963 = vmatprep.mubr.bf16.mxu0 0
        %3964 = vmatmul.mubr.bf16.gmra.mxu0 %v3898
        %v3965 = vpop.f32.mrf.mxu0
        %v3966 = vadd.f32 %v3793, %v3965
        %v3967 = vpop.f32.mrf.mxu0
        %v3968 = vpop.f32.mrf.mxu0
        %v3969 = vadd.f32 %v3796, %v3968
        %v3970 = vpop.f32.mrf.mxu0
        %3971 = vmatprep.mubr.bf16.mxu0 0
        %3972 = vmatmul.mubr.bf16.gmra.mxu0 %v3901
        %v3973 = vpop.f32.mrf.mxu0
        %v3974 = vadd.f32 %v3801, %v3973
        %v3975 = vpop.f32.mrf.mxu0
        %v3976 = vpop.f32.mrf.mxu0
        %v3977 = vadd.f32 %v3804, %v3976
        %v3978 = vpop.f32.mrf.mxu0
        %3979 = vmatprep.mubr.bf16.mxu0 0
        %3980 = vmatmul.mubr.bf16.gmra.mxu0 %v3904
        %v3981 = vpop.f32.mrf.mxu0
        %v3982 = vadd.f32 %v3809, %v3981
        %v3983 = vpop.f32.mrf.mxu0
        %v3984 = vpop.f32.mrf.mxu0
        %v3985 = vadd.f32 %v3812, %v3984
        %v3986 = vpop.f32.mrf.mxu0
        %3987 = vmatprep.mubr.bf16.mxu0 0
        %3988 = vmatmul.mubr.bf16.gmra.mxu0 %v3907
        %v3989 = vpop.f32.mrf.mxu0
        %v3990 = vadd.f32 %v3817, %v3989
        %v3991 = vpop.f32.mrf.mxu0
        %v3992 = vpop.f32.mrf.mxu0
        %v3993 = vadd.f32 %v3820, %v3992
        %v3994 = vpop.f32.mrf.mxu0
        %3995 = vmatprep.mubr.bf16.mxu0 0
        %3996 = vmatmul.mubr.bf16.gmra.mxu0 %v3910
        %v3997 = vpop.f32.mrf.mxu0
        %v3998 = vadd.f32 %v3825, %v3997
        %v3999 = vpop.f32.mrf.mxu0
        %v4000 = vpop.f32.mrf.mxu0
        %v4001 = vadd.f32 %v3828, %v4000
        %v4002 = vpop.f32.mrf.mxu0
        %4003 = vmatprep.mubr.bf16.mxu0 0
        %4004 = vmatmul.mubr.bf16.gmra.mxu0 %v3913
        %v4005 = vpop.f32.mrf.mxu0
        %v4006 = vadd.f32 %v3833, %v4005
        %v4007 = vpop.f32.mrf.mxu0
        %v4008 = vpop.f32.mrf.mxu0
        %v4009 = vadd.f32 %v3836, %v4008
        %v4010 = vpop.f32.mrf.mxu0
        %4011 = vdwg.mxu0
        %v4012 = vpack.c.bf16 %v2712, %v2711
        %v4013 = vpack.c.bf16 %v2714, %v2713
        %v4014 = vpack.c.bf16 %v2716, %v2715
        %v4015 = vpack.c.bf16 %v2718, %v2717
        %v4016 = vpack.c.bf16 %v2720, %v2719
        %v4017 = vpack.c.bf16 %v2722, %v2721
        %v4018 = vpack.c.bf16 %v2724, %v2723
        %v4019 = vpack.c.bf16 %v2726, %v2725
        %v4020 = vld [vmem:[%s49] sm:$0xf]
        %v4021 = vld [vmem:[%s49 + $0x4] sm:$0xf]
        %v4022 = vld [vmem:[%s49 + $0x8] sm:$0xf]
        %v4023 = vld [vmem:[%s49 + $0xc] sm:$0xf]
        %v4028 = vunpack.c.l.b16 %v4020
        %v4029 = vunpack.c.l.b16 %v4021
        %v4030 = vunpack.c.l.b16 %v4022
        %v4031 = vunpack.c.l.b16 %v4023
        %v4032 = vpack.c.b16 %v4029, %v4028
        %v4033 = vpack.c.b16 %v4031, %v4030
        %v4037 = vsel %vm1325, %v4012, 0
        %v4040 = vsel %vm1325, %v4013, 0
        %v4043 = vsel %vm1325, %v4014, 0
        %v4046 = vsel %vm1325, %v4015, 0
        %v4049 = vsel %vm1325, %v4016, 0
        %v4052 = vsel %vm1325, %v4017, 0
        %v4055 = vsel %vm1325, %v4018, 0
        %v4058 = vsel %vm1325, %v4019, 0
        %4060 = vmatprep.subr.bf16.mxu0 0
        %4061 = vmatpush1.bf16.msra.mxu0 0
        %4062 = vmatprep.subr.bf16.mxu0 0
        %4063 = vmatpush1.bf16.msra.mxu0 0
        %4064 = vmatprep.subr.bf16.mxu0 0
        %4065 = vmatpush1.bf16.msra.mxu0 0
        %4066 = vmatprep.subr.bf16.mxu0 0
        %4067 = vmatpush1.bf16.msra.mxu0 0
        %4068 = vmatprep.subr.bf16.mxu0 0
        %4069 = vmatpush1.bf16.msra.mxu0 0
        %4070 = vmatprep.subr.bf16.mxu0 0
        %4071 = vmatpush1.bf16.msra.mxu0 0
        %4072 = vmatprep.subr.bf16.mxu0 0
        %4073 = vmatpush1.bf16.msra.mxu0 %v4033
        %4074 = vmatprep.subr.bf16.mxu0 0
        %4075 = vmatpush1.bf16.msra.mxu0 %v4032
        %4076 = vmatprep.subr.bf16.mxu0 0
        %4077 = vmatpush2.bf16.msra.mxu0 0
        %4078 = vmatprep.subr.bf16.mxu0 0
        %4079 = vmatpush2.bf16.msra.mxu0 0
        %4080 = vmatprep.subr.bf16.mxu0 0
        %4081 = vmatpush2.bf16.msra.mxu0 0
        %4082 = vmatprep.subr.bf16.mxu0 0
        %4083 = vmatpush2.bf16.msra.mxu0 0
        %4084 = vmatprep.subr.bf16.mxu0 0
        %4085 = vmatpush2.bf16.msra.mxu0 0
        %4086 = vmatprep.subr.bf16.mxu0 0
        %4087 = vmatpush2.bf16.msra.mxu0 0
        %4088 = vmatprep.subr.bf16.mxu0 0
        %4089 = vmatpush2.bf16.msra.mxu0 0
        %4090 = vmatprep.subr.bf16.mxu0 0
        %4091 = vmatpush2.bf16.msra.mxu0 0
        %4092 = vmatprep.mubr.bf16.mxu0 0
        %4093 = vmatmul.mubr.bf16.gmra.mxu0 %v4037
        %v4094 = vpop.f32.mrf.mxu0
        %v4095 = vadd.f32 0.0, %v4094
        %v4096 = vpop.f32.mrf.mxu0
        %v4097 = vpop.f32.mrf.mxu0
        %v4098 = vadd.f32 0.0, %v4097
        %v4099 = vpop.f32.mrf.mxu0
        %4100 = vmatprep.mubr.bf16.mxu0 0
        %4101 = vmatmul.mubr.bf16.gmra.mxu0 %v4040
        %v4102 = vpop.f32.mrf.mxu0
        %v4103 = vadd.f32 0.0, %v4102
        %v4104 = vpop.f32.mrf.mxu0
        %v4105 = vpop.f32.mrf.mxu0
        %v4106 = vadd.f32 0.0, %v4105
        %v4107 = vpop.f32.mrf.mxu0
        %4108 = vmatprep.mubr.bf16.mxu0 0
        %4109 = vmatmul.mubr.bf16.gmra.mxu0 %v4043
        %v4110 = vpop.f32.mrf.mxu0
        %v4111 = vadd.f32 0.0, %v4110
        %v4112 = vpop.f32.mrf.mxu0
        %v4113 = vpop.f32.mrf.mxu0
        %v4114 = vadd.f32 0.0, %v4113
        %v4115 = vpop.f32.mrf.mxu0
        %4116 = vmatprep.mubr.bf16.mxu0 0
        %4117 = vmatmul.mubr.bf16.gmra.mxu0 %v4046
        %v4118 = vpop.f32.mrf.mxu0
        %v4119 = vadd.f32 0.0, %v4118
        %v4120 = vpop.f32.mrf.mxu0
        %v4121 = vpop.f32.mrf.mxu0
        %v4122 = vadd.f32 0.0, %v4121
        %v4123 = vpop.f32.mrf.mxu0
        %4124 = vmatprep.mubr.bf16.mxu0 0
        %4125 = vmatmul.mubr.bf16.gmra.mxu0 %v4049
        %v4126 = vpop.f32.mrf.mxu0
        %v4127 = vadd.f32 0.0, %v4126
        %v4128 = vpop.f32.mrf.mxu0
        %v4129 = vpop.f32.mrf.mxu0
        %v4130 = vadd.f32 0.0, %v4129
        %v4131 = vpop.f32.mrf.mxu0
        %4132 = vmatprep.mubr.bf16.mxu0 0
        %4133 = vmatmul.mubr.bf16.gmra.mxu0 %v4052
        %v4134 = vpop.f32.mrf.mxu0
        %v4135 = vadd.f32 0.0, %v4134
        %v4136 = vpop.f32.mrf.mxu0
        %v4137 = vpop.f32.mrf.mxu0
        %v4138 = vadd.f32 0.0, %v4137
        %v4139 = vpop.f32.mrf.mxu0
        %4140 = vmatprep.mubr.bf16.mxu0 0
        %4141 = vmatmul.mubr.bf16.gmra.mxu0 %v4055
        %v4142 = vpop.f32.mrf.mxu0
        %v4143 = vadd.f32 0.0, %v4142
        %v4144 = vpop.f32.mrf.mxu0
        %v4145 = vpop.f32.mrf.mxu0
        %v4146 = vadd.f32 0.0, %v4145
        %v4147 = vpop.f32.mrf.mxu0
        %4148 = vmatprep.mubr.bf16.mxu0 0
        %4149 = vmatmul.mubr.bf16.gmra.mxu0 %v4058
        %v4150 = vpop.f32.mrf.mxu0
        %v4151 = vadd.f32 0.0, %v4150
        %v4152 = vpop.f32.mrf.mxu0
        %v4153 = vpop.f32.mrf.mxu0
        %v4154 = vadd.f32 0.0, %v4153
        %v4155 = vpop.f32.mrf.mxu0
        %4156 = vdwg.mxu0
        %v4157 = vadd.f32 %v3950, %v4095
        %v4158 = vadd.f32 %v3953, %v4098
        %v4159 = vadd.f32 %v3958, %v4103
        %v4160 = vadd.f32 %v3961, %v4106
        %v4161 = vadd.f32 %v3966, %v4111
        %v4162 = vadd.f32 %v3969, %v4114
        %v4163 = vadd.f32 %v3974, %v4119
        %v4164 = vadd.f32 %v3977, %v4122
        %v4165 = vadd.f32 %v3982, %v4127
        %v4166 = vadd.f32 %v3985, %v4130
        %v4167 = vadd.f32 %v3990, %v4135
        %v4168 = vadd.f32 %v3993, %v4138
        %v4169 = vadd.f32 %v3998, %v4143
        %v4170 = vadd.f32 %v4001, %v4146
        %v4171 = vadd.f32 %v4006, %v4151
        %v4172 = vadd.f32 %v4009, %v4154
        %v4173 = vld [vmem:[%s51] sm:$0x1]
        %v4175 = vlaneseq
        %v4176 = vshrl.u32 %v4175, 7
        %v4177 = vsub.s32 0, %v4176
        %v4178 = vrot.slane %v4173, %v4177
        %v4180 = vmul.f32 %v3595, %v4178
        %v4181 = vmul.f32 %v3597, %v4178
        %v4182 = vmul.f32 %v3599, %v4178
        %v4183 = vmul.f32 %v3601, %v4178
        %v4184 = vmul.f32 %v3603, %v4178
        %v4185 = vmul.f32 %v3605, %v4178
        %v4186 = vmul.f32 %v3607, %v4178
        %v4187 = vmul.f32 %v3609, %v4178
        %v4188 = vmul.f32 %v3611, %v4178
        %v4189 = vmul.f32 %v3613, %v4178
        %v4190 = vmul.f32 %v3615, %v4178
        %v4191 = vmul.f32 %v3617, %v4178
        %v4192 = vmul.f32 %v3619, %v4178
        %v4193 = vmul.f32 %v3621, %v4178
        %v4194 = vmul.f32 %v3623, %v4178
        %v4195 = vmul.f32 %v3625, %v4178
        %v4196 = vadd.f32 %v4157, %v4180
        %v4197 = vadd.f32 %v4158, %v4181
        %v4198 = vadd.f32 %v4159, %v4182
        %v4199 = vadd.f32 %v4160, %v4183
        %v4200 = vadd.f32 %v4161, %v4184
        %v4201 = vadd.f32 %v4162, %v4185
        %v4202 = vadd.f32 %v4163, %v4186
        %v4203 = vadd.f32 %v4164, %v4187
        %v4204 = vadd.f32 %v4165, %v4188
        %v4205 = vadd.f32 %v4166, %v4189
        %v4206 = vadd.f32 %v4167, %v4190
        %v4207 = vadd.f32 %v4168, %v4191
        %v4208 = vadd.f32 %v4169, %v4192
        %v4209 = vadd.f32 %v4170, %v4193
        %v4210 = vadd.f32 %v4171, %v4194
        %v4211 = vadd.f32 %v4172, %v4195
        %v4212 = vld [vmem:[%s53] sm:$0x1]
        %4214 = vset.pattern.permute.xlu0 0
        %4215 = vperm.xlu0 %4214, %v2808
        %v4216 = vpop.permute.xlu0 %4215
        %4219 = vset.pattern.permute.xlu0 0
        %4220 = vperm.xlu0 %4219, %v2810
        %v4221 = vpop.permute.xlu0 %4220
        %4224 = vset.pattern.permute.xlu0 0
        %4225 = vperm.xlu0 %4224, %v2812
        %v4226 = vpop.permute.xlu0 %4225
        %4229 = vset.pattern.permute.xlu0 0
        %4230 = vperm.xlu0 %4229, %v2814
        %v4231 = vpop.permute.xlu0 %4230
        %4234 = vset.pattern.permute.xlu0 0
        %4235 = vperm.xlu0 %4234, %v2816
        %v4236 = vpop.permute.xlu0 %4235
        %4239 = vset.pattern.permute.xlu0 0
        %4240 = vperm.xlu0 %4239, %v2818
        %v4241 = vpop.permute.xlu0 %4240
        %4244 = vset.pattern.permute.xlu0 0
        %4245 = vperm.xlu0 %4244, %v2820
        %v4246 = vpop.permute.xlu0 %4245
        %4249 = vset.pattern.permute.xlu0 0
        %4250 = vperm.xlu0 %4249, %v2822
        %v4251 = vpop.permute.xlu0 %4250
        %4254 = vset.pattern.permute.xlu0 0
        %4255 = vperm.xlu0 %4254, %v2824
        %v4256 = vpop.permute.xlu0 %4255
        %4259 = vset.pattern.permute.xlu0 0
        %4260 = vperm.xlu0 %4259, %v2826
        %v4261 = vpop.permute.xlu0 %4260
        %4264 = vset.pattern.permute.xlu0 0
        %4265 = vperm.xlu0 %4264, %v2828
        %v4266 = vpop.permute.xlu0 %4265
        %4269 = vset.pattern.permute.xlu0 0
        %4270 = vperm.xlu0 %4269, %v2830
        %v4271 = vpop.permute.xlu0 %4270
        %4274 = vset.pattern.permute.xlu0 0
        %4275 = vperm.xlu0 %4274, %v2832
        %v4276 = vpop.permute.xlu0 %4275
        %4279 = vset.pattern.permute.xlu0 0
        %4280 = vperm.xlu0 %4279, %v2834
        %v4281 = vpop.permute.xlu0 %4280
        %4284 = vset.pattern.permute.xlu0 0
        %4285 = vperm.xlu0 %4284, %v2836
        %v4286 = vpop.permute.xlu0 %4285
        %4289 = vset.pattern.permute.xlu0 0
        %4290 = vperm.xlu0 %4289, %v2838
        %v4291 = vpop.permute.xlu0 %4290
        %v4294 = vlaneseq
        %v4295 = vshrl.u32 %v4294, 7
        %v4296 = vsub.s32 0, %v4295
        %v4297 = vrot.slane %v4212, %v4296
        %v4299 = vmul.f32 %v4216, %v4297
        %v4300 = vmul.f32 %v4221, %v4297
        %v4301 = vmul.f32 %v4226, %v4297
        %v4302 = vmul.f32 %v4231, %v4297
        %v4303 = vmul.f32 %v4236, %v4297
        %v4304 = vmul.f32 %v4241, %v4297
        %v4305 = vmul.f32 %v4246, %v4297
        %v4306 = vmul.f32 %v4251, %v4297
        %v4307 = vmul.f32 %v4256, %v4297
        %v4308 = vmul.f32 %v4261, %v4297
        %v4309 = vmul.f32 %v4266, %v4297
        %v4310 = vmul.f32 %v4271, %v4297
        %v4311 = vmul.f32 %v4276, %v4297
        %v4312 = vmul.f32 %v4281, %v4297
        %v4313 = vmul.f32 %v4286, %v4297
        %v4314 = vmul.f32 %v4291, %v4297
        %v4315 = vadd.f32 %v4196, %v4299
        %v4316 = vadd.f32 %v4197, %v4300
        %v4317 = vadd.f32 %v4198, %v4301
        %v4318 = vadd.f32 %v4199, %v4302
        %v4319 = vadd.f32 %v4200, %v4303
        %v4320 = vadd.f32 %v4201, %v4304
        %v4321 = vadd.f32 %v4202, %v4305
        %v4322 = vadd.f32 %v4203, %v4306
        %v4323 = vadd.f32 %v4204, %v4307
        %v4324 = vadd.f32 %v4205, %v4308
        %v4325 = vadd.f32 %v4206, %v4309
        %v4326 = vadd.f32 %v4207, %v4310
        %v4327 = vadd.f32 %v4208, %v4311
        %v4328 = vadd.f32 %v4209, %v4312
        %v4329 = vadd.f32 %v4210, %v4313
        %v4330 = vadd.f32 %v4211, %v4314
        %v4331 = vld [vmem:[%s55] sm:$0x1]
        %4332 = vset.pattern.permute.xlu0 1
        %4333 = vperm.xlu0 %4332, %v2808
        %v4334 = vpop.permute.xlu0 %4333
        %4336 = vset.pattern.permute.xlu0 1
        %4337 = vperm.xlu0 %4336, %v2810
        %v4338 = vpop.permute.xlu0 %4337
        %4340 = vset.pattern.permute.xlu0 1
        %4341 = vperm.xlu0 %4340, %v2812
        %v4342 = vpop.permute.xlu0 %4341
        %4344 = vset.pattern.permute.xlu0 1
        %4345 = vperm.xlu0 %4344, %v2814
        %v4346 = vpop.permute.xlu0 %4345
        %4348 = vset.pattern.permute.xlu0 1
        %4349 = vperm.xlu0 %4348, %v2816
        %v4350 = vpop.permute.xlu0 %4349
        %4352 = vset.pattern.permute.xlu0 1
        %4353 = vperm.xlu0 %4352, %v2818
        %v4354 = vpop.permute.xlu0 %4353
        %4356 = vset.pattern.permute.xlu0 1
        %4357 = vperm.xlu0 %4356, %v2820
        %v4358 = vpop.permute.xlu0 %4357
        %4360 = vset.pattern.permute.xlu0 1
        %4361 = vperm.xlu0 %4360, %v2822
        %v4362 = vpop.permute.xlu0 %4361
        %4364 = vset.pattern.permute.xlu0 1
        %4365 = vperm.xlu0 %4364, %v2824
        %v4366 = vpop.permute.xlu0 %4365
        %4368 = vset.pattern.permute.xlu0 1
        %4369 = vperm.xlu0 %4368, %v2826
        %v4370 = vpop.permute.xlu0 %4369
        %4372 = vset.pattern.permute.xlu0 1
        %4373 = vperm.xlu0 %4372, %v2828
        %v4374 = vpop.permute.xlu0 %4373
        %4376 = vset.pattern.permute.xlu0 1
        %4377 = vperm.xlu0 %4376, %v2830
        %v4378 = vpop.permute.xlu0 %4377
        %4380 = vset.pattern.permute.xlu0 1
        %4381 = vperm.xlu0 %4380, %v2832
        %v4382 = vpop.permute.xlu0 %4381
        %4384 = vset.pattern.permute.xlu0 1
        %4385 = vperm.xlu0 %4384, %v2834
        %v4386 = vpop.permute.xlu0 %4385
        %4388 = vset.pattern.permute.xlu0 1
        %4389 = vperm.xlu0 %4388, %v2836
        %v4390 = vpop.permute.xlu0 %4389
        %4392 = vset.pattern.permute.xlu0 1
        %4393 = vperm.xlu0 %4392, %v2838
        %v4394 = vpop.permute.xlu0 %4393
        %v4397 = vlaneseq
        %v4398 = vshrl.u32 %v4397, 7
        %v4399 = vsub.s32 0, %v4398
        %v4400 = vrot.slane %v4331, %v4399
        %v4402 = vmul.f32 %v4334, %v4400
        %v4403 = vmul.f32 %v4338, %v4400
        %v4404 = vmul.f32 %v4342, %v4400
        %v4405 = vmul.f32 %v4346, %v4400
        %v4406 = vmul.f32 %v4350, %v4400
        %v4407 = vmul.f32 %v4354, %v4400
        %v4408 = vmul.f32 %v4358, %v4400
        %v4409 = vmul.f32 %v4362, %v4400
        %v4410 = vmul.f32 %v4366, %v4400
        %v4411 = vmul.f32 %v4370, %v4400
        %v4412 = vmul.f32 %v4374, %v4400
        %v4413 = vmul.f32 %v4378, %v4400
        %v4414 = vmul.f32 %v4382, %v4400
        %v4415 = vmul.f32 %v4386, %v4400
        %v4416 = vmul.f32 %v4390, %v4400
        %v4417 = vmul.f32 %v4394, %v4400
        %v4418 = vadd.f32 %v4315, %v4402
        %v4419 = vadd.f32 %v4316, %v4403
        %v4420 = vadd.f32 %v4317, %v4404
        %v4421 = vadd.f32 %v4318, %v4405
        %v4422 = vadd.f32 %v4319, %v4406
        %v4423 = vadd.f32 %v4320, %v4407
        %v4424 = vadd.f32 %v4321, %v4408
        %v4425 = vadd.f32 %v4322, %v4409
        %v4426 = vadd.f32 %v4323, %v4410
        %v4427 = vadd.f32 %v4324, %v4411
        %v4428 = vadd.f32 %v4325, %v4412
        %v4429 = vadd.f32 %v4326, %v4413
        %v4430 = vadd.f32 %v4327, %v4414
        %v4431 = vadd.f32 %v4328, %v4415
        %v4432 = vadd.f32 %v4329, %v4416
        %v4433 = vadd.f32 %v4330, %v4417
        %v4434 = vld [vmem:[%s57] sm:$0x1]
        %v4436 = vlaneseq
        %v4437 = vshrl.u32 %v4436, 7
        %v4438 = vsub.s32 0, %v4437
        %v4439 = vrot.slane %v4434, %v4438
        %v4441 = vadd.f32 %v4418, %v4439
        %v4442 = vadd.f32 %v4419, %v4439
        %v4443 = vadd.f32 %v4420, %v4439
        %v4444 = vadd.f32 %v4421, %v4439
        %v4445 = vadd.f32 %v4422, %v4439
        %v4446 = vadd.f32 %v4423, %v4439
        %v4447 = vadd.f32 %v4424, %v4439
        %v4448 = vadd.f32 %v4425, %v4439
        %v4449 = vadd.f32 %v4426, %v4439
        %v4450 = vadd.f32 %v4427, %v4439
        %v4451 = vadd.f32 %v4428, %v4439
        %v4452 = vadd.f32 %v4429, %v4439
        %v4453 = vadd.f32 %v4430, %v4439
        %v4454 = vadd.f32 %v4431, %v4439
        %v4455 = vadd.f32 %v4432, %v4439
        %v4456 = vadd.f32 %v4433, %v4439
        %v4457 = vxor.u32 %v4441, 2147483648
        %v4458 = vxor.u32 %v4442, 2147483648
        %v4459 = vxor.u32 %v4443, 2147483648
        %v4460 = vxor.u32 %v4444, 2147483648
        %v4461 = vxor.u32 %v4445, 2147483648
        %v4462 = vxor.u32 %v4446, 2147483648
        %v4463 = vxor.u32 %v4447, 2147483648
        %v4464 = vxor.u32 %v4448, 2147483648
        %v4465 = vxor.u32 %v4449, 2147483648
        %v4466 = vxor.u32 %v4450, 2147483648
        %v4467 = vxor.u32 %v4451, 2147483648
        %v4468 = vxor.u32 %v4452, 2147483648
        %v4469 = vxor.u32 %v4453, 2147483648
        %v4470 = vxor.u32 %v4454, 2147483648
        %v4471 = vxor.u32 %v4455, 2147483648
        %v4472 = vxor.u32 %v4456, 2147483648
        %v4473 = vmul.f32 %v4457, 1.442695
        %v4474 = vpow.pop %v4473
        %v4475 = vmul.f32 %v4458, 1.442695
        %v4476 = vpow.pop %v4475
        %v4477 = vmul.f32 %v4459, 1.442695
        %v4478 = vpow.pop %v4477
        %v4479 = vmul.f32 %v4460, 1.442695
        %v4480 = vpow.pop %v4479
        %v4481 = vmul.f32 %v4461, 1.442695
        %v4482 = vpow.pop %v4481
        %v4483 = vmul.f32 %v4462, 1.442695
        %v4484 = vpow.pop %v4483
        %v4485 = vmul.f32 %v4463, 1.442695
        %v4486 = vpow.pop %v4485
        %v4487 = vmul.f32 %v4464, 1.442695
        %v4488 = vpow.pop %v4487
        %v4489 = vmul.f32 %v4465, 1.442695
        %v4490 = vpow.pop %v4489
        %v4491 = vmul.f32 %v4466, 1.442695
        %v4492 = vpow.pop %v4491
        %v4493 = vmul.f32 %v4467, 1.442695
        %v4494 = vpow.pop %v4493
        %v4495 = vmul.f32 %v4468, 1.442695
        %v4496 = vpow.pop %v4495
        %v4497 = vmul.f32 %v4469, 1.442695
        %v4498 = vpow.pop %v4497
        %v4499 = vmul.f32 %v4470, 1.442695
        %v4500 = vpow.pop %v4499
        %v4501 = vmul.f32 %v4471, 1.442695
        %v4502 = vpow.pop %v4501
        %v4503 = vmul.f32 %v4472, 1.442695
        %v4504 = vpow.pop %v4503
        %v4505 = vadd.f32 %v4474, 1.0
        %v4506 = vadd.f32 %v4476, 1.0
        %v4507 = vadd.f32 %v4478, 1.0
        %v4508 = vadd.f32 %v4480, 1.0
        %v4509 = vadd.f32 %v4482, 1.0
        %v4510 = vadd.f32 %v4484, 1.0
        %v4511 = vadd.f32 %v4486, 1.0
        %v4512 = vadd.f32 %v4488, 1.0
        %v4513 = vadd.f32 %v4490, 1.0
        %v4514 = vadd.f32 %v4492, 1.0
        %v4515 = vadd.f32 %v4494, 1.0
        %v4516 = vadd.f32 %v4496, 1.0
        %v4517 = vadd.f32 %v4498, 1.0
        %v4518 = vadd.f32 %v4500, 1.0
        %v4519 = vadd.f32 %v4502, 1.0
        %v4520 = vadd.f32 %v4504, 1.0
        %v4521 = vrcp.pop %v4505
        %v4522 = vmul.f32 1.0, %v4521
        %v4523 = vrcp.pop %v4506
        %v4524 = vmul.f32 1.0, %v4523
        %v4525 = vrcp.pop %v4507
        %v4526 = vmul.f32 1.0, %v4525
        %v4527 = vrcp.pop %v4508
        %v4528 = vmul.f32 1.0, %v4527
        %v4529 = vrcp.pop %v4509
        %v4530 = vmul.f32 1.0, %v4529
        %v4531 = vrcp.pop %v4510
        %v4532 = vmul.f32 1.0, %v4531
        %v4533 = vrcp.pop %v4511
        %v4534 = vmul.f32 1.0, %v4533
        %v4535 = vrcp.pop %v4512
        %v4536 = vmul.f32 1.0, %v4535
        %v4537 = vrcp.pop %v4513
        %v4538 = vmul.f32 1.0, %v4537
        %v4539 = vrcp.pop %v4514
        %v4540 = vmul.f32 1.0, %v4539
        %v4541 = vrcp.pop %v4515
        %v4542 = vmul.f32 1.0, %v4541
        %v4543 = vrcp.pop %v4516
        %v4544 = vmul.f32 1.0, %v4543
        %v4545 = vrcp.pop %v4517
        %v4546 = vmul.f32 1.0, %v4545
        %v4547 = vrcp.pop %v4518
        %v4548 = vmul.f32 1.0, %v4547
        %v4549 = vrcp.pop %v4519
        %v4550 = vmul.f32 1.0, %v4549
        %v4551 = vrcp.pop %v4520
        %v4552 = vmul.f32 1.0, %v4551
        %v4553 = vmul.f32 %v4441, %v4522
        %v4554 = vmul.f32 %v4442, %v4524
        %v4555 = vmul.f32 %v4443, %v4526
        %v4556 = vmul.f32 %v4444, %v4528
        %v4557 = vmul.f32 %v4445, %v4530
        %v4558 = vmul.f32 %v4446, %v4532
        %v4559 = vmul.f32 %v4447, %v4534
        %v4560 = vmul.f32 %v4448, %v4536
        %v4561 = vmul.f32 %v4449, %v4538
        %v4562 = vmul.f32 %v4450, %v4540
        %v4563 = vmul.f32 %v4451, %v4542
        %v4564 = vmul.f32 %v4452, %v4544
        %v4565 = vmul.f32 %v4453, %v4546
        %v4566 = vmul.f32 %v4454, %v4548
        %v4567 = vmul.f32 %v4455, %v4550
        %v4568 = vmul.f32 %v4456, %v4552
        %v4569 = vpack.c.bf16 %v4554, %v4553
        %v4570 = vpack.c.bf16 %v4556, %v4555
        %v4571 = vpack.c.bf16 %v4558, %v4557
        %v4572 = vpack.c.bf16 %v4560, %v4559
        %v4573 = vpack.c.bf16 %v4562, %v4561
        %v4574 = vpack.c.bf16 %v4564, %v4563
        %v4575 = vpack.c.bf16 %v4566, %v4565
        %v4576 = vpack.c.bf16 %v4568, %v4567
        %v4577 = vld [vmem:[%s59] sm:$0xf]
        %v4578 = vld [vmem:[%s59 + $0x4] sm:$0xf]
        %v4579 = vld [vmem:[%s59 + $0x8] sm:$0xf]
        %v4580 = vld [vmem:[%s59 + $0xc] sm:$0xf]
        %v4581 = vld [vmem:[%s59 + $0x10] sm:$0xf]
        %v4582 = vld [vmem:[%s59 + $0x14] sm:$0xf]
        %v4583 = vld [vmem:[%s59 + $0x18] sm:$0xf]
        %v4584 = vld [vmem:[%s59 + $0x1c] sm:$0xf]
        %v4585 = vld [vmem:[%s61] sm:$0x1]
        %v4587 = vlaneseq
        %v4588 = vshrl.u32 %v4587, 7
        %v4589 = vsub.s32 0, %v4588
        %v4590 = vrot.slane %v4585, %v4589
        %v4600 = vunpack.c.l.b16 %v4577
        %v4601 = vunpack.c.l.b16 %v4578
        %v4602 = vunpack.c.l.b16 %v4579
        %v4603 = vunpack.c.l.b16 %v4580
        %v4604 = vunpack.c.l.b16 %v4581
        %v4605 = vunpack.c.l.b16 %v4582
        %v4606 = vunpack.c.l.b16 %v4583
        %v4607 = vunpack.c.l.b16 %v4584
        %v4608 = vpack.c.b16 %v4601, %v4600
        %v4609 = vpack.c.b16 %v4603, %v4602
        %v4610 = vpack.c.b16 %v4605, %v4604
        %v4611 = vpack.c.b16 %v4607, %v4606
        %v4617 = vsel %vm3207, %v4569, 0
        %v4620 = vsel %vm3207, %v4570, 0
        %v4623 = vsel %vm3207, %v4571, 0
        %v4626 = vsel %vm3207, %v4572, 0
        %v4629 = vsel %vm3207, %v4573, 0
        %v4632 = vsel %vm3207, %v4574, 0
        %v4635 = vsel %vm3207, %v4575, 0
        %v4638 = vsel %vm3207, %v4576, 0
        %4640 = vmatprep.subr.bf16.mxu0 0
        %4641 = vmatpush1.bf16.msra.mxu0 0
        %4642 = vmatprep.subr.bf16.mxu0 0
        %4643 = vmatpush1.bf16.msra.mxu0 0
        %4644 = vmatprep.subr.bf16.mxu0 0
        %4645 = vmatpush1.bf16.msra.mxu0 0
        %4646 = vmatprep.subr.bf16.mxu0 0
        %4647 = vmatpush1.bf16.msra.mxu0 0
        %4648 = vmatprep.subr.bf16.mxu0 0
        %4649 = vmatpush1.bf16.msra.mxu0 %v4611
        %4650 = vmatprep.subr.bf16.mxu0 0
        %4651 = vmatpush1.bf16.msra.mxu0 %v4610
        %4652 = vmatprep.subr.bf16.mxu0 0
        %4653 = vmatpush1.bf16.msra.mxu0 %v4609
        %4654 = vmatprep.subr.bf16.mxu0 0
        %4655 = vmatpush1.bf16.msra.mxu0 %v4608
        %4656 = vmatprep.subr.bf16.mxu0 0
        %4657 = vmatpush2.bf16.msra.mxu0 0
        %4658 = vmatprep.subr.bf16.mxu0 0
        %4659 = vmatpush2.bf16.msra.mxu0 0
        %4660 = vmatprep.subr.bf16.mxu0 0
        %4661 = vmatpush2.bf16.msra.mxu0 0
        %4662 = vmatprep.subr.bf16.mxu0 0
        %4663 = vmatpush2.bf16.msra.mxu0 0
        %4664 = vmatprep.subr.bf16.mxu0 0
        %4665 = vmatpush2.bf16.msra.mxu0 0
        %4666 = vmatprep.subr.bf16.mxu0 0
        %4667 = vmatpush2.bf16.msra.mxu0 0
        %4668 = vmatprep.subr.bf16.mxu0 0
        %4669 = vmatpush2.bf16.msra.mxu0 0
        %4670 = vmatprep.subr.bf16.mxu0 0
        %4671 = vmatpush2.bf16.msra.mxu0 0
        %4672 = vmatprep.mubr.bf16.mxu0 0
        %4673 = vmatmul.mubr.bf16.gmra.mxu0 %v4617
        %v4674 = vpop.f32.mrf.mxu0
        %v4675 = vadd.f32 %v4590, %v4674
        %v4676 = vpop.f32.mrf.mxu0
        %v4677 = vpop.f32.mrf.mxu0
        %v4678 = vadd.f32 %v4590, %v4677
        %v4679 = vpop.f32.mrf.mxu0
        %4680 = vmatprep.mubr.bf16.mxu0 0
        %4681 = vmatmul.mubr.bf16.gmra.mxu0 %v4620
        %v4682 = vpop.f32.mrf.mxu0
        %v4683 = vadd.f32 %v4590, %v4682
        %v4684 = vpop.f32.mrf.mxu0
        %v4685 = vpop.f32.mrf.mxu0
        %v4686 = vadd.f32 %v4590, %v4685
        %v4687 = vpop.f32.mrf.mxu0
        %4688 = vmatprep.mubr.bf16.mxu0 0
        %4689 = vmatmul.mubr.bf16.gmra.mxu0 %v4623
        %v4690 = vpop.f32.mrf.mxu0
        %v4691 = vadd.f32 %v4590, %v4690
        %v4692 = vpop.f32.mrf.mxu0
        %v4693 = vpop.f32.mrf.mxu0
        %v4694 = vadd.f32 %v4590, %v4693
        %v4695 = vpop.f32.mrf.mxu0
        %4696 = vmatprep.mubr.bf16.mxu0 0
        %4697 = vmatmul.mubr.bf16.gmra.mxu0 %v4626
        %v4698 = vpop.f32.mrf.mxu0
        %v4699 = vadd.f32 %v4590, %v4698
        %v4700 = vpop.f32.mrf.mxu0
        %v4701 = vpop.f32.mrf.mxu0
        %v4702 = vadd.f32 %v4590, %v4701
        %v4703 = vpop.f32.mrf.mxu0
        %4704 = vmatprep.mubr.bf16.mxu0 0
        %4705 = vmatmul.mubr.bf16.gmra.mxu0 %v4629
        %v4706 = vpop.f32.mrf.mxu0
        %v4707 = vadd.f32 %v4590, %v4706
        %v4708 = vpop.f32.mrf.mxu0
        %v4709 = vpop.f32.mrf.mxu0
        %v4710 = vadd.f32 %v4590, %v4709
        %v4711 = vpop.f32.mrf.mxu0
        %4712 = vmatprep.mubr.bf16.mxu0 0
        %4713 = vmatmul.mubr.bf16.gmra.mxu0 %v4632
        %v4714 = vpop.f32.mrf.mxu0
        %v4715 = vadd.f32 %v4590, %v4714
        %v4716 = vpop.f32.mrf.mxu0
        %v4717 = vpop.f32.mrf.mxu0
        %v4718 = vadd.f32 %v4590, %v4717
        %v4719 = vpop.f32.mrf.mxu0
        %4720 = vmatprep.mubr.bf16.mxu0 0
        %4721 = vmatmul.mubr.bf16.gmra.mxu0 %v4635
        %v4722 = vpop.f32.mrf.mxu0
        %v4723 = vadd.f32 %v4590, %v4722
        %v4724 = vpop.f32.mrf.mxu0
        %v4725 = vpop.f32.mrf.mxu0
        %v4726 = vadd.f32 %v4590, %v4725
        %v4727 = vpop.f32.mrf.mxu0
        %4728 = vmatprep.mubr.bf16.mxu0 0
        %4729 = vmatmul.mubr.bf16.gmra.mxu0 %v4638
        %v4730 = vpop.f32.mrf.mxu0
        %v4731 = vadd.f32 %v4590, %v4730
        %v4732 = vpop.f32.mrf.mxu0
        %v4733 = vpop.f32.mrf.mxu0
        %v4734 = vadd.f32 %v4590, %v4733
        %v4735 = vpop.f32.mrf.mxu0
        %4736 = vdwg.mxu0
        %v4737 = vxor.u32 %v4675, 2147483648
        %v4738 = vxor.u32 %v4678, 2147483648
        %v4739 = vxor.u32 %v4683, 2147483648
        %v4740 = vxor.u32 %v4686, 2147483648
        %v4741 = vxor.u32 %v4691, 2147483648
        %v4742 = vxor.u32 %v4694, 2147483648
        %v4743 = vxor.u32 %v4699, 2147483648
        %v4744 = vxor.u32 %v4702, 2147483648
        %v4745 = vxor.u32 %v4707, 2147483648
        %v4746 = vxor.u32 %v4710, 2147483648
        %v4747 = vxor.u32 %v4715, 2147483648
        %v4748 = vxor.u32 %v4718, 2147483648
        %v4749 = vxor.u32 %v4723, 2147483648
        %v4750 = vxor.u32 %v4726, 2147483648
        %v4751 = vxor.u32 %v4731, 2147483648
        %v4752 = vxor.u32 %v4734, 2147483648
        %v4753 = vmul.f32 %v4737, 1.442695
        %v4754 = vpow.pop %v4753
        %v4755 = vmul.f32 %v4738, 1.442695
        %v4756 = vpow.pop %v4755
        %v4757 = vmul.f32 %v4739, 1.442695
        %v4758 = vpow.pop %v4757
        %v4759 = vmul.f32 %v4740, 1.442695
        %v4760 = vpow.pop %v4759
        %v4761 = vmul.f32 %v4741, 1.442695
        %v4762 = vpow.pop %v4761
        %v4763 = vmul.f32 %v4742, 1.442695
        %v4764 = vpow.pop %v4763
        %v4765 = vmul.f32 %v4743, 1.442695
        %v4766 = vpow.pop %v4765
        %v4767 = vmul.f32 %v4744, 1.442695
        %v4768 = vpow.pop %v4767
        %v4769 = vmul.f32 %v4745, 1.442695
        %v4770 = vpow.pop %v4769
        %v4771 = vmul.f32 %v4746, 1.442695
        %v4772 = vpow.pop %v4771
        %v4773 = vmul.f32 %v4747, 1.442695
        %v4774 = vpow.pop %v4773
        %v4775 = vmul.f32 %v4748, 1.442695
        %v4776 = vpow.pop %v4775
        %v4777 = vmul.f32 %v4749, 1.442695
        %v4778 = vpow.pop %v4777
        %v4779 = vmul.f32 %v4750, 1.442695
        %v4780 = vpow.pop %v4779
        %v4781 = vmul.f32 %v4751, 1.442695
        %v4782 = vpow.pop %v4781
        %v4783 = vmul.f32 %v4752, 1.442695
        %v4784 = vpow.pop %v4783
        %v4785 = vadd.f32 %v4754, 1.0
        %v4786 = vadd.f32 %v4756, 1.0
        %v4787 = vadd.f32 %v4758, 1.0
        %v4788 = vadd.f32 %v4760, 1.0
        %v4789 = vadd.f32 %v4762, 1.0
        %v4790 = vadd.f32 %v4764, 1.0
        %v4791 = vadd.f32 %v4766, 1.0
        %v4792 = vadd.f32 %v4768, 1.0
        %v4793 = vadd.f32 %v4770, 1.0
        %v4794 = vadd.f32 %v4772, 1.0
        %v4795 = vadd.f32 %v4774, 1.0
        %v4796 = vadd.f32 %v4776, 1.0
        %v4797 = vadd.f32 %v4778, 1.0
        %v4798 = vadd.f32 %v4780, 1.0
        %v4799 = vadd.f32 %v4782, 1.0
        %v4800 = vadd.f32 %v4784, 1.0
        %v4801 = vrcp.pop %v4785
        %v4802 = vmul.f32 1.0, %v4801
        %v4803 = vrcp.pop %v4786
        %v4804 = vmul.f32 1.0, %v4803
        %v4805 = vrcp.pop %v4787
        %v4806 = vmul.f32 1.0, %v4805
        %v4807 = vrcp.pop %v4788
        %v4808 = vmul.f32 1.0, %v4807
        %v4809 = vrcp.pop %v4789
        %v4810 = vmul.f32 1.0, %v4809
        %v4811 = vrcp.pop %v4790
        %v4812 = vmul.f32 1.0, %v4811
        %v4813 = vrcp.pop %v4791
        %v4814 = vmul.f32 1.0, %v4813
        %v4815 = vrcp.pop %v4792
        %v4816 = vmul.f32 1.0, %v4815
        %v4817 = vrcp.pop %v4793
        %v4818 = vmul.f32 1.0, %v4817
        %v4819 = vrcp.pop %v4794
        %v4820 = vmul.f32 1.0, %v4819
        %v4821 = vrcp.pop %v4795
        %v4822 = vmul.f32 1.0, %v4821
        %v4823 = vrcp.pop %v4796
        %v4824 = vmul.f32 1.0, %v4823
        %v4825 = vrcp.pop %v4797
        %v4826 = vmul.f32 1.0, %v4825
        %v4827 = vrcp.pop %v4798
        %v4828 = vmul.f32 1.0, %v4827
        %v4829 = vrcp.pop %v4799
        %v4830 = vmul.f32 1.0, %v4829
        %v4831 = vrcp.pop %v4800
        %v4832 = vmul.f32 1.0, %v4831
        %v4833 = vmul.f32 %v4675, %v4802
        %v4834 = vmul.f32 %v4678, %v4804
        %v4835 = vmul.f32 %v4683, %v4806
        %v4836 = vmul.f32 %v4686, %v4808
        %v4837 = vmul.f32 %v4691, %v4810
        %v4838 = vmul.f32 %v4694, %v4812
        %v4839 = vmul.f32 %v4699, %v4814
        %v4840 = vmul.f32 %v4702, %v4816
        %v4841 = vmul.f32 %v4707, %v4818
        %v4842 = vmul.f32 %v4710, %v4820
        %v4843 = vmul.f32 %v4715, %v4822
        %v4844 = vmul.f32 %v4718, %v4824
        %v4845 = vmul.f32 %v4723, %v4826
        %v4846 = vmul.f32 %v4726, %v4828
        %v4847 = vmul.f32 %v4731, %v4830
        %v4848 = vmul.f32 %v4734, %v4832
        %v4849 = vld [vmem:[%s63] sm:$0x1]
        %v4851 = vlaneseq
        %v4852 = vshrl.u32 %v4851, 7
        %v4853 = vsub.s32 0, %v4852
        %v4854 = vrot.slane %v4849, %v4853
        %v4856 = vmul.f32 %v4833, %v4854
        %v4857 = vmul.f32 %v4834, %v4854
        %v4858 = vmul.f32 %v4835, %v4854
        %v4859 = vmul.f32 %v4836, %v4854
        %v4860 = vmul.f32 %v4837, %v4854
        %v4861 = vmul.f32 %v4838, %v4854
        %v4862 = vmul.f32 %v4839, %v4854
        %v4863 = vmul.f32 %v4840, %v4854
        %v4864 = vmul.f32 %v4841, %v4854
        %v4865 = vmul.f32 %v4842, %v4854
        %v4866 = vmul.f32 %v4843, %v4854
        %v4867 = vmul.f32 %v4844, %v4854
        %v4868 = vmul.f32 %v4845, %v4854
        %v4869 = vmul.f32 %v4846, %v4854
        %v4870 = vmul.f32 %v4847, %v4854
        %v4871 = vmul.f32 %v4848, %v4854
        %v4872 = vsel %vm3207, %v4856, 0.0
        %4873 = vadd.xlane.f32.xlu0 %v4872
        %v4874 = vpop.xlane.xlu0 %4873
        %v4875 = vsel %vm3207, %v4857, 0.0
        %4876 = vadd.xlane.f32.xlu0 %v4875
        %v4877 = vpop.xlane.xlu0 %4876
        %v4878 = vsel %vm3207, %v4858, 0.0
        %4879 = vadd.xlane.f32.xlu0 %v4878
        %v4880 = vpop.xlane.xlu0 %4879
        %v4881 = vsel %vm3207, %v4859, 0.0
        %4882 = vadd.xlane.f32.xlu0 %v4881
        %v4883 = vpop.xlane.xlu0 %4882
        %v4884 = vsel %vm3207, %v4860, 0.0
        %4885 = vadd.xlane.f32.xlu0 %v4884
        %v4886 = vpop.xlane.xlu0 %4885
        %v4887 = vsel %vm3207, %v4861, 0.0
        %4888 = vadd.xlane.f32.xlu0 %v4887
        %v4889 = vpop.xlane.xlu0 %4888
        %v4890 = vsel %vm3207, %v4862, 0.0
        %4891 = vadd.xlane.f32.xlu0 %v4890
        %v4892 = vpop.xlane.xlu0 %4891
        %v4893 = vsel %vm3207, %v4863, 0.0
        %4894 = vadd.xlane.f32.xlu0 %v4893
        %v4895 = vpop.xlane.xlu0 %4894
        %v4896 = vsel %vm3207, %v4864, 0.0
        %4897 = vadd.xlane.f32.xlu0 %v4896
        %v4898 = vpop.xlane.xlu0 %4897
        %v4899 = vsel %vm3207, %v4865, 0.0
        %4900 = vadd.xlane.f32.xlu0 %v4899
        %v4901 = vpop.xlane.xlu0 %4900
        %v4902 = vsel %vm3207, %v4866, 0.0
        %4903 = vadd.xlane.f32.xlu0 %v4902
        %v4904 = vpop.xlane.xlu0 %4903
        %v4905 = vsel %vm3207, %v4867, 0.0
        %4906 = vadd.xlane.f32.xlu0 %v4905
        %v4907 = vpop.xlane.xlu0 %4906
        %v4908 = vsel %vm3207, %v4868, 0.0
        %4909 = vadd.xlane.f32.xlu0 %v4908
        %v4910 = vpop.xlane.xlu0 %4909
        %v4911 = vsel %vm3207, %v4869, 0.0
        %4912 = vadd.xlane.f32.xlu0 %v4911
        %v4913 = vpop.xlane.xlu0 %4912
        %v4914 = vsel %vm3207, %v4870, 0.0
        %4915 = vadd.xlane.f32.xlu0 %v4914
        %v4916 = vpop.xlane.xlu0 %4915
        %v4917 = vsel %vm3207, %v4871, 0.0
        %4918 = vadd.xlane.f32.xlu0 %v4917
        %v4919 = vpop.xlane.xlu0 %4918
        %s4920 = sld [smem:[#allocation3]]
        %v4921 = vstv %s4920
        %v4922 = vadd.f32 %v4874, %v4921
        %v4923 = vadd.f32 %v4877, %v4921
        %v4924 = vadd.f32 %v4880, %v4921
        %v4925 = vadd.f32 %v4883, %v4921
        %v4926 = vadd.f32 %v4886, %v4921
        %v4927 = vadd.f32 %v4889, %v4921
        %v4928 = vadd.f32 %v4892, %v4921
        %v4929 = vadd.f32 %v4895, %v4921
        %v4930 = vadd.f32 %v4898, %v4921
        %v4931 = vadd.f32 %v4901, %v4921
        %v4932 = vadd.f32 %v4904, %v4921
        %v4933 = vadd.f32 %v4907, %v4921
        %v4934 = vadd.f32 %v4910, %v4921
        %v4935 = vadd.f32 %v4913, %v4921
        %v4936 = vadd.f32 %v4916, %v4921
        %v4937 = vadd.f32 %v4919, %v4921
        %v4954 = vlaneseq
        %v4955 = vand.u32 %v4954, 127
        %v4956 = vlaneseq
        %v4957 = vshrl.u32 %v4956, 7
        %v4958 = vsub.s32 %v4955, %v4957
        %v4959 = vrot.slane %v4922, %v4958
        %v4960 = vadd.s32 %v4955, 4294967288
        %v4961 = vlaneseq
        %v4962 = vshrl.u32 %v4961, 7
        %v4963 = vsub.s32 %v4960, %v4962
        %v4964 = vrot.slane %v4923, %v4963
        %vm4965 = vcmask 130112
        %v4966 = vsel %vm4965, %v4964, %v4959
        %v4967 = vadd.s32 %v4955, 4294967280
        %v4968 = vlaneseq
        %v4969 = vshrl.u32 %v4968, 7
        %v4970 = vsub.s32 %v4967, %v4969
        %v4971 = vrot.slane %v4924, %v4970
        %vm4972 = vcmask 195712
        %v4973 = vsel %vm4972, %v4971, %v4966
        %v4974 = vadd.s32 %v4955, 4294967272
        %v4975 = vlaneseq
        %v4976 = vshrl.u32 %v4975, 7
        %v4977 = vsub.s32 %v4974, %v4976
        %v4978 = vrot.slane %v4925, %v4977
        %vm4979 = vcmask 261312
        %v4980 = vsel %vm4979, %v4978, %v4973
        %v4981 = vadd.s32 %v4955, 4294967264
        %v4982 = vlaneseq
        %v4983 = vshrl.u32 %v4982, 7
        %v4984 = vsub.s32 %v4981, %v4983
        %v4985 = vrot.slane %v4926, %v4984
        %vm4986 = vcmask 326912
        %v4987 = vsel %vm4986, %v4985, %v4980
        %v4988 = vadd.s32 %v4955, 4294967256
        %v4989 = vlaneseq
        %v4990 = vshrl.u32 %v4989, 7
        %v4991 = vsub.s32 %v4988, %v4990
        %v4992 = vrot.slane %v4927, %v4991
        %vm4993 = vcmask 392512
        %v4994 = vsel %vm4993, %v4992, %v4987
        %v4995 = vadd.s32 %v4955, 4294967248
        %v4996 = vlaneseq
        %v4997 = vshrl.u32 %v4996, 7
        %v4998 = vsub.s32 %v4995, %v4997
        %v4999 = vrot.slane %v4928, %v4998
        %vm5000 = vcmask 458112
        %v5001 = vsel %vm5000, %v4999, %v4994
        %v5002 = vadd.s32 %v4955, 4294967240
        %v5003 = vlaneseq
        %v5004 = vshrl.u32 %v5003, 7
        %v5005 = vsub.s32 %v5002, %v5004
        %v5006 = vrot.slane %v4929, %v5005
        %vm5007 = vcmask 523712
        %v5008 = vsel %vm5007, %v5006, %v5001
        %v5009 = vadd.s32 %v4955, 4294967232
        %v5010 = vlaneseq
        %v5011 = vshrl.u32 %v5010, 7
        %v5012 = vsub.s32 %v5009, %v5011
        %v5013 = vrot.slane %v4930, %v5012
        %vm5014 = vcmask 589312
        %v5015 = vsel %vm5014, %v5013, %v5008
        %v5016 = vadd.s32 %v4955, 4294967224
        %v5017 = vlaneseq
        %v5018 = vshrl.u32 %v5017, 7
        %v5019 = vsub.s32 %v5016, %v5018
        %v5020 = vrot.slane %v4931, %v5019
        %vm5021 = vcmask 654912
        %v5022 = vsel %vm5021, %v5020, %v5015
        %v5023 = vadd.s32 %v4955, 4294967216
        %v5024 = vlaneseq
        %v5025 = vshrl.u32 %v5024, 7
        %v5026 = vsub.s32 %v5023, %v5025
        %v5027 = vrot.slane %v4932, %v5026
        %vm5028 = vcmask 720512
        %v5029 = vsel %vm5028, %v5027, %v5022
        %v5030 = vadd.s32 %v4955, 4294967208
        %v5031 = vlaneseq
        %v5032 = vshrl.u32 %v5031, 7
        %v5033 = vsub.s32 %v5030, %v5032
        %v5034 = vrot.slane %v4933, %v5033
        %vm5035 = vcmask 786112
        %v5036 = vsel %vm5035, %v5034, %v5029
        %v5037 = vadd.s32 %v4955, 4294967200
        %v5038 = vlaneseq
        %v5039 = vshrl.u32 %v5038, 7
        %v5040 = vsub.s32 %v5037, %v5039
        %v5041 = vrot.slane %v4934, %v5040
        %vm5042 = vcmask 851712
        %v5043 = vsel %vm5042, %v5041, %v5036
        %v5044 = vadd.s32 %v4955, 4294967192
        %v5045 = vlaneseq
        %v5046 = vshrl.u32 %v5045, 7
        %v5047 = vsub.s32 %v5044, %v5046
        %v5048 = vrot.slane %v4935, %v5047
        %vm5049 = vcmask 917312
        %v5050 = vsel %vm5049, %v5048, %v5043
        %v5051 = vadd.s32 %v4955, 4294967184
        %v5052 = vlaneseq
        %v5053 = vshrl.u32 %v5052, 7
        %v5054 = vsub.s32 %v5051, %v5053
        %v5055 = vrot.slane %v4936, %v5054
        %vm5056 = vcmask 982912
        %v5057 = vsel %vm5056, %v5055, %v5050
        %v5058 = vadd.s32 %v4955, 4294967176
        %v5059 = vlaneseq
        %v5060 = vshrl.u32 %v5059, 7
        %v5061 = vsub.s32 %v5058, %v5060
        %v5062 = vrot.slane %v4937, %v5061
        %vm5063 = vcmask 1048512
        %v5064 = vsel %vm5063, %v5062, %v5057
        %5066 = vst [vmem:[%s1101] sm:$0x1] %v5064
        %s5067 = sand.u32 %s832, 1
        %s5068 = scalar_lea.sflag [#allocation5], %s5067
        %s5069 = sand.u32 %s832, 1
        %s5070 = scalar_lea.vmem [#allocation4], %s5069
        // Predicated region
        $region157: #{tpu_custom_call.1} parent=155 // pred_check
          %p5071 = pneg %p842
        $region158: #{tpu_custom_call.1} parent=155 // pred_check_branch
          %5073 = sbr.rel (%p5071) target = $region160
        $region159: #{tpu_custom_call.1} parent=155 // pred_region
          %s5075 = ssub.s32 16, 16
          %5076 = vsyncadd %s5068, %s5075
          %s5077 = smul.addr %s85, 16
          %s5078 = scalar_lea.hbm %s69, %s5077
          %s5080 = sshll.u32 %s5070, 4
          %s5081 = int_to_ptr.vmem [resolvable:$true] %s5080
          %5083 = dma.vmem_to_hbm [thread:$0]  %s5081, 16, %s5078, %s5068
        $region160: #{tpu_custom_call.1} parent=155 // pred_fallthru
          _
      $region156: #{tpu_custom_call.1} parent=5 // pred_fallthru
        _
      %p5084 = scmp.le.s32.totalorder 2, %s80
      // Predicated region
      $region161: #{tpu_custom_call.1} parent=5 // pred_check
        %p5085 = pneg %p5084
      $region162: #{tpu_custom_call.1} parent=5 // pred_check_branch
        %5087 = sbr.rel (%p5085) target = $region164
      $region163: #{tpu_custom_call.1} parent=5 // pred_region
        %s5088 = ssub.s32 %s80, 2
        // Predicated region
        $region165: #{tpu_custom_call.1} parent=163 // pred_check
          %p5089 = pneg %p848
        $region166: #{tpu_custom_call.1} parent=163 // pred_check_branch
          %5091 = sbr.rel (%p5089) target = $region168
        $region167: #{tpu_custom_call.1} parent=163 // pred_region
          %s5092 = sand.u32 %s833, 1
          %s5093 = scalar_lea.sflag [#allocation5], %s5092
          %s5094 = sand.u32 %s833, 1
          %s5095 = scalar_lea.vmem [#allocation4], %s5094
          %5096 = dma.done %s5093, 16
        $region168: #{tpu_custom_call.1} parent=163 // pred_fallthru
          _
      $region164: #{tpu_custom_call.1} parent=5 // pred_fallthru
        _
    $region6: #{tpu_custom_call.1} parent=1 // loop_footer
      %s84 = sadd.s32 1, %s80
    $region7: #{tpu_custom_call.1} parent=1 // loop_footer_branch
      %79 = sbr.rel target = $region3
    $region8: #{tpu_custom_call.1} parent=1 // loop_exit
      _
    %5097 = vsyncpa [#allocation5], 1
    %s5098 = scalar_lea.sflag [#allocation5], 1
    %5099 = vsyncpa %s5098, 1

</llo_original>
